<compile_context>
chip_gen: v7x
topology: tpu7x:2x2x1
jax: 0.10.0
libtpu: 0.0.40
codegen_flags: <defaults>
</compile_context>

<pallas_src>
import functools

import jax
import jax.numpy as jnp
from jax import lax
from jax.experimental import pallas as pl
from jax.experimental.pallas import tpu as pltpu


def _default_gate_dtype():
    """bf16 transcendentals on v6e/v7x (bf16 EUP); f32 elsewhere."""
    try:
        kind = jax.devices()[0].device_kind.lower()
    except Exception:
        return jnp.float32
    if "v6" in kind or "v7" in kind:
        return jnp.bfloat16
    return jnp.float32


def attention_sb_kernel(nvalid_ref, h_ref, w1_ref, b1_ref, wab_ref, bab_ref,
                        wc_ref, bc_ref, wcls_ref, bcls_ref,
                        logits_ref, yprob_ref, yhat_ref, araw_ref,
                        acc_sc, m_sc, l_sc, *, gate_dtype=jnp.float32):
    i = pl.program_id(0)
    tile_n = h_ref.shape[0]
    D = wab_ref.shape[1] // 2
    n_valid = nvalid_ref[0]

    @pl.when(i == 0)
    def _init():
        acc_sc[...] = jnp.zeros_like(acc_sc)
        m_sc[...] = jnp.full_like(m_sc, -jnp.inf)
        l_sc[...] = jnp.zeros_like(l_sc)

    # validity of the rows in this tile (handles the ragged last tile in-kernel,
    # no wrapper-side pad / mask arrays in HBM)
    row = i * tile_n + lax.broadcasted_iota(jnp.int32, (tile_n, 1), 0)
    rvalid = row < n_valid
    col = i * tile_n + lax.broadcasted_iota(jnp.int32, (1, tile_n), 1)
    cvalid = col < n_valid

    # fc: Linear(F, L) + ReLU  (bf16 MXU matmul, f32 accumulation)
    h16 = h_ref[...].astype(jnp.bfloat16)
    x = jnp.dot(h16, w1_ref[...], preferred_element_type=jnp.float32) + b1_ref[...]
    x = jnp.maximum(x, 0.0)
    # zero out padded / undefined boundary rows so they cannot poison the pooling
    x = jnp.where(rvalid, x, 0.0)                                     # [tN, L] f32
    x16 = x.astype(jnp.bfloat16)

    # Attn_Net_Gated: fused wa||wb matmul (256-wide MXU), then tanh / sigmoid gates
    ab = jnp.dot(x16, wab_ref[...], preferred_element_type=jnp.float32) + bab_ref[...]
    ab = ab.astype(gate_dtype)
    a = jnp.tanh(ab[:, :D])
    b = jax.nn.sigmoid(ab[:, D:])
    g = a * b                                                         # [tN, D]

    # attention_c: produce the score row [1, tN] directly (== transpose of [tN, 1])
    wc_g = wc_ref[...].astype(g.dtype)
    s = lax.dot_general(wc_g, g, (((1,), (1,)), ((), ())),
                        preferred_element_type=jnp.float32) + bc_ref[...]   # [1, tN]
    araw_ref[...] = s                                                 # pre-softmax scores

    # mask padded columns out of the softmax reduction
    s_m = jnp.where(cvalid, s, jnp.float32(-1e30))

    # online softmax update
    m_prev = m_sc[...]                                                # [1, 1]
    m_new = jnp.maximum(m_prev, jnp.max(s_m, axis=1, keepdims=True))  # [1, 1]
    alpha = jnp.exp(m_prev - m_new)                                   # [1, 1]
    p = jnp.exp(s_m - m_new)                                          # [1, tN]
    l_sc[...] = alpha * l_sc[...] + jnp.sum(p, axis=1, keepdims=True)
    acc_sc[...] = alpha * acc_sc[...] + jnp.dot(
        p.astype(jnp.bfloat16), x16, preferred_element_type=jnp.float32)    # [1, L]
    m_sc[...] = m_new

    # per-bag epilogue: classifier + output heads, only on the last tile
    @pl.when(i == pl.num_programs(0) - 1)
    def _finalize():
        M = acc_sc[...] / l_sc[...]                                   # exact divide, runs once
        logits = jnp.dot(M, wcls_ref[...],
                         preferred_element_type=jnp.float32) + bcls_ref[...]  # [1, C]
        logits_ref[...] = logits

        lm = jnp.max(logits, axis=1, keepdims=True)
        le = jnp.exp(logits - lm)
        yprob_ref[...] = le / jnp.sum(le, axis=1, keepdims=True)

        idx = lax.broadcasted_iota(jnp.int32, logits.shape, 1)
        yhat_ref[...] = jnp.min(jnp.where(logits == lm, idx, jnp.int32(2 ** 30)),
                                axis=1, keepdims=True)


def attention_sb_forward(h, params, *, tile_n=512, gate_dtype=None):
    N, F = h.shape
    L = params["w1"].shape[1]
    D = params["wa"].shape[1]
    C = params["wcls"].shape[1]

    if gate_dtype is None:
        gate_dtype = _default_gate_dtype()

    # keep the tile lane-aligned; ragged last tile is handled in-kernel
    tile_n = max(128, (int(tile_n) // 128) * 128)
    n_tiles = pl.cdiv(N, tile_n)

    # fused gate weights / biases; big streamed & weight operands in bf16 (MXU path)
    w1 = params["w1"].astype(jnp.bfloat16)
    wab = jnp.concatenate([params["wa"], params["wb"]], axis=1).astype(jnp.bfloat16)
    bab = jnp.concatenate([params["ba"], params["bb"]], axis=1).astype(jnp.float32)
    n_valid = jnp.array([N], dtype=jnp.int32)

    # VMEM limit derived from the actual footprint (2x headroom), capped for v7x's 64 MiB
    itemsize_h = h.dtype.itemsize
    weight_bytes = (F * L + L * 2 * D) * 2 + (D + L * C + L + 2 * D + 1 + C) * 4
    stream_bytes = 2 * tile_n * F * itemsize_h + 2 * tile_n * 4
    interm_bytes = tile_n * (6 * L + 10 * D) * 4
    footprint = 2 * weight_bytes + stream_bytes + interm_bytes
    vmem_limit = int(min(max(2 * footprint, 16 << 20), 64 << 20))

    def const(shape):
        # Resident weights: constant index map -> fetched once, stays in VMEM.
        # (pl.Buffered(1) would halve their buffer footprint but is not needed here.)
        return pl.BlockSpec(shape, lambda i, n, _s=len(shape): (0,) * _s)

    grid_spec = pltpu.PrefetchScalarGridSpec(
        num_scalar_prefetch=1,                              # n_valid lands in SMEM
        grid=(n_tiles,),
        in_specs=[
            pl.BlockSpec((tile_n, F), lambda i, n: (i, 0)),  # h (streamed, double-buffered)
            const((F, L)), const((1, L)),                    # w1, b1 (resident)
            const((L, 2 * D)), const((1, 2 * D)),            # wa||wb, ba||bb
            const((1, D)), const((1, 1)),                    # wc, bc
            const((L, C)), const((1, C)),                    # wcls, bcls
        ],
        out_specs=(
            pl.BlockSpec((1, C), lambda i, n: (0, 0)),       # logits
            pl.BlockSpec((1, C), lambda i, n: (0, 0)),       # Y_prob
            pl.BlockSpec((1, 1), lambda i, n: (0, 0)),       # Y_hat
            pl.BlockSpec((1, tile_n), lambda i, n: (0, i)),  # A_raw (lane-dense)
        ),
        scratch_shapes=[
            pltpu.VMEM((1, L), jnp.float32),                 # pooled accumulator
            pltpu.VMEM((1, 1), jnp.float32),                 # running max m
            pltpu.VMEM((1, 1), jnp.float32),                 # running sum l
        ],
    )

    out_shapes = (
        jax.ShapeDtypeStruct((1, C), jnp.float32),
        jax.ShapeDtypeStruct((1, C), jnp.float32),
        jax.ShapeDtypeStruct((1, 1), jnp.int32),
        jax.ShapeDtypeStruct((1, N), jnp.float32),
    )

    kernel = functools.partial(attention_sb_kernel, gate_dtype=gate_dtype)
    logits, y_prob, y_hat, a_raw = pl.pallas_call(
        kernel,
        out_shape=out_shapes,
        grid_spec=grid_spec,
        compiler_params=pltpu.CompilerParams(
            dimension_semantics=("arbitrary",),       # N axis carries the softmax reduction
            vmem_limit_bytes=vmem_limit,
        ),
    )(n_valid, h, w1, params["b1"], wab, bab,
      params["wc"], params["bc"], params["wcls"], params["bcls"])

    return logits, y_prob, y_hat, a_raw


def _xavier_normal(key, fan_in, fan_out):
    std = (2.0 / (fan_in + fan_out)) ** 0.5
    return std * jax.random.normal(key, (fan_in, fan_out), dtype=jnp.float32)


def _reference(h, p):
    # mirrors the kernel's bf16 matmul inputs / f32 accumulation (gate math in f32)
    h16 = h.astype(jnp.bfloat16)
    w1 = p["w1"].astype(jnp.bfloat16)
    wa = p["wa"].astype(jnp.bfloat16)
    wb = p["wb"].astype(jnp.bfloat16)
    x = jnp.maximum(jnp.dot(h16, w1, preferred_element_type=jnp.float32) + p["b1"], 0.0)
    x16 = x.astype(jnp.bfloat16)
    a = jnp.tanh(jnp.dot(x16, wa, preferred_element_type=jnp.float32) + p["ba"])
    b = jax.nn.sigmoid(jnp.dot(x16, wb, preferred_element_type=jnp.float32) + p["bb"])
    A = (a * b) @ p["wc"].T + p["bc"]                  # [N, 1]
    A_raw = A.T                                        # [1, N]
    A_soft = jax.nn.softmax(A_raw, axis=1)
    M = A_soft @ x
    logits = M @ p["wcls"] + p["bcls"]
    return (logits, jax.nn.softmax(logits, axis=1),
            jnp.argmax(logits, axis=1)[:, None], A_raw)


if __name__ == "__main__":
    # Small shapes implied by the module: N instances (bag), F -> L -> D, n_classes.
    # N deliberately NOT a multiple of tile_n to exercise the ragged-last-tile path.
    N, F, L, D, C = 600, 384, 256, 128, 4
    tile_n = 256

    key = jax.random.PRNGKey(0)
    ks = jax.random.split(key, 6)
    h = jax.random.normal(ks[0], (N, F), dtype=jnp.float32)

    params = {
        "w1": _xavier_normal(ks[1], F, L),
        "b1": jnp.zeros((1, L), jnp.float32),
        "wa": _xavier_normal(ks[2], L, D),
        "ba": jnp.zeros((1, D), jnp.float32),
        "wb": _xavier_normal(ks[3], L, D),
        "bb": jnp.zeros((1, D), jnp.float32),
        # attention_c weight kept in PyTorch layout [n_classes=1, D]
        "wc": ((2.0 / (D + 1)) ** 0.5) * jax.random.normal(ks[4], (1, D), jnp.float32),
        "bc": jnp.zeros((1, 1), jnp.float32),
        "wcls": _xavier_normal(ks[5], L, C),
        "bcls": jnp.zeros((1, C), jnp.float32),
    }

    # Stream h in bf16 (the "fuse the cast with the producer" case from the review);
    # the kernel also accepts f32 h and casts per-tile in VMEM.
    h16 = h.astype(jnp.bfloat16)
    logits, y_prob, y_hat, a_raw = attention_sb_forward(h16, params, tile_n=tile_n)
    jax.block_until_ready((logits, y_prob, y_hat, a_raw))

    # correctness check against a pure-JAX reference
    r_logits, r_prob, r_hat, r_araw = _reference(h, params)
    assert logits.shape == (1, C) and y_prob.shape == (1, C)
    assert y_hat.shape == (1, 1) and a_raw.shape == (1, N)
    assert jnp.allclose(logits, r_logits, atol=2e-2, rtol=2e-2), "logits mismatch"
    assert jnp.allclose(y_prob, r_prob, atol=2e-2, rtol=2e-2), "Y_prob mismatch"
    assert jnp.allclose(a_raw, r_araw, atol=2e-2, rtol=2e-2), "A_raw mismatch"
    # topk(1) index must match the argmax of the kernel's own logits
    assert int(y_hat[0, 0]) == int(jnp.argmax(logits, axis=1)[0]), "Y_hat inconsistent"
    # compare against the reference argmax only when the decision margin is meaningful
    top2 = jnp.sort(r_logits[0])[-2:]
    if float(top2[1] - top2[0]) > 5e-2:
        assert int(y_hat[0, 0]) == int(r_hat[0, 0]), "Y_hat mismatch vs reference"

    print("KERNEL_OK")
</pallas_src>

<mosaic_0001>
module attributes {stable_mosaic.version = 11 : i64} {
  func.func @attention_sb_kernel(%arg0: i32, %arg1: memref<1xi32, #tpu.memory_space<smem>>, %arg2: memref<256x384xbf16, #tpu.memory_space<vmem>>, %arg3: memref<384x256xbf16, #tpu.memory_space<vmem>>, %arg4: memref<1x256xf32, #tpu.memory_space<vmem>>, %arg5: memref<256x256xbf16, #tpu.memory_space<vmem>>, %arg6: memref<1x256xf32, #tpu.memory_space<vmem>>, %arg7: memref<1x128xf32, #tpu.memory_space<vmem>>, %arg8: memref<1x1xf32, #tpu.memory_space<vmem>>, %arg9: memref<256x4xf32, #tpu.memory_space<vmem>>, %arg10: memref<1x4xf32, #tpu.memory_space<vmem>>, %arg11: memref<1x4xf32, #tpu.memory_space<vmem>>, %arg12: memref<1x4xf32, #tpu.memory_space<vmem>>, %arg13: memref<1x1xi32, #tpu.memory_space<vmem>>, %arg14: memref<1x256xf32, #tpu.memory_space<vmem>>, %arg15: memref<1x256xf32, #tpu.memory_space<vmem>>, %arg16: memref<1x1xf32, #tpu.memory_space<vmem>>, %arg17: memref<1x1xf32, #tpu.memory_space<vmem>>) attributes {dimension_semantics = [#tpu.dimension_semantics<arbitrary>], iteration_bounds = array<i64: 3>, scalar_prefetch = 1 : i64, scratch_operands = 3 : i64, tpu.core_type = #tpu.core_type<tc>, window_params = [{transform_indices = @transform_0, window_bounds = array<i64: 256, 384>}, {pipeline_mode = #tpu.pipeline_mode<synchronous>, transform_indices = @transform_1, window_bounds = array<i64: 384, 256>}, {pipeline_mode = #tpu.pipeline_mode<synchronous>, transform_indices = @transform_2, window_bounds = array<i64: 1, 256>}, {pipeline_mode = #tpu.pipeline_mode<synchronous>, transform_indices = @transform_3, window_bounds = array<i64: 256, 256>}, {pipeline_mode = #tpu.pipeline_mode<synchronous>, transform_indices = @transform_4, window_bounds = array<i64: 1, 256>}, {pipeline_mode = #tpu.pipeline_mode<synchronous>, transform_indices = @transform_5, window_bounds = array<i64: 1, 128>}, {pipeline_mode = #tpu.pipeline_mode<synchronous>, transform_indices = @transform_6, window_bounds = array<i64: 1, 1>}, {pipeline_mode = #tpu.pipeline_mode<synchronous>, transform_indices = @transform_7, window_bounds = array<i64: 256, 4>}, {pipeline_mode = #tpu.pipeline_mode<synchronous>, transform_indices = @transform_8, window_bounds = array<i64: 1, 4>}, {pipeline_mode = #tpu.pipeline_mode<synchronous>, transform_indices = @transform_9, window_bounds = array<i64: 1, 4>}, {pipeline_mode = #tpu.pipeline_mode<synchronous>, transform_indices = @transform_10, window_bounds = array<i64: 1, 4>}, {pipeline_mode = #tpu.pipeline_mode<synchronous>, transform_indices = @transform_11, window_bounds = array<i64: 1, 1>}, {transform_indices = @transform_12, window_bounds = array<i64: 1, 256>}]} {
    %c0 = arith.constant 0 : index
    %0 = memref.load %arg1[%c0] : memref<1xi32, #tpu.memory_space<smem>>
    %c0_i32 = arith.constant 0 : i32
    %1 = arith.cmpi eq, %arg0, %c0_i32 : i32
    %2 = arith.extui %1 : i1 to i32
    %c0_i32_0 = arith.constant 0 : i32
    %3 = arith.cmpi ne, %2, %c0_i32_0 : i32
    scf.if %3 {
      %cst_40 = arith.constant 0.000000e+00 : f32
      %77 = vector.broadcast %cst_40 : f32 to vector<1x256xf32>
      %c0_41 = arith.constant 0 : index
      %c0_42 = arith.constant 0 : index
      %78 = vector.load %arg15[%c0_41, %c0_42] : memref<1x256xf32, #tpu.memory_space<vmem>>, vector<1x256xf32>
      tpu.vector_store %arg15[%c0_41, %c0_42], %77 {strides = array<i32>} : memref<1x256xf32, #tpu.memory_space<vmem>>, vector<1x256xf32>,
      %cst_43 = arith.constant 0xFF800000 : f32
      %79 = vector.broadcast %cst_43 : f32 to vector<1x1xf32>
      %c0_44 = arith.constant 0 : index
      %c0_45 = arith.constant 0 : index
      %80 = vector.load %arg16[%c0_44, %c0_45] : memref<1x1xf32, #tpu.memory_space<vmem>>, vector<1x1xf32>
      tpu.vector_store %arg16[%c0_44, %c0_45], %79 {strides = array<i32>} : memref<1x1xf32, #tpu.memory_space<vmem>>, vector<1x1xf32>,
      %cst_46 = arith.constant 0.000000e+00 : f32
      %81 = vector.broadcast %cst_46 : f32 to vector<1x1xf32>
      %c0_47 = arith.constant 0 : index
      %c0_48 = arith.constant 0 : index
      %82 = vector.load %arg17[%c0_47, %c0_48] : memref<1x1xf32, #tpu.memory_space<vmem>>, vector<1x1xf32>
      tpu.vector_store %arg17[%c0_47, %c0_48], %81 {strides = array<i32>} : memref<1x1xf32, #tpu.memory_space<vmem>>, vector<1x1xf32>,
    } else {
    }
    %c256_i32 = arith.constant 256 : i32
    %4 = arith.muli %arg0, %c256_i32 : i32
    %5 = tpu.iota {dimensions = array<i32: 0>} : vector<256x1xi32>
    %6 = vector.broadcast %4 : i32 to vector<256x1xi32>
    %7 = arith.addi %6, %5 : vector<256x1xi32>
    %8 = vector.broadcast %0 : i32 to vector<256x1xi32>
    %9 = arith.cmpi slt, %7, %8 : vector<256x1xi32>
    %c256_i32_1 = arith.constant 256 : i32
    %10 = arith.muli %arg0, %c256_i32_1 : i32
    %11 = tpu.iota {dimensions = array<i32: 1>} : vector<1x256xi32>
    %12 = vector.broadcast %10 : i32 to vector<1x256xi32>
    %13 = arith.addi %12, %11 : vector<1x256xi32>
    %14 = vector.broadcast %0 : i32 to vector<1x256xi32>
    %15 = arith.cmpi slt, %13, %14 : vector<1x256xi32>
    %c0_2 = arith.constant 0 : index
    %c0_3 = arith.constant 0 : index
    %16 = vector.load %arg2[%c0_2, %c0_3] : memref<256x384xbf16, #tpu.memory_space<vmem>>, vector<256x384xbf16>
    %c0_4 = arith.constant 0 : index
    %c0_5 = arith.constant 0 : index
    %17 = vector.load %arg3[%c0_4, %c0_5] : memref<384x256xbf16, #tpu.memory_space<vmem>>, vector<384x256xbf16>
    %cst = arith.constant dense<0.000000e+00> : vector<256x256xf32>
    %18 = tpu.matmul %16, %17, %cst {dimension_numbers = #tpu.dot_dimension_numbers<[1], [0], [0], [1], [0, 0, 1, 1], [], []>} : vector<256x384xbf16>, vector<384x256xbf16>, vector<256x256xf32> -> vector<256x256xf32>
    %c0_6 = arith.constant 0 : index
    %c0_7 = arith.constant 0 : index
    %19 = vector.load %arg4[%c0_6, %c0_7] : memref<1x256xf32, #tpu.memory_space<vmem>>, vector<1x256xf32>
    %20 = vector.broadcast %19 : vector<1x256xf32> to vector<256x256xf32>
    %21 = arith.addf %18, %20 : vector<256x256xf32>
    %cst_8 = arith.constant 0.000000e+00 : f32
    %22 = vector.broadcast %cst_8 : f32 to vector<256x256xf32>
    %23 = arith.maximumf %21, %22 : vector<256x256xf32>
    %cst_9 = arith.constant 0.000000e+00 : f32
    %24 = vector.shape_cast %9 : vector<256x1xi1> to vector<256x1xi1>
    %25 = vector.broadcast %24 : vector<256x1xi1> to vector<256x256xi1>
    %26 = vector.broadcast %cst_9 : f32 to vector<256x256xf32>
    %27 = arith.select %25, %23, %26 : vector<256x256xi1>, vector<256x256xf32>
    %28 = arith.truncf %27 : vector<256x256xf32> to vector<256x256xbf16>
    %c0_10 = arith.constant 0 : index
    %c0_11 = arith.constant 0 : index
    %29 = vector.load %arg5[%c0_10, %c0_11] : memref<256x256xbf16, #tpu.memory_space<vmem>>, vector<256x256xbf16>
    %cst_12 = arith.constant dense<0.000000e+00> : vector<256x256xf32>
    %30 = tpu.matmul %28, %29, %cst_12 {dimension_numbers = #tpu.dot_dimension_numbers<[1], [0], [0], [1], [0, 0, 1, 1], [], []>} : vector<256x256xbf16>, vector<256x256xbf16>, vector<256x256xf32> -> vector<256x256xf32>
    %c0_13 = arith.constant 0 : index
    %c0_14 = arith.constant 0 : index
    %31 = vector.load %arg6[%c0_13, %c0_14] : memref<1x256xf32, #tpu.memory_space<vmem>>, vector<1x256xf32>
    %32 = vector.broadcast %31 : vector<1x256xf32> to vector<256x256xf32>
    %33 = arith.addf %30, %32 : vector<256x256xf32>
    %34 = vector.extract_strided_slice %33 {offsets = [0, 0], sizes = [256, 128], strides = [1, 1]} : vector<256x256xf32> to vector<256x128xf32>
    %35 = math.tanh %34 : vector<256x128xf32>
    %36 = vector.extract_strided_slice %33 {offsets = [0, 128], sizes = [256, 128], strides = [1, 1]} : vector<256x256xf32> to vector<256x128xf32>
    %37 = arith.negf %36 : vector<256x128xf32>
    %38 = math.exp %37 : vector<256x128xf32>
    %cst_15 = arith.constant 1.000000e+00 : f32
    %39 = vector.broadcast %cst_15 : f32 to vector<256x128xf32>
    %40 = arith.addf %39, %38 : vector<256x128xf32>
    %41 = arith.divf %39, %40 : vector<256x128xf32>
    %42 = arith.mulf %35, %41 : vector<256x128xf32>
    %c0_16 = arith.constant 0 : index
    %c0_17 = arith.constant 0 : index
    %43 = vector.load %arg7[%c0_16, %c0_17] : memref<1x128xf32, #tpu.memory_space<vmem>>, vector<1x128xf32>
    %cst_18 = arith.constant dense<0.000000e+00> : vector<1x256xf32>
    %44 = tpu.matmul %43, %42, %cst_18 {dimension_numbers = #tpu.dot_dimension_numbers<[1], [1], [0], [0], [0, 0, 1, 0], [], []>} : vector<1x128xf32>, vector<256x128xf32>, vector<1x256xf32> -> vector<1x256xf32>
    %c0_19 = arith.constant 0 : index
    %c0_20 = arith.constant 0 : index
    %45 = vector.load %arg8[%c0_19, %c0_20] : memref<1x1xf32, #tpu.memory_space<vmem>>, vector<1x1xf32>
    %46 = vector.broadcast %45 : vector<1x1xf32> to vector<1x256xf32>
    %47 = arith.addf %44, %46 : vector<1x256xf32>
    %c0_21 = arith.constant 0 : index
    %c0_22 = arith.constant 0 : index
    %48 = vector.load %arg14[%c0_21, %c0_22] : memref<1x256xf32, #tpu.memory_space<vmem>>, vector<1x256xf32>
    tpu.vector_store %arg14[%c0_21, %c0_22], %47 {strides = array<i32>} : memref<1x256xf32, #tpu.memory_space<vmem>>, vector<1x256xf32>,
    %cst_23 = arith.constant -1.000000e+30 : f32
    %49 = vector.broadcast %cst_23 : f32 to vector<1x256xf32>
    %50 = arith.select %15, %47, %49 : vector<1x256xi1>, vector<1x256xf32>
    %c0_24 = arith.constant 0 : index
    %c0_25 = arith.constant 0 : index
    %51 = vector.load %arg16[%c0_24, %c0_25] : memref<1x1xf32, #tpu.memory_space<vmem>>, vector<1x1xf32>
    %cst_26 = arith.constant dense<0xFF800000> : vector<1xf32>
    %52 = vector.multi_reduction <maximumf>, %50, %cst_26 [1] : vector<1x256xf32> to vector<1xf32>
    %53 = vector.shape_cast %52 : vector<1xf32> to vector<1x1xf32>
    %54 = arith.maximumf %51, %53 : vector<1x1xf32>
    %55 = arith.subf %51, %54 : vector<1x1xf32>
    %56 = math.exp %55 : vector<1x1xf32>
    %57 = vector.broadcast %54 : vector<1x1xf32> to vector<1x256xf32>
    %58 = arith.subf %50, %57 : vector<1x256xf32>
    %59 = math.exp %58 : vector<1x256xf32>
    %c0_27 = arith.constant 0 : index
    %c0_28 = arith.constant 0 : index
    %60 = vector.load %arg17[%c0_27, %c0_28] : memref<1x1xf32, #tpu.memory_space<vmem>>, vector<1x1xf32>
    %61 = arith.mulf %56, %60 : vector<1x1xf32>
    %cst_29 = arith.constant dense<0.000000e+00> : vector<1xf32>
    %62 = vector.multi_reduction <add>, %59, %cst_29 [1] : vector<1x256xf32> to vector<1xf32>
    %63 = vector.shape_cast %62 : vector<1xf32> to vector<1x1xf32>
    %64 = arith.addf %61, %63 : vector<1x1xf32>
    %c0_30 = arith.constant 0 : index
    %c0_31 = arith.constant 0 : index
    %65 = vector.load %arg17[%c0_30, %c0_31] : memref<1x1xf32, #tpu.memory_space<vmem>>, vector<1x1xf32>
    tpu.vector_store %arg17[%c0_30, %c0_31], %64 {strides = array<i32>} : memref<1x1xf32, #tpu.memory_space<vmem>>, vector<1x1xf32>,
    %c0_32 = arith.constant 0 : index
    %c0_33 = arith.constant 0 : index
    %66 = vector.load %arg15[%c0_32, %c0_33] : memref<1x256xf32, #tpu.memory_space<vmem>>, vector<1x256xf32>
    %67 = vector.broadcast %56 : vector<1x1xf32> to vector<1x256xf32>
    %68 = arith.mulf %67, %66 : vector<1x256xf32>
    %69 = arith.truncf %59 : vector<1x256xf32> to vector<1x256xbf16>
    %cst_34 = arith.constant dense<0.000000e+00> : vector<1x256xf32>
    %70 = tpu.matmul %69, %28, %cst_34 {dimension_numbers = #tpu.dot_dimension_numbers<[1], [0], [0], [1], [0, 0, 1, 1], [], []>} : vector<1x256xbf16>, vector<256x256xbf16>, vector<1x256xf32> -> vector<1x256xf32>
    %71 = arith.addf %68, %70 : vector<1x256xf32>
    %c0_35 = arith.constant 0 : index
    %c0_36 = arith.constant 0 : index
    %72 = vector.load %arg15[%c0_35, %c0_36] : memref<1x256xf32, #tpu.memory_space<vmem>>, vector<1x256xf32>
    tpu.vector_store %arg15[%c0_35, %c0_36], %71 {strides = array<i32>} : memref<1x256xf32, #tpu.memory_space<vmem>>, vector<1x256xf32>,
    %c0_37 = arith.constant 0 : index
    %c0_38 = arith.constant 0 : index
    %73 = vector.load %arg16[%c0_37, %c0_38] : memref<1x1xf32, #tpu.memory_space<vmem>>, vector<1x1xf32>
    tpu.vector_store %arg16[%c0_37, %c0_38], %54 {strides = array<i32>} : memref<1x1xf32, #tpu.memory_space<vmem>>, vector<1x1xf32>,
    %c2_i32 = arith.constant 2 : i32
    %74 = arith.cmpi eq, %arg0, %c2_i32 : i32
    %75 = arith.extui %74 : i1 to i32
    %c0_i32_39 = arith.constant 0 : i32
    %76 = arith.cmpi ne, %75, %c0_i32_39 : i32
    scf.if %76 {
      %c0_40 = arith.constant 0 : index
      %c0_41 = arith.constant 0 : index
      %77 = vector.load %arg15[%c0_40, %c0_41] : memref<1x256xf32, #tpu.memory_space<vmem>>, vector<1x256xf32>
      %c0_42 = arith.constant 0 : index
      %c0_43 = arith.constant 0 : index
      %78 = vector.load %arg17[%c0_42, %c0_43] : memref<1x1xf32, #tpu.memory_space<vmem>>, vector<1x1xf32>
      %79 = vector.broadcast %78 : vector<1x1xf32> to vector<1x256xf32>
      %80 = arith.divf %77, %79 : vector<1x256xf32>
      %c0_44 = arith.constant 0 : index
      %c0_45 = arith.constant 0 : index
      %81 = vector.load %arg9[%c0_44, %c0_45] : memref<256x4xf32, #tpu.memory_space<vmem>>, vector<256x4xf32>
      %cst_46 = arith.constant dense<0.000000e+00> : vector<1x4xf32>
      %82 = tpu.matmul %80, %81, %cst_46 {dimension_numbers = #tpu.dot_dimension_numbers<[1], [0], [0], [1], [0, 0, 1, 1], [], []>} : vector<1x256xf32>, vector<256x4xf32>, vector<1x4xf32> -> vector<1x4xf32>
      %c0_47 = arith.constant 0 : index
      %c0_48 = arith.constant 0 : index
      %83 = vector.load %arg10[%c0_47, %c0_48] : memref<1x4xf32, #tpu.memory_space<vmem>>, vector<1x4xf32>
      %84 = arith.addf %82, %83 : vector<1x4xf32>
      %c0_49 = arith.constant 0 : index
      %c0_50 = arith.constant 0 : index
      %85 = vector.load %arg11[%c0_49, %c0_50] : memref<1x4xf32, #tpu.memory_space<vmem>>, vector<1x4xf32>
      tpu.vector_store %arg11[%c0_49, %c0_50], %84 {strides = array<i32>} : memref<1x4xf32, #tpu.memory_space<vmem>>, vector<1x4xf32>,
      %cst_51 = arith.constant dense<0xFF800000> : vector<1xf32>
      %86 = vector.multi_reduction <maximumf>, %84, %cst_51 [1] : vector<1x4xf32> to vector<1xf32>
      %87 = vector.shape_cast %86 : vector<1xf32> to vector<1x1xf32>
      %88 = vector.broadcast %87 : vector<1x1xf32> to vector<1x4xf32>
      %89 = arith.subf %84, %88 : vector<1x4xf32>
      %90 = math.exp %89 : vector<1x4xf32>
      %cst_52 = arith.constant dense<0.000000e+00> : vector<1xf32>
      %91 = vector.multi_reduction <add>, %90, %cst_52 [1] : vector<1x4xf32> to vector<1xf32>
      %92 = vector.shape_cast %91 : vector<1xf32> to vector<1x1xf32>
      %93 = vector.broadcast %92 : vector<1x1xf32> to vector<1x4xf32>
      %94 = arith.divf %90, %93 : vector<1x4xf32>
      %c0_53 = arith.constant 0 : index
      %c0_54 = arith.constant 0 : index
      %95 = vector.load %arg12[%c0_53, %c0_54] : memref<1x4xf32, #tpu.memory_space<vmem>>, vector<1x4xf32>
      tpu.vector_store %arg12[%c0_53, %c0_54], %94 {strides = array<i32>} : memref<1x4xf32, #tpu.memory_space<vmem>>, vector<1x4xf32>,
      %96 = tpu.iota {dimensions = array<i32: 1>} : vector<1x4xi32>
      %97 = vector.broadcast %87 : vector<1x1xf32> to vector<1x4xf32>
      %98 = arith.cmpf oeq, %84, %97 : vector<1x4xf32>
      %c1073741824_i32 = arith.constant 1073741824 : i32
      %99 = vector.broadcast %c1073741824_i32 : i32 to vector<1x4xi32>
      %100 = arith.select %98, %96, %99 : vector<1x4xi1>, vector<1x4xi32>
      %cst_55 = arith.constant dense<2147483647> : vector<1xi32>
      %101 = vector.multi_reduction <minsi>, %100, %cst_55 [1] : vector<1x4xi32> to vector<1xi32>
      %102 = vector.shape_cast %101 : vector<1xi32> to vector<1x1xi32>
      %c0_56 = arith.constant 0 : index
      %c0_57 = arith.constant 0 : index
      %103 = vector.load %arg13[%c0_56, %c0_57] : memref<1x1xi32, #tpu.memory_space<vmem>>, vector<1x1xi32>
      tpu.vector_store %arg13[%c0_56, %c0_57], %102 {strides = array<i32>} : memref<1x1xi32, #tpu.memory_space<vmem>>, vector<1x1xi32>,
    } else {
    }
    return
  }
  func.func @transform_0(%arg0: i32, %arg1: memref<1xi32, #tpu.memory_space<smem>>) -> (i32, i32) {
    %c0_i32 = arith.constant 0 : i32
    %c0_i32_0 = arith.constant 0 : i32
    return %arg0, %c0_i32 : i32, i32
  }
  func.func @transform_1(%arg0: i32, %arg1: memref<1xi32, #tpu.memory_space<smem>>) -> (i32, i32) {
    %c0_i32 = arith.constant 0 : i32
    %c0_i32_0 = arith.constant 0 : i32
    %c0_i32_1 = arith.constant 0 : i32
    return %c0_i32, %c0_i32_0 : i32, i32
  }
  func.func @transform_2(%arg0: i32, %arg1: memref<1xi32, #tpu.memory_space<smem>>) -> (i32, i32) {
    %c0_i32 = arith.constant 0 : i32
    %c0_i32_0 = arith.constant 0 : i32
    %c0_i32_1 = arith.constant 0 : i32
    return %c0_i32, %c0_i32_0 : i32, i32
  }
  func.func @transform_3(%arg0: i32, %arg1: memref<1xi32, #tpu.memory_space<smem>>) -> (i32, i32) {
    %c0_i32 = arith.constant 0 : i32
    %c0_i32_0 = arith.constant 0 : i32
    %c0_i32_1 = arith.constant 0 : i32
    return %c0_i32, %c0_i32_0 : i32, i32
  }
  func.func @transform_4(%arg0: i32, %arg1: memref<1xi32, #tpu.memory_space<smem>>) -> (i32, i32) {
    %c0_i32 = arith.constant 0 : i32
    %c0_i32_0 = arith.constant 0 : i32
    %c0_i32_1 = arith.constant 0 : i32
    return %c0_i32, %c0_i32_0 : i32, i32
  }
  func.func @transform_5(%arg0: i32, %arg1: memref<1xi32, #tpu.memory_space<smem>>) -> (i32, i32) {
    %c0_i32 = arith.constant 0 : i32
    %c0_i32_0 = arith.constant 0 : i32
    %c0_i32_1 = arith.constant 0 : i32
    return %c0_i32, %c0_i32_0 : i32, i32
  }
  func.func @transform_6(%arg0: i32, %arg1: memref<1xi32, #tpu.memory_space<smem>>) -> (i32, i32) {
    %c0_i32 = arith.constant 0 : i32
    %c0_i32_0 = arith.constant 0 : i32
    %c0_i32_1 = arith.constant 0 : i32
    return %c0_i32, %c0_i32_0 : i32, i32
  }
  func.func @transform_7(%arg0: i32, %arg1: memref<1xi32, #tpu.memory_space<smem>>) -> (i32, i32) {
    %c0_i32 = arith.constant 0 : i32
    %c0_i32_0 = arith.constant 0 : i32
    %c0_i32_1 = arith.constant 0 : i32
    return %c0_i32, %c0_i32_0 : i32, i32
  }
  func.func @transform_8(%arg0: i32, %arg1: memref<1xi32, #tpu.memory_space<smem>>) -> (i32, i32) {
    %c0_i32 = arith.constant 0 : i32
    %c0_i32_0 = arith.constant 0 : i32
    %c0_i32_1 = arith.constant 0 : i32
    return %c0_i32, %c0_i32_0 : i32, i32
  }
  func.func @transform_9(%arg0: i32, %arg1: memref<1xi32, #tpu.memory_space<smem>>) -> (i32, i32) {
    %c0_i32 = arith.constant 0 : i32
    %c0_i32_0 = arith.constant 0 : i32
    %c0_i32_1 = arith.constant 0 : i32
    return %c0_i32, %c0_i32_0 : i32, i32
  }
  func.func @transform_10(%arg0: i32, %arg1: memref<1xi32, #tpu.memory_space<smem>>) -> (i32, i32) {
    %c0_i32 = arith.constant 0 : i32
    %c0_i32_0 = arith.constant 0 : i32
    %c0_i32_1 = arith.constant 0 : i32
    return %c0_i32, %c0_i32_0 : i32, i32
  }
  func.func @transform_11(%arg0: i32, %arg1: memref<1xi32, #tpu.memory_space<smem>>) -> (i32, i32) {
    %c0_i32 = arith.constant 0 : i32
    %c0_i32_0 = arith.constant 0 : i32
    %c0_i32_1 = arith.constant 0 : i32
    return %c0_i32, %c0_i32_0 : i32, i32
  }
  func.func @transform_12(%arg0: i32, %arg1: memref<1xi32, #tpu.memory_space<smem>>) -> (i32, i32) {
    %c0_i32 = arith.constant 0 : i32
    %c0_i32_0 = arith.constant 0 : i32
    return %c0_i32, %arg0 : i32, i32
  }
}

</mosaic_0001>

<llo_original>
// kernel: tpu_custom_call.1
$region0: #{tpu_custom_call.1}
  #allocation0 [shape = 'u32[]', space=smem, size = 0x4, offset = 0x4, fixed_abs, tag = 'smem constant byte address 0x4 - core index']
  #allocation1 [shape = 'u32[144,128]{1,0:T(1,128)}', space=vmem, size = 0x12000, scoped, tag = 'internal scratch']
  #allocation2 [shape = 'f32[1,256]{1,0:T(1,128)}', space=vmem, size = 0x400, scoped, tag = 'scratch operand']
  #allocation3 [shape = 'f32[1,1]{1,0:T(1,128)}', space=vmem, size = 0x200, scoped, tag = 'scratch operand']
  #allocation4 [shape = 'f32[1,1]{1,0:T(1,128)}', space=vmem, size = 0x200, scoped, tag = 'scratch operand']
  #allocation5 [shape = 's32[1]{0}', space=sflag, size = 0x4, scoped, tag = 'scoped memory for tpu_custom_call.1']
  #allocation6 [shape = 's32[1]{0:T(128)S(6)}', space=smem, size = 0x200, scoped, tag = 'prefetched SMEM operand 0']
  #allocation7 [shape = 'f32[1,1]{1,0:T(1,128)S(1)}', space=vmem, size = 0x200, scoped, tag = 'scoped memory for tpu_custom_call.1']
  %s0 = inlined_call_operand.<no memory space> [shape: s32[1], index: 0, kind: input, shape index: {}]
  %s1 = inlined_call_operand.hbm [shape: bf16[600,384], index: 1, kind: input, shape index: {}]
  %s2 = inlined_call_operand.hbm [shape: bf16[384,256], index: 2, kind: input, shape index: {}]
  %s3 = inlined_call_operand.vmem [shape: f32[1,256], index: 3, kind: input, shape index: {}]
  %s4 = inlined_call_operand.vmem [shape: bf16[256,256], index: 4, kind: input, shape index: {}]
  %s5 = inlined_call_operand.vmem [shape: f32[1,256], index: 5, kind: input, shape index: {}]
  %s6 = inlined_call_operand.vmem [shape: f32[1,128], index: 6, kind: input, shape index: {}]
  %s7 = inlined_call_operand.<no memory space> [shape: f32[1,1], index: 7, kind: input, shape index: {}]
  %s8 = inlined_call_operand.vmem [shape: f32[256,4], index: 8, kind: input, shape index: {}]
  %s9 = inlined_call_operand.vmem [shape: f32[1,4], index: 9, kind: input, shape index: {}]
  %s10 = inlined_call_operand.hbm [shape: f32[1,4], index: 10, kind: output, shape index: {0}]
  %s11 = inlined_call_operand.hbm [shape: f32[1,4], index: 11, kind: output, shape index: {1}]
  %s12 = inlined_call_operand.hbm [shape: s32[1,1], index: 12, kind: output, shape index: {2}]
  %s13 = inlined_call_operand.hbm [shape: f32[1,600], index: 13, kind: output, shape index: {3}]
  %14 = xla_tuple %s10, %s11, %s12, %s13
  %s15 = sld [smem:[#allocation0]]
  $region109: #{tpu_custom_call.1} parent=0
    _
  %s17 = ssub.s32 1, %s15
  %s18 = scalar_select 0, %s17, %s15
  %19 = sst [smem:[#allocation6]] %s0
  %v20 = vstv %s7
  %21 = vst [vmem:[#allocation7] sm:$0x1] %v20
  $region1: #{tpu_custom_call.1} parent=0
    #allocation8 [shape = 'u8[393216]{0}', space=vmem, size = 0x60000, scoped, tag = 'input window, operand 1']
    #allocation9 [shape = 's32[2]{0}', space=sflag, size = 0x8, scoped, tag = 'scoped memory for tpu_custom_call.1']
    #allocation10 [shape = 's32[2]{0}', space=sflag, size = 0x8, scoped, tag = 'scoped memory for tpu_custom_call.1']
    #allocation11 [shape = 'u8[196608]{0}', space=vmem, size = 0x30000, scoped, tag = 'input window, operand 2, single buffered']
    #allocation12 [shape = 's32[1]{0}', space=sflag, size = 0x4, scoped, tag = 'scoped memory for tpu_custom_call.1']
    #allocation13 [shape = 'u8[512]{0}', space=vmem, size = 0x400, scoped, tag = 'output window, operand 0, single buffered']
    #allocation14 [shape = 'u8[512]{0}', space=vmem, size = 0x400, scoped, tag = 'output window, operand 1, single buffered']
    #allocation15 [shape = 's32[1]{0}', space=sflag, size = 0x4, scoped, tag = 'scoped memory for tpu_custom_call.1']
    #allocation16 [shape = 'u8[512]{0}', space=vmem, size = 0x400, scoped, tag = 'output window, operand 2, single buffered']
    #allocation17 [shape = 'u8[2048]{0}', space=vmem, size = 0x800, scoped, tag = 'output window, operand 3']
    #allocation18 [shape = 's32[2]{0}', space=sflag, size = 0x8, scoped, tag = 'scoped memory for tpu_custom_call.1']
    %22 = vsyncpa [#allocation9], 0
    %s23 = scalar_lea.sflag [#allocation9], 1
    %24 = vsyncpa %s23, 0
    %25 = vsyncpa [#allocation12], 0
    %26 = vsyncpa [#allocation10], 0
    %27 = vsyncpa [#allocation15], 0
    %28 = vsyncpa [#allocation18], 0
    %s29 = scalar_lea.sflag [#allocation18], 1
    %30 = vsyncpa %s29, 0
    loop: start=0, step=1, limit=5
    $region2: #{tpu_custom_call.1} parent=1 // loop_pre_header
      _
    $region3: #{tpu_custom_call.1} parent=1 // loop_header
      %s32 = sphi 0, %s36
      %p33 = scmp.ge.s32.totalorder %s32, 5
      %s42 = sphi 0, %s44
      %s45 = sphi 0, %s42
      %s46 = sphi 0, %s45
      %s62 = sphi 0, %s46
      %s66 = sphi 0, %s66
      %s68 = sphi 0, %s66
      %s69 = sphi 0, %s68
      %s83 = sphi 0, %s69
      %s87 = sphi 0, %s87
      %s89 = sphi 0, %s87
      %s90 = sphi 0, %s89
      %s104 = sphi 0, %s90
      %s108 = sphi 0, %s108
      %s110 = sphi 0, %s108
      %s111 = sphi 0, %s110
      %s125 = sphi 0, %s111
      %s129 = sphi 0, %s129
      %s131 = sphi 0, %s129
      %s132 = sphi 0, %s131
      %s146 = sphi 0, %s132
      %s150 = sphi 0, %s150
      %s152 = sphi 0, %s150
      %s153 = sphi 0, %s152
      %s167 = sphi 0, %s153
      %s171 = sphi 0, %s171
      %s173 = sphi 0, %s171
      %s174 = sphi 0, %s173
      %s188 = sphi 0, %s174
      %s192 = sphi 0, %s192
      %s194 = sphi 0, %s192
      %s195 = sphi 0, %s194
      %s209 = sphi 0, %s195
      %s213 = sphi 0, %s213
      %s215 = sphi 0, %s213
      %s216 = sphi 0, %s215
      %s230 = sphi 0, %s216
      %s234 = sphi 0, %s234
      %s236 = sphi 0, %s234
      %s237 = sphi 0, %s236
      %s251 = sphi 0, %s237
      %s255 = sphi 0, %s255
      %s257 = sphi 0, %s255
      %s258 = sphi 0, %s257
      %s272 = sphi 0, %s258
      %s276 = sphi 0, %s276
      %s278 = sphi 0, %s276
      %s279 = sphi 0, %s278
      %s293 = sphi 0, %s279
      %s299 = sphi 0, %s301
      %s302 = sphi 0, %s299
      %s303 = sphi 0, %s302
      %s319 = sphi 0, %s303
    $region4: #{tpu_custom_call.1} parent=1 // loop_header_branch
      %35 = sbr.rel (%p33) target = $region8
    $region5: #{tpu_custom_call.1} parent=1 // loop_body
      %s37 = ssub.s32 %s32, 1
      %s38 = ssub.s32 %s32, 2
      %s39 = sadd.s32 %s32, 1
      %s40 = ssub.s32 %s32, %s39
      %p41 = scmp.eq.s32.totalorder %s40, 0
      %s43 = sadd.s32 %s42, 1
      %s44 = scalar_select %p41, %s42, %s43
      %p47 = pneg %p41
      %p48 = scmp.eq.s32.totalorder %s32, 2
      %p49 = por %p47, %p48
      %p50 = scmp.ne.s32.totalorder %s42, %s45
      %p51 = scmp.eq.s32.totalorder %s32, 0
      %p52 = por %p50, %p51
      %p53 = scmp.ne.s32.totalorder %s42, %s45
      %p54 = scmp.eq.s32.totalorder %s37, 2
      %p55 = por %p53, %p54
      %p56 = scmp.ne.s32.totalorder %s45, %s46
      %p57 = scmp.eq.s32.totalorder %s37, 0
      %p58 = por %p56, %p57
      %p59 = scmp.ne.s32.totalorder %s45, %s46
      %p60 = scmp.eq.s32.totalorder %s38, 2
      %p61 = por %p59, %p60
      %p63 = scmp.ne.s32.totalorder %s46, %s62
      %p64 = scmp.eq.s32.totalorder %s38, 0
      %p65 = por %p63, %p64
      %s67 = sadd.s32 %s66, 1
      %p70 = scmp.eq.s32.totalorder %s32, 2
      %p71 = scmp.ne.s32.totalorder %s66, %s68
      %p72 = scmp.eq.s32.totalorder %s32, 0
      %p73 = por %p71, %p72
      %p74 = scmp.ne.s32.totalorder %s66, %s68
      %p75 = scmp.eq.s32.totalorder %s37, 2
      %p76 = por %p74, %p75
      %p77 = scmp.ne.s32.totalorder %s68, %s69
      %p78 = scmp.eq.s32.totalorder %s37, 0
      %p79 = por %p77, %p78
      %p80 = scmp.ne.s32.totalorder %s68, %s69
      %p81 = scmp.eq.s32.totalorder %s38, 2
      %p82 = por %p80, %p81
      %p84 = scmp.ne.s32.totalorder %s69, %s83
      %p85 = scmp.eq.s32.totalorder %s38, 0
      %p86 = por %p84, %p85
      %s88 = sadd.s32 %s87, 1
      %p91 = scmp.eq.s32.totalorder %s32, 2
      %p92 = scmp.ne.s32.totalorder %s87, %s89
      %p93 = scmp.eq.s32.totalorder %s32, 0
      %p94 = por %p92, %p93
      %p95 = scmp.ne.s32.totalorder %s87, %s89
      %p96 = scmp.eq.s32.totalorder %s37, 2
      %p97 = por %p95, %p96
      %p98 = scmp.ne.s32.totalorder %s89, %s90
      %p99 = scmp.eq.s32.totalorder %s37, 0
      %p100 = por %p98, %p99
      %p101 = scmp.ne.s32.totalorder %s89, %s90
      %p102 = scmp.eq.s32.totalorder %s38, 2
      %p103 = por %p101, %p102
      %p105 = scmp.ne.s32.totalorder %s90, %s104
      %p106 = scmp.eq.s32.totalorder %s38, 0
      %p107 = por %p105, %p106
      %s109 = sadd.s32 %s108, 1
      %p112 = scmp.eq.s32.totalorder %s32, 2
      %p113 = scmp.ne.s32.totalorder %s108, %s110
      %p114 = scmp.eq.s32.totalorder %s32, 0
      %p115 = por %p113, %p114
      %p116 = scmp.ne.s32.totalorder %s108, %s110
      %p117 = scmp.eq.s32.totalorder %s37, 2
      %p118 = por %p116, %p117
      %p119 = scmp.ne.s32.totalorder %s110, %s111
      %p120 = scmp.eq.s32.totalorder %s37, 0
      %p121 = por %p119, %p120
      %p122 = scmp.ne.s32.totalorder %s110, %s111
      %p123 = scmp.eq.s32.totalorder %s38, 2
      %p124 = por %p122, %p123
      %p126 = scmp.ne.s32.totalorder %s111, %s125
      %p127 = scmp.eq.s32.totalorder %s38, 0
      %p128 = por %p126, %p127
      %s130 = sadd.s32 %s129, 1
      %p133 = scmp.eq.s32.totalorder %s32, 2
      %p134 = scmp.ne.s32.totalorder %s129, %s131
      %p135 = scmp.eq.s32.totalorder %s32, 0
      %p136 = por %p134, %p135
      %p137 = scmp.ne.s32.totalorder %s129, %s131
      %p138 = scmp.eq.s32.totalorder %s37, 2
      %p139 = por %p137, %p138
      %p140 = scmp.ne.s32.totalorder %s131, %s132
      %p141 = scmp.eq.s32.totalorder %s37, 0
      %p142 = por %p140, %p141
      %p143 = scmp.ne.s32.totalorder %s131, %s132
      %p144 = scmp.eq.s32.totalorder %s38, 2
      %p145 = por %p143, %p144
      %p147 = scmp.ne.s32.totalorder %s132, %s146
      %p148 = scmp.eq.s32.totalorder %s38, 0
      %p149 = por %p147, %p148
      %s151 = sadd.s32 %s150, 1
      %p154 = scmp.eq.s32.totalorder %s32, 2
      %p155 = scmp.ne.s32.totalorder %s150, %s152
      %p156 = scmp.eq.s32.totalorder %s32, 0
      %p157 = por %p155, %p156
      %p158 = scmp.ne.s32.totalorder %s150, %s152
      %p159 = scmp.eq.s32.totalorder %s37, 2
      %p160 = por %p158, %p159
      %p161 = scmp.ne.s32.totalorder %s152, %s153
      %p162 = scmp.eq.s32.totalorder %s37, 0
      %p163 = por %p161, %p162
      %p164 = scmp.ne.s32.totalorder %s152, %s153
      %p165 = scmp.eq.s32.totalorder %s38, 2
      %p166 = por %p164, %p165
      %p168 = scmp.ne.s32.totalorder %s153, %s167
      %p169 = scmp.eq.s32.totalorder %s38, 0
      %p170 = por %p168, %p169
      %s172 = sadd.s32 %s171, 1
      %p175 = scmp.eq.s32.totalorder %s32, 2
      %p176 = scmp.ne.s32.totalorder %s171, %s173
      %p177 = scmp.eq.s32.totalorder %s32, 0
      %p178 = por %p176, %p177
      %p179 = scmp.ne.s32.totalorder %s171, %s173
      %p180 = scmp.eq.s32.totalorder %s37, 2
      %p181 = por %p179, %p180
      %p182 = scmp.ne.s32.totalorder %s173, %s174
      %p183 = scmp.eq.s32.totalorder %s37, 0
      %p184 = por %p182, %p183
      %p185 = scmp.ne.s32.totalorder %s173, %s174
      %p186 = scmp.eq.s32.totalorder %s38, 2
      %p187 = por %p185, %p186
      %p189 = scmp.ne.s32.totalorder %s174, %s188
      %p190 = scmp.eq.s32.totalorder %s38, 0
      %p191 = por %p189, %p190
      %s193 = sadd.s32 %s192, 1
      %p196 = scmp.eq.s32.totalorder %s32, 2
      %p197 = scmp.ne.s32.totalorder %s192, %s194
      %p198 = scmp.eq.s32.totalorder %s32, 0
      %p199 = por %p197, %p198
      %p200 = scmp.ne.s32.totalorder %s192, %s194
      %p201 = scmp.eq.s32.totalorder %s37, 2
      %p202 = por %p200, %p201
      %p203 = scmp.ne.s32.totalorder %s194, %s195
      %p204 = scmp.eq.s32.totalorder %s37, 0
      %p205 = por %p203, %p204
      %p206 = scmp.ne.s32.totalorder %s194, %s195
      %p207 = scmp.eq.s32.totalorder %s38, 2
      %p208 = por %p206, %p207
      %p210 = scmp.ne.s32.totalorder %s195, %s209
      %p211 = scmp.eq.s32.totalorder %s38, 0
      %p212 = por %p210, %p211
      %s214 = sadd.s32 %s213, 1
      %p217 = scmp.eq.s32.totalorder %s32, 2
      %p218 = scmp.ne.s32.totalorder %s213, %s215
      %p219 = scmp.eq.s32.totalorder %s32, 0
      %p220 = por %p218, %p219
      %p221 = scmp.ne.s32.totalorder %s213, %s215
      %p222 = scmp.eq.s32.totalorder %s37, 2
      %p223 = por %p221, %p222
      %p224 = scmp.ne.s32.totalorder %s215, %s216
      %p225 = scmp.eq.s32.totalorder %s37, 0
      %p226 = por %p224, %p225
      %p227 = scmp.ne.s32.totalorder %s215, %s216
      %p228 = scmp.eq.s32.totalorder %s38, 2
      %p229 = por %p227, %p228
      %p231 = scmp.ne.s32.totalorder %s216, %s230
      %p232 = scmp.eq.s32.totalorder %s38, 0
      %p233 = por %p231, %p232
      %s235 = sadd.s32 %s234, 1
      %p238 = scmp.eq.s32.totalorder %s32, 2
      %p239 = scmp.ne.s32.totalorder %s234, %s236
      %p240 = scmp.eq.s32.totalorder %s32, 0
      %p241 = por %p239, %p240
      %p242 = scmp.ne.s32.totalorder %s234, %s236
      %p243 = scmp.eq.s32.totalorder %s37, 2
      %p244 = por %p242, %p243
      %p245 = scmp.ne.s32.totalorder %s236, %s237
      %p246 = scmp.eq.s32.totalorder %s37, 0
      %p247 = por %p245, %p246
      %p248 = scmp.ne.s32.totalorder %s236, %s237
      %p249 = scmp.eq.s32.totalorder %s38, 2
      %p250 = por %p248, %p249
      %p252 = scmp.ne.s32.totalorder %s237, %s251
      %p253 = scmp.eq.s32.totalorder %s38, 0
      %p254 = por %p252, %p253
      %s256 = sadd.s32 %s255, 1
      %p259 = scmp.eq.s32.totalorder %s32, 2
      %p260 = scmp.ne.s32.totalorder %s255, %s257
      %p261 = scmp.eq.s32.totalorder %s32, 0
      %p262 = por %p260, %p261
      %p263 = scmp.ne.s32.totalorder %s255, %s257
      %p264 = scmp.eq.s32.totalorder %s37, 2
      %p265 = por %p263, %p264
      %p266 = scmp.ne.s32.totalorder %s257, %s258
      %p267 = scmp.eq.s32.totalorder %s37, 0
      %p268 = por %p266, %p267
      %p269 = scmp.ne.s32.totalorder %s257, %s258
      %p270 = scmp.eq.s32.totalorder %s38, 2
      %p271 = por %p269, %p270
      %p273 = scmp.ne.s32.totalorder %s258, %s272
      %p274 = scmp.eq.s32.totalorder %s38, 0
      %p275 = por %p273, %p274
      %s277 = sadd.s32 %s276, 1
      %p280 = scmp.eq.s32.totalorder %s32, 2
      %p281 = scmp.ne.s32.totalorder %s276, %s278
      %p282 = scmp.eq.s32.totalorder %s32, 0
      %p283 = por %p281, %p282
      %p284 = scmp.ne.s32.totalorder %s276, %s278
      %p285 = scmp.eq.s32.totalorder %s37, 2
      %p286 = por %p284, %p285
      %p287 = scmp.ne.s32.totalorder %s278, %s279
      %p288 = scmp.eq.s32.totalorder %s37, 0
      %p289 = por %p287, %p288
      %p290 = scmp.ne.s32.totalorder %s278, %s279
      %p291 = scmp.eq.s32.totalorder %s38, 2
      %p292 = por %p290, %p291
      %p294 = scmp.ne.s32.totalorder %s279, %s293
      %p295 = scmp.eq.s32.totalorder %s38, 0
      %p296 = por %p294, %p295
      %s297 = ssub.s32 %s32, %s39
      %p298 = scmp.eq.s32.totalorder %s297, 0
      %s300 = sadd.s32 %s299, 1
      %s301 = scalar_select %p298, %s299, %s300
      %p304 = pneg %p298
      %p305 = scmp.eq.s32.totalorder %s32, 2
      %p306 = por %p304, %p305
      %p307 = scmp.ne.s32.totalorder %s299, %s302
      %p308 = scmp.eq.s32.totalorder %s32, 0
      %p309 = por %p307, %p308
      %p310 = scmp.ne.s32.totalorder %s299, %s302
      %p311 = scmp.eq.s32.totalorder %s37, 2
      %p312 = por %p310, %p311
      %p313 = scmp.ne.s32.totalorder %s302, %s303
      %p314 = scmp.eq.s32.totalorder %s37, 0
      %p315 = por %p313, %p314
      %p316 = scmp.ne.s32.totalorder %s302, %s303
      %p317 = scmp.eq.s32.totalorder %s38, 2
      %p318 = por %p316, %p317
      %p320 = scmp.ne.s32.totalorder %s303, %s319
      %p321 = scmp.eq.s32.totalorder %s38, 0
      %p322 = por %p320, %p321
      %p323 = scmp.le.s32.totalorder 1, %s32
      %p324 = scmp.lt.s32.totalorder %s32, 4
      %p325 = pnand %p323, %p324
      %p326 = pneg %p325
      // Predicated region
      $region9: #{tpu_custom_call.1} parent=5 // pred_check
        _
      $region10: #{tpu_custom_call.1} parent=5 // pred_check_branch
        %328 = sbr.rel (%p325) target = $region12
      $region11: #{tpu_custom_call.1} parent=5 // pred_region
        %s329 = ssub.s32 %s32, 1
        // Predicated region
        $region13: #{tpu_custom_call.1} parent=11 // pred_check
          %p330 = pneg %p79
        $region14: #{tpu_custom_call.1} parent=11 // pred_check_branch
          %332 = sbr.rel (%p330) target = $region16
        $region15: #{tpu_custom_call.1} parent=11 // pred_region
          %s334 = ssub.s32 6144, 6144
          %335 = vsyncadd [#allocation12], %s334
          %s336 = sshll.u32 [#allocation11], 4
          %s337 = int_to_ptr.vmem [resolvable:$true] %s336
          %342 = dma.hbm_to_vmem [thread:$0]  %s2, 6144, %s337, [#allocation12], 128, 128, 8
        $region16: #{tpu_custom_call.1} parent=11 // pred_fallthru
          _
        // Predicated region
        $region17: #{tpu_custom_call.1} parent=11 // pred_check
          %p343 = pneg %p100
        $region18: #{tpu_custom_call.1} parent=11 // pred_check_branch
          %345 = sbr.rel (%p343) target = $region20
        $region19: #{tpu_custom_call.1} parent=11 // pred_region
          _
        $region20: #{tpu_custom_call.1} parent=11 // pred_fallthru
          _
        // Predicated region
        $region21: #{tpu_custom_call.1} parent=11 // pred_check
          %p346 = pneg %p121
        $region22: #{tpu_custom_call.1} parent=11 // pred_check_branch
          %348 = sbr.rel (%p346) target = $region24
        $region23: #{tpu_custom_call.1} parent=11 // pred_region
          _
        $region24: #{tpu_custom_call.1} parent=11 // pred_fallthru
          _
        // Predicated region
        $region25: #{tpu_custom_call.1} parent=11 // pred_check
          %p349 = pneg %p142
        $region26: #{tpu_custom_call.1} parent=11 // pred_check_branch
          %351 = sbr.rel (%p349) target = $region28
        $region27: #{tpu_custom_call.1} parent=11 // pred_region
          _
        $region28: #{tpu_custom_call.1} parent=11 // pred_fallthru
          _
        // Predicated region
        $region29: #{tpu_custom_call.1} parent=11 // pred_check
          %p352 = pneg %p163
        $region30: #{tpu_custom_call.1} parent=11 // pred_check_branch
          %354 = sbr.rel (%p352) target = $region32
        $region31: #{tpu_custom_call.1} parent=11 // pred_region
          _
        $region32: #{tpu_custom_call.1} parent=11 // pred_fallthru
          _
        // Predicated region
        $region33: #{tpu_custom_call.1} parent=11 // pred_check
          %p355 = pneg %p184
        $region34: #{tpu_custom_call.1} parent=11 // pred_check_branch
          %357 = sbr.rel (%p355) target = $region36
        $region35: #{tpu_custom_call.1} parent=11 // pred_region
          _
        $region36: #{tpu_custom_call.1} parent=11 // pred_fallthru
          _
        // Predicated region
        $region37: #{tpu_custom_call.1} parent=11 // pred_check
          %p358 = pneg %p205
        $region38: #{tpu_custom_call.1} parent=11 // pred_check_branch
          %360 = sbr.rel (%p358) target = $region40
        $region39: #{tpu_custom_call.1} parent=11 // pred_region
          _
        $region40: #{tpu_custom_call.1} parent=11 // pred_fallthru
          _
        // Predicated region
        $region41: #{tpu_custom_call.1} parent=11 // pred_check
          %p361 = pneg %p226
        $region42: #{tpu_custom_call.1} parent=11 // pred_check_branch
          %363 = sbr.rel (%p361) target = $region44
        $region43: #{tpu_custom_call.1} parent=11 // pred_region
          _
        $region44: #{tpu_custom_call.1} parent=11 // pred_fallthru
          _
      $region12: #{tpu_custom_call.1} parent=5 // pred_fallthru
        _
      %p364 = scmp.lt.s32.totalorder %s32, 3
      // Predicated region
      $region45: #{tpu_custom_call.1} parent=5 // pred_check
        %p365 = pneg %p364
      $region46: #{tpu_custom_call.1} parent=5 // pred_check_branch
        %367 = sbr.rel (%p365) target = $region48
      $region47: #{tpu_custom_call.1} parent=5 // pred_region
        // Predicated region
        $region49: #{tpu_custom_call.1} parent=47 // pred_check
          %p368 = pneg %p52
        $region50: #{tpu_custom_call.1} parent=47 // pred_check_branch
          %370 = sbr.rel (%p368) target = $region52
        $region51: #{tpu_custom_call.1} parent=47 // pred_region
          %s371 = sand.u32 %s42, 1
          %s372 = scalar_lea.sflag [#allocation9], %s371
          %s373 = sand.u32 %s42, 1
          %s374 = smul.addr %s373, 384
          %s375 = scalar_lea.vmem [#allocation8], %s374
          %s376 = smul.u32 32, %s32
          %s377 = ssub.s32 75, %s376
          %p378 = scmp.lt.s32.totalorder %s377, 32
          %s379 = scalar_select %p378, %s377, 32
          %s380 = smul.u32 64, %s379
          %s381 = smul.u32 %s380, 3
          %s383 = ssub.s32 6144, %s381
          %384 = vsyncadd %s372, %s383
          %p385 = scmp.ne.s32.totalorder 0, %s381
          %s386 = smul.addr %s376, 3
          %s387 = smul.addr %s386, 64
          %s388 = scalar_lea.hbm %s1, %s387
          %s389 = smul.u32 12, %s379
          %s390 = sshll.u32 %s375, 4
          %s391 = int_to_ptr.vmem [resolvable:$true] %s390
          %s392 = sshll.u32 %s389, 4
          %396 = dma.hbm_to_vmem [thread:$0]  (%p385), %s388, %s392, %s391, %s372, 192, 192, 12
        $region52: #{tpu_custom_call.1} parent=47 // pred_fallthru
          _
      $region48: #{tpu_custom_call.1} parent=5 // pred_fallthru
        _
      %p397 = scmp.le.s32.totalorder 1, %s32
      %p398 = scmp.lt.s32.totalorder %s32, 4
      %p399 = pnand %p397, %p398
      %p400 = pneg %p399
      // Predicated region
      $region53: #{tpu_custom_call.1} parent=5 // pred_check
        _
      $region54: #{tpu_custom_call.1} parent=5 // pred_check_branch
        %402 = sbr.rel (%p399) target = $region56
      $region55: #{tpu_custom_call.1} parent=5 // pred_region
        %s403 = ssub.s32 %s32, 1
        %s404 = sand.u32 %s45, 1
        %s405 = scalar_lea.sflag [#allocation9], %s404
        %s406 = sand.u32 %s45, 1
        %s407 = smul.addr %s406, 384
        %s408 = scalar_lea.vmem [#allocation8], %s407
        // Predicated region
        $region57: #{tpu_custom_call.1} parent=55 // pred_check
          %p409 = pneg %p58
        $region58: #{tpu_custom_call.1} parent=55 // pred_check_branch
          %411 = sbr.rel (%p409) target = $region60
        $region59: #{tpu_custom_call.1} parent=55 // pred_region
          %412 = dma.done %s405, 6144
        $region60: #{tpu_custom_call.1} parent=55 // pred_fallthru
          _
        // Predicated region
        $region61: #{tpu_custom_call.1} parent=55 // pred_check
          %p413 = pneg %p79
        $region62: #{tpu_custom_call.1} parent=55 // pred_check_branch
          %415 = sbr.rel (%p413) target = $region64
        $region63: #{tpu_custom_call.1} parent=55 // pred_region
          %416 = dma.done [#allocation12], 6144
        $region64: #{tpu_custom_call.1} parent=55 // pred_fallthru
          _
        %s417 = sand.u32 %s45, 1
        %s418 = scalar_lea.sflag [#allocation9], %s417
        %s419 = sand.u32 %s45, 1
        %s420 = smul.addr %s419, 384
        %s421 = scalar_lea.vmem [#allocation8], %s420
        %p422 = pneg %p58
        %p423 = pneg %p55
        %p424 = pneg %p79
        %p425 = pneg %p76
        %p426 = pneg %p100
        %p427 = pneg %p97
        %p428 = pneg %p121
        %p429 = pneg %p118
        %p430 = pneg %p142
        %p431 = pneg %p139
        %p432 = pneg %p163
        %p433 = pneg %p160
        %p434 = pneg %p184
        %p435 = pneg %p181
        %p436 = pneg %p205
        %p437 = pneg %p202
        %p438 = pneg %p226
        %p439 = pneg %p223
        %p440 = pneg %p247
        %p441 = pneg %p244
        %p442 = pneg %p268
        %p443 = pneg %p265
        %p444 = pneg %p289
        %p445 = pneg %p286
        %p446 = pneg %p315
        %p447 = pneg %p312
        %s448 = sand.u32 %s302, 1
        %s449 = scalar_lea.sflag [#allocation18], %s448
        %s450 = sand.u32 %s302, 1
        %s451 = smul.addr %s450, 2
        %s452 = scalar_lea.vmem [#allocation17], %s451
        %s453 = smul.u32 32, %s37
        %s454 = ssub.s32 75, %s453
        %p455 = scmp.lt.s32.totalorder %s454, 32
        %s456 = scalar_select %p455, %s454, 32
        %s457 = smul.u32 64, %s456
        %s458 = smul.u32 %s457, 3
        %s459 = smul.u32 2, %s37
        %s460 = ssub.s32 5, %s459
        %p461 = scmp.lt.s32.totalorder %s460, 2
        %s462 = scalar_select %p461, %s460, 2
        %s463 = smul.u32 16, %s462
        %s465 = sld [smem:[#allocation6]]
        %p466 = scmp.eq.s32.totalorder %s37, 0
        // Predicated region
        $region65: #{tpu_custom_call.1} parent=55 // pred_check
          %p467 = pneg %p466
        $region66: #{tpu_custom_call.1} parent=55 // pred_check_branch
          %469 = sbr.rel (%p467) target = $region68
        $region67: #{tpu_custom_call.1} parent=55 // pred_region
          %v470 = vlaneseq
          %vm471 = vcmp.ge.s32.totalorder %v470, 0
          %vm472 = vcmp.lt.s32.totalorder %v470, 256
          %vm473 = vmand %vm471, %vm472
          %474 = vst.msk [vmem:[#allocation2] sm:$0x3] %vm473, 0.0
          %vm475 = vcmask 0
          %476 = vst.msk [vmem:[#allocation3] sm:$0x1] %vm475, -inf
          %477 = vst.msk [vmem:[#allocation4] sm:$0x1] %vm475, 0.0
        $region68: #{tpu_custom_call.1} parent=55 // pred_fallthru
          _
        %s478 = smul.u32 %s37, 256
        %v479 = vlaneseq
        %v480 = vshrl.u32 %v479, 7
        %v481 = vadd.s32 %v480, 8
        %v482 = vadd.s32 %v480, 16
        %v483 = vadd.s32 %v480, 24
        %v484 = vadd.s32 %v480, 32
        %v485 = vadd.s32 %v480, 40
        %v486 = vadd.s32 %v480, 48
        %v487 = vadd.s32 %v480, 56
        %v488 = vadd.s32 %v480, 64
        %v489 = vadd.s32 %v480, 72
        %v490 = vadd.s32 %v480, 80
        %v491 = vadd.s32 %v480, 88
        %v492 = vadd.s32 %v480, 96
        %v493 = vadd.s32 %v480, 104
        %v494 = vadd.s32 %v480, 112
        %v495 = vadd.s32 %v480, 120
        %v496 = vadd.s32 %v480, 128
        %v497 = vadd.s32 %v480, 136
        %v498 = vadd.s32 %v480, 144
        %v499 = vadd.s32 %v480, 152
        %v500 = vadd.s32 %v480, 160
        %v501 = vadd.s32 %v480, 168
        %v502 = vadd.s32 %v480, 176
        %v503 = vadd.s32 %v480, 184
        %v504 = vadd.s32 %v480, 192
        %v505 = vadd.s32 %v480, 200
        %v506 = vadd.s32 %v480, 208
        %v507 = vadd.s32 %v480, 216
        %v508 = vadd.s32 %v480, 224
        %v509 = vadd.s32 %v480, 232
        %v510 = vadd.s32 %v480, 240
        %v511 = vadd.s32 %v480, 248
        %v512 = vstv %s478
        %v513 = vadd.s32 %v512, %v480
        %v514 = vadd.s32 %v512, %v481
        %v515 = vadd.s32 %v512, %v482
        %v516 = vadd.s32 %v512, %v483
        %v517 = vadd.s32 %v512, %v484
        %v518 = vadd.s32 %v512, %v485
        %v519 = vadd.s32 %v512, %v486
        %v520 = vadd.s32 %v512, %v487
        %v521 = vadd.s32 %v512, %v488
        %v522 = vadd.s32 %v512, %v489
        %v523 = vadd.s32 %v512, %v490
        %v524 = vadd.s32 %v512, %v491
        %v525 = vadd.s32 %v512, %v492
        %v526 = vadd.s32 %v512, %v493
        %v527 = vadd.s32 %v512, %v494
        %v528 = vadd.s32 %v512, %v495
        %v529 = vadd.s32 %v512, %v496
        %v530 = vadd.s32 %v512, %v497
        %v531 = vadd.s32 %v512, %v498
        %v532 = vadd.s32 %v512, %v499
        %v533 = vadd.s32 %v512, %v500
        %v534 = vadd.s32 %v512, %v501
        %v535 = vadd.s32 %v512, %v502
        %v536 = vadd.s32 %v512, %v503
        %v537 = vadd.s32 %v512, %v504
        %v538 = vadd.s32 %v512, %v505
        %v539 = vadd.s32 %v512, %v506
        %v540 = vadd.s32 %v512, %v507
        %v541 = vadd.s32 %v512, %v508
        %v542 = vadd.s32 %v512, %v509
        %v543 = vadd.s32 %v512, %v510
        %v544 = vadd.s32 %v512, %v511
        %v545 = vstv %s465
        %vm546 = vcmp.lt.s32.totalorder %v513, %v545
        %vm547 = vcmp.lt.s32.totalorder %v514, %v545
        %vm548 = vcmp.lt.s32.totalorder %v515, %v545
        %vm549 = vcmp.lt.s32.totalorder %v516, %v545
        %vm550 = vcmp.lt.s32.totalorder %v517, %v545
        %vm551 = vcmp.lt.s32.totalorder %v518, %v545
        %vm552 = vcmp.lt.s32.totalorder %v519, %v545
        %vm553 = vcmp.lt.s32.totalorder %v520, %v545
        %vm554 = vcmp.lt.s32.totalorder %v521, %v545
        %vm555 = vcmp.lt.s32.totalorder %v522, %v545
        %vm556 = vcmp.lt.s32.totalorder %v523, %v545
        %vm557 = vcmp.lt.s32.totalorder %v524, %v545
        %vm558 = vcmp.lt.s32.totalorder %v525, %v545
        %vm559 = vcmp.lt.s32.totalorder %v526, %v545
        %vm560 = vcmp.lt.s32.totalorder %v527, %v545
        %vm561 = vcmp.lt.s32.totalorder %v528, %v545
        %vm562 = vcmp.lt.s32.totalorder %v529, %v545
        %vm563 = vcmp.lt.s32.totalorder %v530, %v545
        %vm564 = vcmp.lt.s32.totalorder %v531, %v545
        %vm565 = vcmp.lt.s32.totalorder %v532, %v545
        %vm566 = vcmp.lt.s32.totalorder %v533, %v545
        %vm567 = vcmp.lt.s32.totalorder %v534, %v545
        %vm568 = vcmp.lt.s32.totalorder %v535, %v545
        %vm569 = vcmp.lt.s32.totalorder %v536, %v545
        %vm570 = vcmp.lt.s32.totalorder %v537, %v545
        %vm571 = vcmp.lt.s32.totalorder %v538, %v545
        %vm572 = vcmp.lt.s32.totalorder %v539, %v545
        %vm573 = vcmp.lt.s32.totalorder %v540, %v545
        %vm574 = vcmp.lt.s32.totalorder %v541, %v545
        %vm575 = vcmp.lt.s32.totalorder %v542, %v545
        %vm576 = vcmp.lt.s32.totalorder %v543, %v545
        %vm577 = vcmp.lt.s32.totalorder %v544, %v545
        %v578 = vlaneseq
        %v579 = vand.u32 %v578, 127
        %v580 = vadd.s32 %v579, 128
        %v581 = vadd.s32 %v512, %v579
        %v582 = vadd.s32 %v512, %v580
        %vm583 = vcmp.lt.s32.totalorder %v581, %v545
        %vm584 = vcmp.lt.s32.totalorder %v582, %v545
        %v585 = vld [vmem:[%s408] sm:$0xff]
        %v586 = vld [vmem:[%s408 + $0x8] sm:$0xf]
        %v587 = vld [vmem:[%s408 + $0xc] sm:$0xff]
        %v588 = vld [vmem:[%s408 + $0x14] sm:$0xf]
        %v589 = vld [vmem:[%s408 + $0x18] sm:$0xff]
        %v590 = vld [vmem:[%s408 + $0x20] sm:$0xf]
        %v591 = vld [vmem:[%s408 + $0x24] sm:$0xff]
        %v592 = vld [vmem:[%s408 + $0x2c] sm:$0xf]
        %v593 = vld [vmem:[%s408 + $0x30] sm:$0xff]
        %v594 = vld [vmem:[%s408 + $0x38] sm:$0xf]
        %v595 = vld [vmem:[%s408 + $0x3c] sm:$0xff]
        %v596 = vld [vmem:[%s408 + $0x44] sm:$0xf]
        %v597 = vld [vmem:[%s408 + $0x48] sm:$0xff]
        %v598 = vld [vmem:[%s408 + $0x50] sm:$0xf]
        %v599 = vld [vmem:[%s408 + $0x54] sm:$0xff]
        %v600 = vld [vmem:[%s408 + $0x5c] sm:$0xf]
        %v601 = vld [vmem:[%s408 + $0x60] sm:$0xff]
        %v602 = vld [vmem:[%s408 + $0x68] sm:$0xf]
        %v603 = vld [vmem:[%s408 + $0x6c] sm:$0xff]
        %v604 = vld [vmem:[%s408 + $0x74] sm:$0xf]
        %v605 = vld [vmem:[%s408 + $0x78] sm:$0xff]
        %v606 = vld [vmem:[%s408 + $0x80] sm:$0xf]
        %v607 = vld [vmem:[%s408 + $0x84] sm:$0xff]
        %v608 = vld [vmem:[%s408 + $0x8c] sm:$0xf]
        %v609 = vld [vmem:[%s408 + $0x90] sm:$0xff]
        %v610 = vld [vmem:[%s408 + $0x98] sm:$0xf]
        %v611 = vld [vmem:[%s408 + $0x9c] sm:$0xff]
        %v612 = vld [vmem:[%s408 + $0xa4] sm:$0xf]
        %v613 = vld [vmem:[%s408 + $0xa8] sm:$0xff]
        %v614 = vld [vmem:[%s408 + $0xb0] sm:$0xf]
        %v615 = vld [vmem:[%s408 + $0xb4] sm:$0xff]
        %v616 = vld [vmem:[%s408 + $0xbc] sm:$0xf]
        %v617 = vld [vmem:[%s408 + $0xc0] sm:$0xff]
        %v618 = vld [vmem:[%s408 + $0xc8] sm:$0xf]
        %v619 = vld [vmem:[%s408 + $0xcc] sm:$0xff]
        %v620 = vld [vmem:[%s408 + $0xd4] sm:$0xf]
        %v621 = vld [vmem:[%s408 + $0xd8] sm:$0xff]
        %v622 = vld [vmem:[%s408 + $0xe0] sm:$0xf]
        %v623 = vld [vmem:[%s408 + $0xe4] sm:$0xff]
        %v624 = vld [vmem:[%s408 + $0xec] sm:$0xf]
        %v625 = vld [vmem:[%s408 + $0xf0] sm:$0xff]
        %v626 = vld [vmem:[%s408 + $0xf8] sm:$0xf]
        %v627 = vld [vmem:[%s408 + $0xfc] sm:$0xff]
        %v628 = vld [vmem:[%s408 + $0x104] sm:$0xf]
        %v629 = vld [vmem:[%s408 + $0x108] sm:$0xff]
        %v630 = vld [vmem:[%s408 + $0x110] sm:$0xf]
        %v631 = vld [vmem:[%s408 + $0x114] sm:$0xff]
        %v632 = vld [vmem:[%s408 + $0x11c] sm:$0xf]
        %v633 = vld [vmem:[%s408 + $0x120] sm:$0xff]
        %v634 = vld [vmem:[%s408 + $0x128] sm:$0xf]
        %v635 = vld [vmem:[%s408 + $0x12c] sm:$0xff]
        %v636 = vld [vmem:[%s408 + $0x134] sm:$0xf]
        %v637 = vld [vmem:[%s408 + $0x138] sm:$0xff]
        %v638 = vld [vmem:[%s408 + $0x140] sm:$0xf]
        %v639 = vld [vmem:[%s408 + $0x144] sm:$0xff]
        %v640 = vld [vmem:[%s408 + $0x14c] sm:$0xf]
        %v641 = vld [vmem:[%s408 + $0x150] sm:$0xff]
        %v642 = vld [vmem:[%s408 + $0x158] sm:$0xf]
        %v643 = vld [vmem:[%s408 + $0x15c] sm:$0xff]
        %v644 = vld [vmem:[%s408 + $0x164] sm:$0xf]
        %v645 = vld [vmem:[%s408 + $0x168] sm:$0xff]
        %v646 = vld [vmem:[%s408 + $0x170] sm:$0xf]
        %v647 = vld [vmem:[%s408 + $0x174] sm:$0xff]
        %v648 = vld [vmem:[%s408 + $0x17c] sm:$0xf]
        %v649 = vld [vmem:[#allocation11] sm:$0xff]
        %v650 = vld [vmem:[#allocation11 + $0x8] sm:$0xff]
        %v651 = vld [vmem:[#allocation11 + $0x10] sm:$0xff]
        %v652 = vld [vmem:[#allocation11 + $0x18] sm:$0xff]
        %v653 = vld [vmem:[#allocation11 + $0x20] sm:$0xff]
        %v654 = vld [vmem:[#allocation11 + $0x28] sm:$0xff]
        %v655 = vld [vmem:[#allocation11 + $0x30] sm:$0xff]
        %v656 = vld [vmem:[#allocation11 + $0x38] sm:$0xff]
        %v657 = vld [vmem:[#allocation11 + $0x40] sm:$0xff]
        %v658 = vld [vmem:[#allocation11 + $0x48] sm:$0xff]
        %v659 = vld [vmem:[#allocation11 + $0x50] sm:$0xff]
        %v660 = vld [vmem:[#allocation11 + $0x58] sm:$0xff]
        %v661 = vld [vmem:[#allocation11 + $0x60] sm:$0xff]
        %v662 = vld [vmem:[#allocation11 + $0x68] sm:$0xff]
        %v663 = vld [vmem:[#allocation11 + $0x70] sm:$0xff]
        %v664 = vld [vmem:[#allocation11 + $0x78] sm:$0xff]
        %v665 = vld [vmem:[#allocation11 + $0x80] sm:$0xff]
        %v666 = vld [vmem:[#allocation11 + $0x88] sm:$0xff]
        %v667 = vld [vmem:[#allocation11 + $0x90] sm:$0xff]
        %v668 = vld [vmem:[#allocation11 + $0x98] sm:$0xff]
        %v669 = vld [vmem:[#allocation11 + $0xa0] sm:$0xff]
        %v670 = vld [vmem:[#allocation11 + $0xa8] sm:$0xff]
        %v671 = vld [vmem:[#allocation11 + $0xb0] sm:$0xff]
        %v672 = vld [vmem:[#allocation11 + $0xb8] sm:$0xff]
        %v673 = vld [vmem:[#allocation11 + $0xc0] sm:$0xff]
        %v674 = vld [vmem:[#allocation11 + $0xc8] sm:$0xff]
        %v675 = vld [vmem:[#allocation11 + $0xd0] sm:$0xff]
        %v676 = vld [vmem:[#allocation11 + $0xd8] sm:$0xff]
        %v677 = vld [vmem:[#allocation11 + $0xe0] sm:$0xff]
        %v678 = vld [vmem:[#allocation11 + $0xe8] sm:$0xff]
        %v679 = vld [vmem:[#allocation11 + $0xf0] sm:$0xff]
        %v680 = vld [vmem:[#allocation11 + $0xf8] sm:$0xff]
        %v681 = vld [vmem:[#allocation11 + $0x100] sm:$0xff]
        %v682 = vld [vmem:[#allocation11 + $0x108] sm:$0xff]
        %v683 = vld [vmem:[#allocation11 + $0x110] sm:$0xff]
        %v684 = vld [vmem:[#allocation11 + $0x118] sm:$0xff]
        %v685 = vld [vmem:[#allocation11 + $0x120] sm:$0xff]
        %v686 = vld [vmem:[#allocation11 + $0x128] sm:$0xff]
        %v687 = vld [vmem:[#allocation11 + $0x130] sm:$0xff]
        %v688 = vld [vmem:[#allocation11 + $0x138] sm:$0xff]
        %v689 = vld [vmem:[#allocation11 + $0x140] sm:$0xff]
        %v690 = vld [vmem:[#allocation11 + $0x148] sm:$0xff]
        %v691 = vld [vmem:[#allocation11 + $0x150] sm:$0xff]
        %v692 = vld [vmem:[#allocation11 + $0x158] sm:$0xff]
        %v693 = vld [vmem:[#allocation11 + $0x160] sm:$0xff]
        %v694 = vld [vmem:[#allocation11 + $0x168] sm:$0xff]
        %v695 = vld [vmem:[#allocation11 + $0x170] sm:$0xff]
        %v696 = vld [vmem:[#allocation11 + $0x178] sm:$0xff]
        %v697 = vld [vmem:[%s3] sm:$0x3]
        %v699 = vlaneseq
        %v700 = vshrl.u32 %v699, 7
        %v701 = vsub.s32 0, %v700
        %v702 = vrot.slane %v697, %v701
        %v703 = vlaneseq
        %v704 = vshrl.u32 %v703, 7
        %v705 = vsub.s32 1, %v704
        %v706 = vrot.slane %v697, %v705
        %v773 = vunpack.c.l.b16 %v585
        %v774 = vunpack.c.h.b16 %v585
        %v775 = vunpack.c.l.b16 %v586
        %v776 = vunpack.c.l.b16 %v587
        %v777 = vunpack.c.h.b16 %v587
        %v778 = vunpack.c.l.b16 %v588
        %v779 = vunpack.c.l.b16 %v589
        %v780 = vunpack.c.h.b16 %v589
        %v781 = vunpack.c.l.b16 %v590
        %v782 = vunpack.c.l.b16 %v591
        %v783 = vunpack.c.h.b16 %v591
        %v784 = vunpack.c.l.b16 %v592
        %v785 = vunpack.c.l.b16 %v593
        %v786 = vunpack.c.h.b16 %v593
        %v787 = vunpack.c.l.b16 %v594
        %v788 = vunpack.c.l.b16 %v595
        %v789 = vunpack.c.h.b16 %v595
        %v790 = vunpack.c.l.b16 %v596
        %v791 = vunpack.c.l.b16 %v597
        %v792 = vunpack.c.h.b16 %v597
        %v793 = vunpack.c.l.b16 %v598
        %v794 = vunpack.c.l.b16 %v599
        %v795 = vunpack.c.h.b16 %v599
        %v796 = vunpack.c.l.b16 %v600
        %v797 = vunpack.c.l.b16 %v601
        %v798 = vunpack.c.h.b16 %v601
        %v799 = vunpack.c.l.b16 %v602
        %v800 = vunpack.c.l.b16 %v603
        %v801 = vunpack.c.h.b16 %v603
        %v802 = vunpack.c.l.b16 %v604
        %v803 = vunpack.c.l.b16 %v605
        %v804 = vunpack.c.h.b16 %v605
        %v805 = vunpack.c.l.b16 %v606
        %v806 = vunpack.c.l.b16 %v607
        %v807 = vunpack.c.h.b16 %v607
        %v808 = vunpack.c.l.b16 %v608
        %v809 = vunpack.c.l.b16 %v609
        %v810 = vunpack.c.h.b16 %v609
        %v811 = vunpack.c.l.b16 %v610
        %v812 = vunpack.c.l.b16 %v611
        %v813 = vunpack.c.h.b16 %v611
        %v814 = vunpack.c.l.b16 %v612
        %v815 = vunpack.c.l.b16 %v613
        %v816 = vunpack.c.h.b16 %v613
        %v817 = vunpack.c.l.b16 %v614
        %v818 = vunpack.c.l.b16 %v615
        %v819 = vunpack.c.h.b16 %v615
        %v820 = vunpack.c.l.b16 %v616
        %v821 = vunpack.c.l.b16 %v617
        %v822 = vunpack.c.h.b16 %v617
        %v823 = vunpack.c.l.b16 %v618
        %v824 = vunpack.c.l.b16 %v619
        %v825 = vunpack.c.h.b16 %v619
        %v826 = vunpack.c.l.b16 %v620
        %v827 = vunpack.c.l.b16 %v621
        %v828 = vunpack.c.h.b16 %v621
        %v829 = vunpack.c.l.b16 %v622
        %v830 = vunpack.c.l.b16 %v623
        %v831 = vunpack.c.h.b16 %v623
        %v832 = vunpack.c.l.b16 %v624
        %v833 = vunpack.c.l.b16 %v625
        %v834 = vunpack.c.h.b16 %v625
        %v835 = vunpack.c.l.b16 %v626
        %v836 = vunpack.c.l.b16 %v627
        %v837 = vunpack.c.h.b16 %v627
        %v838 = vunpack.c.l.b16 %v628
        %v839 = vunpack.c.l.b16 %v629
        %v840 = vunpack.c.h.b16 %v629
        %v841 = vunpack.c.l.b16 %v630
        %v842 = vunpack.c.l.b16 %v631
        %v843 = vunpack.c.h.b16 %v631
        %v844 = vunpack.c.l.b16 %v632
        %v845 = vunpack.c.l.b16 %v633
        %v846 = vunpack.c.h.b16 %v633
        %v847 = vunpack.c.l.b16 %v634
        %v848 = vunpack.c.l.b16 %v635
        %v849 = vunpack.c.h.b16 %v635
        %v850 = vunpack.c.l.b16 %v636
        %v851 = vunpack.c.l.b16 %v637
        %v852 = vunpack.c.h.b16 %v637
        %v853 = vunpack.c.l.b16 %v638
        %v854 = vunpack.c.l.b16 %v639
        %v855 = vunpack.c.h.b16 %v639
        %v856 = vunpack.c.l.b16 %v640
        %v857 = vunpack.c.l.b16 %v641
        %v858 = vunpack.c.h.b16 %v641
        %v859 = vunpack.c.l.b16 %v642
        %v860 = vunpack.c.l.b16 %v643
        %v861 = vunpack.c.h.b16 %v643
        %v862 = vunpack.c.l.b16 %v644
        %v863 = vunpack.c.l.b16 %v645
        %v864 = vunpack.c.h.b16 %v645
        %v865 = vunpack.c.l.b16 %v646
        %v866 = vunpack.c.l.b16 %v647
        %v867 = vunpack.c.h.b16 %v647
        %v868 = vunpack.c.l.b16 %v648
        %v869 = vpack.c.b16 %v776, %v773
        %v870 = vpack.c.b16 %v777, %v774
        %v871 = vpack.c.b16 %v778, %v775
        %v872 = vpack.c.b16 %v782, %v779
        %v873 = vpack.c.b16 %v783, %v780
        %v874 = vpack.c.b16 %v784, %v781
        %v875 = vpack.c.b16 %v788, %v785
        %v876 = vpack.c.b16 %v789, %v786
        %v877 = vpack.c.b16 %v790, %v787
        %v878 = vpack.c.b16 %v794, %v791
        %v879 = vpack.c.b16 %v795, %v792
        %v880 = vpack.c.b16 %v796, %v793
        %v881 = vpack.c.b16 %v800, %v797
        %v882 = vpack.c.b16 %v801, %v798
        %v883 = vpack.c.b16 %v802, %v799
        %v884 = vpack.c.b16 %v806, %v803
        %v885 = vpack.c.b16 %v807, %v804
        %v886 = vpack.c.b16 %v808, %v805
        %v887 = vpack.c.b16 %v812, %v809
        %v888 = vpack.c.b16 %v813, %v810
        %v889 = vpack.c.b16 %v814, %v811
        %v890 = vpack.c.b16 %v818, %v815
        %v891 = vpack.c.b16 %v819, %v816
        %v892 = vpack.c.b16 %v820, %v817
        %v893 = vpack.c.b16 %v824, %v821
        %v894 = vpack.c.b16 %v825, %v822
        %v895 = vpack.c.b16 %v826, %v823
        %v896 = vpack.c.b16 %v830, %v827
        %v897 = vpack.c.b16 %v831, %v828
        %v898 = vpack.c.b16 %v832, %v829
        %v899 = vpack.c.b16 %v836, %v833
        %v900 = vpack.c.b16 %v837, %v834
        %v901 = vpack.c.b16 %v838, %v835
        %v902 = vpack.c.b16 %v842, %v839
        %v903 = vpack.c.b16 %v843, %v840
        %v904 = vpack.c.b16 %v844, %v841
        %v905 = vpack.c.b16 %v848, %v845
        %v906 = vpack.c.b16 %v849, %v846
        %v907 = vpack.c.b16 %v850, %v847
        %v908 = vpack.c.b16 %v854, %v851
        %v909 = vpack.c.b16 %v855, %v852
        %v910 = vpack.c.b16 %v856, %v853
        %v911 = vpack.c.b16 %v860, %v857
        %v912 = vpack.c.b16 %v861, %v858
        %v913 = vpack.c.b16 %v862, %v859
        %v914 = vpack.c.b16 %v866, %v863
        %v915 = vpack.c.b16 %v867, %v864
        %v916 = vpack.c.b16 %v868, %v865
        %v1013 = vunpack.c.l.b16 %v649
        %v1014 = vunpack.c.h.b16 %v649
        %v1015 = vunpack.c.l.b16 %v650
        %v1016 = vunpack.c.h.b16 %v650
        %v1017 = vunpack.c.l.b16 %v651
        %v1018 = vunpack.c.h.b16 %v651
        %v1019 = vunpack.c.l.b16 %v652
        %v1020 = vunpack.c.h.b16 %v652
        %v1021 = vunpack.c.l.b16 %v653
        %v1022 = vunpack.c.h.b16 %v653
        %v1023 = vunpack.c.l.b16 %v654
        %v1024 = vunpack.c.h.b16 %v654
        %v1025 = vunpack.c.l.b16 %v655
        %v1026 = vunpack.c.h.b16 %v655
        %v1027 = vunpack.c.l.b16 %v656
        %v1028 = vunpack.c.h.b16 %v656
        %v1029 = vunpack.c.l.b16 %v657
        %v1030 = vunpack.c.h.b16 %v657
        %v1031 = vunpack.c.l.b16 %v658
        %v1032 = vunpack.c.h.b16 %v658
        %v1033 = vunpack.c.l.b16 %v659
        %v1034 = vunpack.c.h.b16 %v659
        %v1035 = vunpack.c.l.b16 %v660
        %v1036 = vunpack.c.h.b16 %v660
        %v1037 = vunpack.c.l.b16 %v661
        %v1038 = vunpack.c.h.b16 %v661
        %v1039 = vunpack.c.l.b16 %v662
        %v1040 = vunpack.c.h.b16 %v662
        %v1041 = vunpack.c.l.b16 %v663
        %v1042 = vunpack.c.h.b16 %v663
        %v1043 = vunpack.c.l.b16 %v664
        %v1044 = vunpack.c.h.b16 %v664
        %v1045 = vunpack.c.l.b16 %v665
        %v1046 = vunpack.c.h.b16 %v665
        %v1047 = vunpack.c.l.b16 %v666
        %v1048 = vunpack.c.h.b16 %v666
        %v1049 = vunpack.c.l.b16 %v667
        %v1050 = vunpack.c.h.b16 %v667
        %v1051 = vunpack.c.l.b16 %v668
        %v1052 = vunpack.c.h.b16 %v668
        %v1053 = vunpack.c.l.b16 %v669
        %v1054 = vunpack.c.h.b16 %v669
        %v1055 = vunpack.c.l.b16 %v670
        %v1056 = vunpack.c.h.b16 %v670
        %v1057 = vunpack.c.l.b16 %v671
        %v1058 = vunpack.c.h.b16 %v671
        %v1059 = vunpack.c.l.b16 %v672
        %v1060 = vunpack.c.h.b16 %v672
        %v1061 = vunpack.c.l.b16 %v673
        %v1062 = vunpack.c.h.b16 %v673
        %v1063 = vunpack.c.l.b16 %v674
        %v1064 = vunpack.c.h.b16 %v674
        %v1065 = vunpack.c.l.b16 %v675
        %v1066 = vunpack.c.h.b16 %v675
        %v1067 = vunpack.c.l.b16 %v676
        %v1068 = vunpack.c.h.b16 %v676
        %v1069 = vunpack.c.l.b16 %v677
        %v1070 = vunpack.c.h.b16 %v677
        %v1071 = vunpack.c.l.b16 %v678
        %v1072 = vunpack.c.h.b16 %v678
        %v1073 = vunpack.c.l.b16 %v679
        %v1074 = vunpack.c.h.b16 %v679
        %v1075 = vunpack.c.l.b16 %v680
        %v1076 = vunpack.c.h.b16 %v680
        %v1077 = vunpack.c.l.b16 %v681
        %v1078 = vunpack.c.h.b16 %v681
        %v1079 = vunpack.c.l.b16 %v682
        %v1080 = vunpack.c.h.b16 %v682
        %v1081 = vunpack.c.l.b16 %v683
        %v1082 = vunpack.c.h.b16 %v683
        %v1083 = vunpack.c.l.b16 %v684
        %v1084 = vunpack.c.h.b16 %v684
        %v1085 = vunpack.c.l.b16 %v685
        %v1086 = vunpack.c.h.b16 %v685
        %v1087 = vunpack.c.l.b16 %v686
        %v1088 = vunpack.c.h.b16 %v686
        %v1089 = vunpack.c.l.b16 %v687
        %v1090 = vunpack.c.h.b16 %v687
        %v1091 = vunpack.c.l.b16 %v688
        %v1092 = vunpack.c.h.b16 %v688
        %v1093 = vunpack.c.l.b16 %v689
        %v1094 = vunpack.c.h.b16 %v689
        %v1095 = vunpack.c.l.b16 %v690
        %v1096 = vunpack.c.h.b16 %v690
        %v1097 = vunpack.c.l.b16 %v691
        %v1098 = vunpack.c.h.b16 %v691
        %v1099 = vunpack.c.l.b16 %v692
        %v1100 = vunpack.c.h.b16 %v692
        %v1101 = vunpack.c.l.b16 %v693
        %v1102 = vunpack.c.h.b16 %v693
        %v1103 = vunpack.c.l.b16 %v694
        %v1104 = vunpack.c.h.b16 %v694
        %v1105 = vunpack.c.l.b16 %v695
        %v1106 = vunpack.c.h.b16 %v695
        %v1107 = vunpack.c.l.b16 %v696
        %v1108 = vunpack.c.h.b16 %v696
        %v1109 = vpack.c.b16 %v1015, %v1013
        %v1110 = vpack.c.b16 %v1016, %v1014
        %v1111 = vpack.c.b16 %v1019, %v1017
        %v1112 = vpack.c.b16 %v1020, %v1018
        %v1113 = vpack.c.b16 %v1023, %v1021
        %v1114 = vpack.c.b16 %v1024, %v1022
        %v1115 = vpack.c.b16 %v1027, %v1025
        %v1116 = vpack.c.b16 %v1028, %v1026
        %v1117 = vpack.c.b16 %v1031, %v1029
        %v1118 = vpack.c.b16 %v1032, %v1030
        %v1119 = vpack.c.b16 %v1035, %v1033
        %v1120 = vpack.c.b16 %v1036, %v1034
        %v1121 = vpack.c.b16 %v1039, %v1037
        %v1122 = vpack.c.b16 %v1040, %v1038
        %v1123 = vpack.c.b16 %v1043, %v1041
        %v1124 = vpack.c.b16 %v1044, %v1042
        %v1125 = vpack.c.b16 %v1047, %v1045
        %v1126 = vpack.c.b16 %v1048, %v1046
        %v1127 = vpack.c.b16 %v1051, %v1049
        %v1128 = vpack.c.b16 %v1052, %v1050
        %v1129 = vpack.c.b16 %v1055, %v1053
        %v1130 = vpack.c.b16 %v1056, %v1054
        %v1131 = vpack.c.b16 %v1059, %v1057
        %v1132 = vpack.c.b16 %v1060, %v1058
        %v1133 = vpack.c.b16 %v1063, %v1061
        %v1134 = vpack.c.b16 %v1064, %v1062
        %v1135 = vpack.c.b16 %v1067, %v1065
        %v1136 = vpack.c.b16 %v1068, %v1066
        %v1137 = vpack.c.b16 %v1071, %v1069
        %v1138 = vpack.c.b16 %v1072, %v1070
        %v1139 = vpack.c.b16 %v1075, %v1073
        %v1140 = vpack.c.b16 %v1076, %v1074
        %v1141 = vpack.c.b16 %v1079, %v1077
        %v1142 = vpack.c.b16 %v1080, %v1078
        %v1143 = vpack.c.b16 %v1083, %v1081
        %v1144 = vpack.c.b16 %v1084, %v1082
        %v1145 = vpack.c.b16 %v1087, %v1085
        %v1146 = vpack.c.b16 %v1088, %v1086
        %v1147 = vpack.c.b16 %v1091, %v1089
        %v1148 = vpack.c.b16 %v1092, %v1090
        %v1149 = vpack.c.b16 %v1095, %v1093
        %v1150 = vpack.c.b16 %v1096, %v1094
        %v1151 = vpack.c.b16 %v1099, %v1097
        %v1152 = vpack.c.b16 %v1100, %v1098
        %v1153 = vpack.c.b16 %v1103, %v1101
        %v1154 = vpack.c.b16 %v1104, %v1102
        %v1155 = vpack.c.b16 %v1107, %v1105
        %v1156 = vpack.c.b16 %v1108, %v1106
        %1205 = vmatprep.subr.bf16.mxu0 %v1110
        %1206 = vmatpush1.bf16.msra.mxu0 %v1109
        %1207 = vmatprep.subr.bf16.mxu0 %v1112
        %1208 = vmatpush1.bf16.msra.mxu0 %v1111
        %1209 = vmatprep.subr.bf16.mxu0 %v1114
        %1210 = vmatpush1.bf16.msra.mxu0 %v1113
        %1211 = vmatprep.subr.bf16.mxu0 %v1116
        %1212 = vmatpush1.bf16.msra.mxu0 %v1115
        %1213 = vmatprep.subr.bf16.mxu0 %v1118
        %1214 = vmatpush1.bf16.msra.mxu0 %v1117
        %1215 = vmatprep.subr.bf16.mxu0 %v1120
        %1216 = vmatpush1.bf16.msra.mxu0 %v1119
        %1217 = vmatprep.subr.bf16.mxu0 %v1122
        %1218 = vmatpush1.bf16.msra.mxu0 %v1121
        %1219 = vmatprep.subr.bf16.mxu0 %v1124
        %1220 = vmatpush1.bf16.msra.mxu0 %v1123
        %1221 = vmatprep.subr.bf16.mxu0 %v1126
        %1222 = vmatpush1.bf16.msra.mxu0 %v1125
        %1223 = vmatprep.subr.bf16.mxu0 %v1128
        %1224 = vmatpush1.bf16.msra.mxu0 %v1127
        %1225 = vmatprep.subr.bf16.mxu0 %v1130
        %1226 = vmatpush1.bf16.msra.mxu0 %v1129
        %1227 = vmatprep.subr.bf16.mxu0 %v1132
        %1228 = vmatpush1.bf16.msra.mxu0 %v1131
        %1229 = vmatprep.subr.bf16.mxu0 %v1134
        %1230 = vmatpush1.bf16.msra.mxu0 %v1133
        %1231 = vmatprep.subr.bf16.mxu0 %v1136
        %1232 = vmatpush1.bf16.msra.mxu0 %v1135
        %1233 = vmatprep.subr.bf16.mxu0 %v1138
        %1234 = vmatpush1.bf16.msra.mxu0 %v1137
        %1235 = vmatprep.subr.bf16.mxu0 %v1140
        %1236 = vmatpush1.bf16.msra.mxu0 %v1139
        %1237 = vmatprep.mubr.bf16.mxu0 %v870
        %1238 = vmatmul.mubr.bf16.gmra.mrb[0].mxu0 %v869
        %v1239 = vpop.f32.mrb[0].mxu0
        %v1240 = vadd.f32 %v702, %v1239
        %v1241 = vpop.f32.mrb[0].mxu0
        %v1242 = vadd.f32 %v706, %v1241
        %v1243 = vpop.f32.mrb[0].mxu0
        %v1244 = vadd.f32 %v702, %v1243
        %v1245 = vpop.f32.mrb[0].mxu0
        %v1246 = vadd.f32 %v706, %v1245
        %1247 = vmatprep.mubr.bf16.mxu0 %v873
        %1248 = vmatmul.mubr.bf16.gmra.mrb[0].mxu0 %v872
        %v1249 = vpop.f32.mrb[0].mxu0
        %v1250 = vadd.f32 %v702, %v1249
        %v1251 = vpop.f32.mrb[0].mxu0
        %v1252 = vadd.f32 %v706, %v1251
        %v1253 = vpop.f32.mrb[0].mxu0
        %v1254 = vadd.f32 %v702, %v1253
        %v1255 = vpop.f32.mrb[0].mxu0
        %v1256 = vadd.f32 %v706, %v1255
        %1257 = vmatprep.mubr.bf16.mxu0 %v876
        %1258 = vmatmul.mubr.bf16.gmra.mrb[0].mxu0 %v875
        %v1259 = vpop.f32.mrb[0].mxu0
        %v1260 = vadd.f32 %v702, %v1259
        %v1261 = vpop.f32.mrb[0].mxu0
        %v1262 = vadd.f32 %v706, %v1261
        %v1263 = vpop.f32.mrb[0].mxu0
        %v1264 = vadd.f32 %v702, %v1263
        %v1265 = vpop.f32.mrb[0].mxu0
        %v1266 = vadd.f32 %v706, %v1265
        %1267 = vmatprep.mubr.bf16.mxu0 %v879
        %1268 = vmatmul.mubr.bf16.gmra.mrb[0].mxu0 %v878
        %v1269 = vpop.f32.mrb[0].mxu0
        %v1270 = vadd.f32 %v702, %v1269
        %v1271 = vpop.f32.mrb[0].mxu0
        %v1272 = vadd.f32 %v706, %v1271
        %v1273 = vpop.f32.mrb[0].mxu0
        %v1274 = vadd.f32 %v702, %v1273
        %v1275 = vpop.f32.mrb[0].mxu0
        %v1276 = vadd.f32 %v706, %v1275
        %1277 = vmatprep.mubr.bf16.mxu0 %v882
        %1278 = vmatmul.mubr.bf16.gmra.mrb[0].mxu0 %v881
        %v1279 = vpop.f32.mrb[0].mxu0
        %v1280 = vadd.f32 %v702, %v1279
        %v1281 = vpop.f32.mrb[0].mxu0
        %v1282 = vadd.f32 %v706, %v1281
        %v1283 = vpop.f32.mrb[0].mxu0
        %v1284 = vadd.f32 %v702, %v1283
        %v1285 = vpop.f32.mrb[0].mxu0
        %v1286 = vadd.f32 %v706, %v1285
        %1287 = vmatprep.mubr.bf16.mxu0 %v885
        %1288 = vmatmul.mubr.bf16.gmra.mrb[0].mxu0 %v884
        %v1289 = vpop.f32.mrb[0].mxu0
        %v1290 = vadd.f32 %v702, %v1289
        %v1291 = vpop.f32.mrb[0].mxu0
        %v1292 = vadd.f32 %v706, %v1291
        %v1293 = vpop.f32.mrb[0].mxu0
        %v1294 = vadd.f32 %v702, %v1293
        %v1295 = vpop.f32.mrb[0].mxu0
        %v1296 = vadd.f32 %v706, %v1295
        %1297 = vmatprep.mubr.bf16.mxu0 %v888
        %1298 = vmatmul.mubr.bf16.gmra.mrb[0].mxu0 %v887
        %v1299 = vpop.f32.mrb[0].mxu0
        %v1300 = vadd.f32 %v702, %v1299
        %v1301 = vpop.f32.mrb[0].mxu0
        %v1302 = vadd.f32 %v706, %v1301
        %v1303 = vpop.f32.mrb[0].mxu0
        %v1304 = vadd.f32 %v702, %v1303
        %v1305 = vpop.f32.mrb[0].mxu0
        %v1306 = vadd.f32 %v706, %v1305
        %1307 = vmatprep.mubr.bf16.mxu0 %v891
        %1308 = vmatmul.mubr.bf16.gmra.mrb[0].mxu0 %v890
        %v1309 = vpop.f32.mrb[0].mxu0
        %v1310 = vadd.f32 %v702, %v1309
        %v1311 = vpop.f32.mrb[0].mxu0
        %v1312 = vadd.f32 %v706, %v1311
        %v1313 = vpop.f32.mrb[0].mxu0
        %v1314 = vadd.f32 %v702, %v1313
        %v1315 = vpop.f32.mrb[0].mxu0
        %v1316 = vadd.f32 %v706, %v1315
        %1317 = vmatprep.mubr.bf16.mxu0 %v894
        %1318 = vmatmul.mubr.bf16.gmra.mrb[0].mxu0 %v893
        %v1319 = vpop.f32.mrb[0].mxu0
        %v1320 = vadd.f32 %v702, %v1319
        %v1321 = vpop.f32.mrb[0].mxu0
        %v1322 = vadd.f32 %v706, %v1321
        %v1323 = vpop.f32.mrb[0].mxu0
        %v1324 = vadd.f32 %v702, %v1323
        %v1325 = vpop.f32.mrb[0].mxu0
        %v1326 = vadd.f32 %v706, %v1325
        %1327 = vmatprep.mubr.bf16.mxu0 %v897
        %1328 = vmatmul.mubr.bf16.gmra.mrb[0].mxu0 %v896
        %v1329 = vpop.f32.mrb[0].mxu0
        %v1330 = vadd.f32 %v702, %v1329
        %v1331 = vpop.f32.mrb[0].mxu0
        %v1332 = vadd.f32 %v706, %v1331
        %v1333 = vpop.f32.mrb[0].mxu0
        %v1334 = vadd.f32 %v702, %v1333
        %v1335 = vpop.f32.mrb[0].mxu0
        %v1336 = vadd.f32 %v706, %v1335
        %1337 = vmatprep.mubr.bf16.mxu0 %v900
        %1338 = vmatmul.mubr.bf16.gmra.mrb[0].mxu0 %v899
        %v1339 = vpop.f32.mrb[0].mxu0
        %v1340 = vadd.f32 %v702, %v1339
        %v1341 = vpop.f32.mrb[0].mxu0
        %v1342 = vadd.f32 %v706, %v1341
        %v1343 = vpop.f32.mrb[0].mxu0
        %v1344 = vadd.f32 %v702, %v1343
        %v1345 = vpop.f32.mrb[0].mxu0
        %v1346 = vadd.f32 %v706, %v1345
        %1347 = vmatprep.mubr.bf16.mxu0 %v903
        %1348 = vmatmul.mubr.bf16.gmra.mrb[0].mxu0 %v902
        %v1349 = vpop.f32.mrb[0].mxu0
        %v1350 = vadd.f32 %v702, %v1349
        %v1351 = vpop.f32.mrb[0].mxu0
        %v1352 = vadd.f32 %v706, %v1351
        %v1353 = vpop.f32.mrb[0].mxu0
        %v1354 = vadd.f32 %v702, %v1353
        %v1355 = vpop.f32.mrb[0].mxu0
        %v1356 = vadd.f32 %v706, %v1355
        %1357 = vmatprep.mubr.bf16.mxu0 %v906
        %1358 = vmatmul.mubr.bf16.gmra.mrb[0].mxu0 %v905
        %v1359 = vpop.f32.mrb[0].mxu0
        %v1360 = vadd.f32 %v702, %v1359
        %v1361 = vpop.f32.mrb[0].mxu0
        %v1362 = vadd.f32 %v706, %v1361
        %v1363 = vpop.f32.mrb[0].mxu0
        %v1364 = vadd.f32 %v702, %v1363
        %v1365 = vpop.f32.mrb[0].mxu0
        %v1366 = vadd.f32 %v706, %v1365
        %1367 = vmatprep.mubr.bf16.mxu0 %v909
        %1368 = vmatmul.mubr.bf16.gmra.mrb[0].mxu0 %v908
        %v1369 = vpop.f32.mrb[0].mxu0
        %v1370 = vadd.f32 %v702, %v1369
        %v1371 = vpop.f32.mrb[0].mxu0
        %v1372 = vadd.f32 %v706, %v1371
        %v1373 = vpop.f32.mrb[0].mxu0
        %v1374 = vadd.f32 %v702, %v1373
        %v1375 = vpop.f32.mrb[0].mxu0
        %v1376 = vadd.f32 %v706, %v1375
        %1377 = vmatprep.mubr.bf16.mxu0 %v912
        %1378 = vmatmul.mubr.bf16.gmra.mrb[0].mxu0 %v911
        %v1379 = vpop.f32.mrb[0].mxu0
        %v1380 = vadd.f32 %v702, %v1379
        %v1381 = vpop.f32.mrb[0].mxu0
        %v1382 = vadd.f32 %v706, %v1381
        %v1383 = vpop.f32.mrb[0].mxu0
        %v1384 = vadd.f32 %v702, %v1383
        %v1385 = vpop.f32.mrb[0].mxu0
        %v1386 = vadd.f32 %v706, %v1385
        %1387 = vmatprep.mubr.bf16.mxu0 %v915
        %1388 = vmatmul.mubr.bf16.gmra.mrb[0].mxu0 %v914
        %v1389 = vpop.f32.mrb[0].mxu0
        %v1390 = vadd.f32 %v702, %v1389
        %v1391 = vpop.f32.mrb[0].mxu0
        %v1392 = vadd.f32 %v706, %v1391
        %v1393 = vpop.f32.mrb[0].mxu0
        %v1394 = vadd.f32 %v702, %v1393
        %v1395 = vpop.f32.mrb[0].mxu0
        %v1396 = vadd.f32 %v706, %v1395
        %1397 = vdwg.mxu0
        %1398 = vmatprep.subr.bf16.mxu0 %v1142
        %1399 = vmatpush1.bf16.msra.mxu0 %v1141
        %1400 = vmatprep.subr.bf16.mxu0 %v1144
        %1401 = vmatpush1.bf16.msra.mxu0 %v1143
        %1402 = vmatprep.subr.bf16.mxu0 %v1146
        %1403 = vmatpush1.bf16.msra.mxu0 %v1145
        %1404 = vmatprep.subr.bf16.mxu0 %v1148
        %1405 = vmatpush1.bf16.msra.mxu0 %v1147
        %1406 = vmatprep.subr.bf16.mxu0 %v1150
        %1407 = vmatpush1.bf16.msra.mxu0 %v1149
        %1408 = vmatprep.subr.bf16.mxu0 %v1152
        %1409 = vmatpush1.bf16.msra.mxu0 %v1151
        %1410 = vmatprep.subr.bf16.mxu0 %v1154
        %1411 = vmatpush1.bf16.msra.mxu0 %v1153
        %1412 = vmatprep.subr.bf16.mxu0 %v1156
        %1413 = vmatpush1.bf16.msra.mxu0 %v1155
        %1414 = vmatprep.subr.bf16.mxu0 0
        %1415 = vmatpush1.bf16.msra.mxu0 0
        %1416 = vmatprep.subr.bf16.mxu0 0
        %1417 = vmatpush1.bf16.msra.mxu0 0
        %1418 = vmatprep.subr.bf16.mxu0 0
        %1419 = vmatpush1.bf16.msra.mxu0 0
        %1420 = vmatprep.subr.bf16.mxu0 0
        %1421 = vmatpush1.bf16.msra.mxu0 0
        %1422 = vmatprep.subr.bf16.mxu0 0
        %1423 = vmatpush1.bf16.msra.mxu0 0
        %1424 = vmatprep.subr.bf16.mxu0 0
        %1425 = vmatpush1.bf16.msra.mxu0 0
        %1426 = vmatprep.subr.bf16.mxu0 0
        %1427 = vmatpush1.bf16.msra.mxu0 0
        %1428 = vmatprep.subr.bf16.mxu0 0
        %1429 = vmatpush1.bf16.msra.mxu0 0
        %1430 = vmatprep.mubr.bf16.mxu0 0
        %1431 = vmatmul.mubr.bf16.gmra.mrb[0].mxu0 %v871
        %v1432 = vpop.f32.mrb[0].mxu0
        %v1433 = vadd.f32 %v1240, %v1432
        %v1434 = vpop.f32.mrb[0].mxu0
        %v1435 = vadd.f32 %v1242, %v1434
        %v1436 = vpop.f32.mrb[0].mxu0
        %v1437 = vadd.f32 %v1244, %v1436
        %v1438 = vpop.f32.mrb[0].mxu0
        %v1439 = vadd.f32 %v1246, %v1438
        %1440 = vmatprep.mubr.bf16.mxu0 0
        %1441 = vmatmul.mubr.bf16.gmra.mrb[0].mxu0 %v874
        %v1442 = vpop.f32.mrb[0].mxu0
        %v1443 = vadd.f32 %v1250, %v1442
        %v1444 = vpop.f32.mrb[0].mxu0
        %v1445 = vadd.f32 %v1252, %v1444
        %v1446 = vpop.f32.mrb[0].mxu0
        %v1447 = vadd.f32 %v1254, %v1446
        %v1448 = vpop.f32.mrb[0].mxu0
        %v1449 = vadd.f32 %v1256, %v1448
        %1450 = vmatprep.mubr.bf16.mxu0 0
        %1451 = vmatmul.mubr.bf16.gmra.mrb[0].mxu0 %v877
        %v1452 = vpop.f32.mrb[0].mxu0
        %v1453 = vadd.f32 %v1260, %v1452
        %v1454 = vpop.f32.mrb[0].mxu0
        %v1455 = vadd.f32 %v1262, %v1454
        %v1456 = vpop.f32.mrb[0].mxu0
        %v1457 = vadd.f32 %v1264, %v1456
        %v1458 = vpop.f32.mrb[0].mxu0
        %v1459 = vadd.f32 %v1266, %v1458
        %1460 = vmatprep.mubr.bf16.mxu0 0
        %1461 = vmatmul.mubr.bf16.gmra.mrb[0].mxu0 %v880
        %v1462 = vpop.f32.mrb[0].mxu0
        %v1463 = vadd.f32 %v1270, %v1462
        %v1464 = vpop.f32.mrb[0].mxu0
        %v1465 = vadd.f32 %v1272, %v1464
        %v1466 = vpop.f32.mrb[0].mxu0
        %v1467 = vadd.f32 %v1274, %v1466
        %v1468 = vpop.f32.mrb[0].mxu0
        %v1469 = vadd.f32 %v1276, %v1468
        %1470 = vmatprep.mubr.bf16.mxu0 0
        %1471 = vmatmul.mubr.bf16.gmra.mrb[0].mxu0 %v883
        %v1472 = vpop.f32.mrb[0].mxu0
        %v1473 = vadd.f32 %v1280, %v1472
        %v1474 = vpop.f32.mrb[0].mxu0
        %v1475 = vadd.f32 %v1282, %v1474
        %v1476 = vpop.f32.mrb[0].mxu0
        %v1477 = vadd.f32 %v1284, %v1476
        %v1478 = vpop.f32.mrb[0].mxu0
        %v1479 = vadd.f32 %v1286, %v1478
        %1480 = vmatprep.mubr.bf16.mxu0 0
        %1481 = vmatmul.mubr.bf16.gmra.mrb[0].mxu0 %v886
        %v1482 = vpop.f32.mrb[0].mxu0
        %v1483 = vadd.f32 %v1290, %v1482
        %v1484 = vpop.f32.mrb[0].mxu0
        %v1485 = vadd.f32 %v1292, %v1484
        %v1486 = vpop.f32.mrb[0].mxu0
        %v1487 = vadd.f32 %v1294, %v1486
        %v1488 = vpop.f32.mrb[0].mxu0
        %v1489 = vadd.f32 %v1296, %v1488
        %1490 = vmatprep.mubr.bf16.mxu0 0
        %1491 = vmatmul.mubr.bf16.gmra.mrb[0].mxu0 %v889
        %v1492 = vpop.f32.mrb[0].mxu0
        %v1493 = vadd.f32 %v1300, %v1492
        %v1494 = vpop.f32.mrb[0].mxu0
        %v1495 = vadd.f32 %v1302, %v1494
        %v1496 = vpop.f32.mrb[0].mxu0
        %v1497 = vadd.f32 %v1304, %v1496
        %v1498 = vpop.f32.mrb[0].mxu0
        %v1499 = vadd.f32 %v1306, %v1498
        %1500 = vmatprep.mubr.bf16.mxu0 0
        %1501 = vmatmul.mubr.bf16.gmra.mrb[0].mxu0 %v892
        %v1502 = vpop.f32.mrb[0].mxu0
        %v1503 = vadd.f32 %v1310, %v1502
        %v1504 = vpop.f32.mrb[0].mxu0
        %v1505 = vadd.f32 %v1312, %v1504
        %v1506 = vpop.f32.mrb[0].mxu0
        %v1507 = vadd.f32 %v1314, %v1506
        %v1508 = vpop.f32.mrb[0].mxu0
        %v1509 = vadd.f32 %v1316, %v1508
        %1510 = vmatprep.mubr.bf16.mxu0 0
        %1511 = vmatmul.mubr.bf16.gmra.mrb[0].mxu0 %v895
        %v1512 = vpop.f32.mrb[0].mxu0
        %v1513 = vadd.f32 %v1320, %v1512
        %v1514 = vpop.f32.mrb[0].mxu0
        %v1515 = vadd.f32 %v1322, %v1514
        %v1516 = vpop.f32.mrb[0].mxu0
        %v1517 = vadd.f32 %v1324, %v1516
        %v1518 = vpop.f32.mrb[0].mxu0
        %v1519 = vadd.f32 %v1326, %v1518
        %1520 = vmatprep.mubr.bf16.mxu0 0
        %1521 = vmatmul.mubr.bf16.gmra.mrb[0].mxu0 %v898
        %v1522 = vpop.f32.mrb[0].mxu0
        %v1523 = vadd.f32 %v1330, %v1522
        %v1524 = vpop.f32.mrb[0].mxu0
        %v1525 = vadd.f32 %v1332, %v1524
        %v1526 = vpop.f32.mrb[0].mxu0
        %v1527 = vadd.f32 %v1334, %v1526
        %v1528 = vpop.f32.mrb[0].mxu0
        %v1529 = vadd.f32 %v1336, %v1528
        %1530 = vmatprep.mubr.bf16.mxu0 0
        %1531 = vmatmul.mubr.bf16.gmra.mrb[0].mxu0 %v901
        %v1532 = vpop.f32.mrb[0].mxu0
        %v1533 = vadd.f32 %v1340, %v1532
        %v1534 = vpop.f32.mrb[0].mxu0
        %v1535 = vadd.f32 %v1342, %v1534
        %v1536 = vpop.f32.mrb[0].mxu0
        %v1537 = vadd.f32 %v1344, %v1536
        %v1538 = vpop.f32.mrb[0].mxu0
        %v1539 = vadd.f32 %v1346, %v1538
        %1540 = vmatprep.mubr.bf16.mxu0 0
        %1541 = vmatmul.mubr.bf16.gmra.mrb[0].mxu0 %v904
        %v1542 = vpop.f32.mrb[0].mxu0
        %v1543 = vadd.f32 %v1350, %v1542
        %v1544 = vpop.f32.mrb[0].mxu0
        %v1545 = vadd.f32 %v1352, %v1544
        %v1546 = vpop.f32.mrb[0].mxu0
        %v1547 = vadd.f32 %v1354, %v1546
        %v1548 = vpop.f32.mrb[0].mxu0
        %v1549 = vadd.f32 %v1356, %v1548
        %1550 = vmatprep.mubr.bf16.mxu0 0
        %1551 = vmatmul.mubr.bf16.gmra.mrb[0].mxu0 %v907
        %v1552 = vpop.f32.mrb[0].mxu0
        %v1553 = vadd.f32 %v1360, %v1552
        %v1554 = vpop.f32.mrb[0].mxu0
        %v1555 = vadd.f32 %v1362, %v1554
        %v1556 = vpop.f32.mrb[0].mxu0
        %v1557 = vadd.f32 %v1364, %v1556
        %v1558 = vpop.f32.mrb[0].mxu0
        %v1559 = vadd.f32 %v1366, %v1558
        %1560 = vmatprep.mubr.bf16.mxu0 0
        %1561 = vmatmul.mubr.bf16.gmra.mrb[0].mxu0 %v910
        %v1562 = vpop.f32.mrb[0].mxu0
        %v1563 = vadd.f32 %v1370, %v1562
        %v1564 = vpop.f32.mrb[0].mxu0
        %v1565 = vadd.f32 %v1372, %v1564
        %v1566 = vpop.f32.mrb[0].mxu0
        %v1567 = vadd.f32 %v1374, %v1566
        %v1568 = vpop.f32.mrb[0].mxu0
        %v1569 = vadd.f32 %v1376, %v1568
        %1570 = vmatprep.mubr.bf16.mxu0 0
        %1571 = vmatmul.mubr.bf16.gmra.mrb[0].mxu0 %v913
        %v1572 = vpop.f32.mrb[0].mxu0
        %v1573 = vadd.f32 %v1380, %v1572
        %v1574 = vpop.f32.mrb[0].mxu0
        %v1575 = vadd.f32 %v1382, %v1574
        %v1576 = vpop.f32.mrb[0].mxu0
        %v1577 = vadd.f32 %v1384, %v1576
        %v1578 = vpop.f32.mrb[0].mxu0
        %v1579 = vadd.f32 %v1386, %v1578
        %1580 = vmatprep.mubr.bf16.mxu0 0
        %1581 = vmatmul.mubr.bf16.gmra.mrb[0].mxu0 %v916
        %v1582 = vpop.f32.mrb[0].mxu0
        %v1583 = vadd.f32 %v1390, %v1582
        %v1584 = vpop.f32.mrb[0].mxu0
        %v1585 = vadd.f32 %v1392, %v1584
        %v1586 = vpop.f32.mrb[0].mxu0
        %v1587 = vadd.f32 %v1394, %v1586
        %v1588 = vpop.f32.mrb[0].mxu0
        %v1589 = vadd.f32 %v1396, %v1588
        %1590 = vdwg.mxu0
        %v1591 = vmax.f32 %v1433, 0.0
        %v1592 = vmax.f32 %v1435, 0.0
        %v1593 = vmax.f32 %v1437, 0.0
        %v1594 = vmax.f32 %v1439, 0.0
        %v1595 = vmax.f32 %v1443, 0.0
        %v1596 = vmax.f32 %v1445, 0.0
        %v1597 = vmax.f32 %v1447, 0.0
        %v1598 = vmax.f32 %v1449, 0.0
        %v1599 = vmax.f32 %v1453, 0.0
        %v1600 = vmax.f32 %v1455, 0.0
        %v1601 = vmax.f32 %v1457, 0.0
        %v1602 = vmax.f32 %v1459, 0.0
        %v1603 = vmax.f32 %v1463, 0.0
        %v1604 = vmax.f32 %v1465, 0.0
        %v1605 = vmax.f32 %v1467, 0.0
        %v1606 = vmax.f32 %v1469, 0.0
        %v1607 = vmax.f32 %v1473, 0.0
        %v1608 = vmax.f32 %v1475, 0.0
        %v1609 = vmax.f32 %v1477, 0.0
        %v1610 = vmax.f32 %v1479, 0.0
        %v1611 = vmax.f32 %v1483, 0.0
        %v1612 = vmax.f32 %v1485, 0.0
        %v1613 = vmax.f32 %v1487, 0.0
        %v1614 = vmax.f32 %v1489, 0.0
        %v1615 = vmax.f32 %v1493, 0.0
        %v1616 = vmax.f32 %v1495, 0.0
        %v1617 = vmax.f32 %v1497, 0.0
        %v1618 = vmax.f32 %v1499, 0.0
        %v1619 = vmax.f32 %v1503, 0.0
        %v1620 = vmax.f32 %v1505, 0.0
        %v1621 = vmax.f32 %v1507, 0.0
        %v1622 = vmax.f32 %v1509, 0.0
        %v1623 = vmax.f32 %v1513, 0.0
        %v1624 = vmax.f32 %v1515, 0.0
        %v1625 = vmax.f32 %v1517, 0.0
        %v1626 = vmax.f32 %v1519, 0.0
        %v1627 = vmax.f32 %v1523, 0.0
        %v1628 = vmax.f32 %v1525, 0.0
        %v1629 = vmax.f32 %v1527, 0.0
        %v1630 = vmax.f32 %v1529, 0.0
        %v1631 = vmax.f32 %v1533, 0.0
        %v1632 = vmax.f32 %v1535, 0.0
        %v1633 = vmax.f32 %v1537, 0.0
        %v1634 = vmax.f32 %v1539, 0.0
        %v1635 = vmax.f32 %v1543, 0.0
        %v1636 = vmax.f32 %v1545, 0.0
        %v1637 = vmax.f32 %v1547, 0.0
        %v1638 = vmax.f32 %v1549, 0.0
        %v1639 = vmax.f32 %v1553, 0.0
        %v1640 = vmax.f32 %v1555, 0.0
        %v1641 = vmax.f32 %v1557, 0.0
        %v1642 = vmax.f32 %v1559, 0.0
        %v1643 = vmax.f32 %v1563, 0.0
        %v1644 = vmax.f32 %v1565, 0.0
        %v1645 = vmax.f32 %v1567, 0.0
        %v1646 = vmax.f32 %v1569, 0.0
        %v1647 = vmax.f32 %v1573, 0.0
        %v1648 = vmax.f32 %v1575, 0.0
        %v1649 = vmax.f32 %v1577, 0.0
        %v1650 = vmax.f32 %v1579, 0.0
        %v1651 = vmax.f32 %v1583, 0.0
        %v1652 = vmax.f32 %v1585, 0.0
        %v1653 = vmax.f32 %v1587, 0.0
        %v1654 = vmax.f32 %v1589, 0.0
        %v1655 = vsel %vm546, 1, 0
        %v1656 = vsel %vm547, 1, 0
        %v1657 = vsel %vm548, 1, 0
        %v1658 = vsel %vm549, 1, 0
        %v1659 = vsel %vm550, 1, 0
        %v1660 = vsel %vm551, 1, 0
        %v1661 = vsel %vm552, 1, 0
        %v1662 = vsel %vm553, 1, 0
        %v1663 = vsel %vm554, 1, 0
        %v1664 = vsel %vm555, 1, 0
        %v1665 = vsel %vm556, 1, 0
        %v1666 = vsel %vm557, 1, 0
        %v1667 = vsel %vm558, 1, 0
        %v1668 = vsel %vm559, 1, 0
        %v1669 = vsel %vm560, 1, 0
        %v1670 = vsel %vm561, 1, 0
        %v1671 = vsel %vm562, 1, 0
        %v1672 = vsel %vm563, 1, 0
        %v1673 = vsel %vm564, 1, 0
        %v1674 = vsel %vm565, 1, 0
        %v1675 = vsel %vm566, 1, 0
        %v1676 = vsel %vm567, 1, 0
        %v1677 = vsel %vm568, 1, 0
        %v1678 = vsel %vm569, 1, 0
        %v1679 = vsel %vm570, 1, 0
        %v1680 = vsel %vm571, 1, 0
        %v1681 = vsel %vm572, 1, 0
        %v1682 = vsel %vm573, 1, 0
        %v1683 = vsel %vm574, 1, 0
        %v1684 = vsel %vm575, 1, 0
        %v1685 = vsel %vm576, 1, 0
        %v1686 = vsel %vm577, 1, 0
        %vm1687 = vcmp.eq.s32.totalorder %v1655, 1
        %vm1688 = vcmp.eq.s32.totalorder %v1656, 1
        %vm1689 = vcmp.eq.s32.totalorder %v1657, 1
        %vm1690 = vcmp.eq.s32.totalorder %v1658, 1
        %vm1691 = vcmp.eq.s32.totalorder %v1659, 1
        %vm1692 = vcmp.eq.s32.totalorder %v1660, 1
        %vm1693 = vcmp.eq.s32.totalorder %v1661, 1
        %vm1694 = vcmp.eq.s32.totalorder %v1662, 1
        %vm1695 = vcmp.eq.s32.totalorder %v1663, 1
        %vm1696 = vcmp.eq.s32.totalorder %v1664, 1
        %vm1697 = vcmp.eq.s32.totalorder %v1665, 1
        %vm1698 = vcmp.eq.s32.totalorder %v1666, 1
        %vm1699 = vcmp.eq.s32.totalorder %v1667, 1
        %vm1700 = vcmp.eq.s32.totalorder %v1668, 1
        %vm1701 = vcmp.eq.s32.totalorder %v1669, 1
        %vm1702 = vcmp.eq.s32.totalorder %v1670, 1
        %vm1703 = vcmp.eq.s32.totalorder %v1671, 1
        %vm1704 = vcmp.eq.s32.totalorder %v1672, 1
        %vm1705 = vcmp.eq.s32.totalorder %v1673, 1
        %vm1706 = vcmp.eq.s32.totalorder %v1674, 1
        %vm1707 = vcmp.eq.s32.totalorder %v1675, 1
        %vm1708 = vcmp.eq.s32.totalorder %v1676, 1
        %vm1709 = vcmp.eq.s32.totalorder %v1677, 1
        %vm1710 = vcmp.eq.s32.totalorder %v1678, 1
        %vm1711 = vcmp.eq.s32.totalorder %v1679, 1
        %vm1712 = vcmp.eq.s32.totalorder %v1680, 1
        %vm1713 = vcmp.eq.s32.totalorder %v1681, 1
        %vm1714 = vcmp.eq.s32.totalorder %v1682, 1
        %vm1715 = vcmp.eq.s32.totalorder %v1683, 1
        %vm1716 = vcmp.eq.s32.totalorder %v1684, 1
        %vm1717 = vcmp.eq.s32.totalorder %v1685, 1
        %vm1718 = vcmp.eq.s32.totalorder %v1686, 1
        %v1719 = vsel %vm1687, %v1591, 0.0
        %v1720 = vsel %vm1687, %v1592, 0.0
        %v1721 = vsel %vm1688, %v1593, 0.0
        %v1722 = vsel %vm1688, %v1594, 0.0
        %v1723 = vsel %vm1689, %v1595, 0.0
        %v1724 = vsel %vm1689, %v1596, 0.0
        %v1725 = vsel %vm1690, %v1597, 0.0
        %v1726 = vsel %vm1690, %v1598, 0.0
        %v1727 = vsel %vm1691, %v1599, 0.0
        %v1728 = vsel %vm1691, %v1600, 0.0
        %v1729 = vsel %vm1692, %v1601, 0.0
        %v1730 = vsel %vm1692, %v1602, 0.0
        %v1731 = vsel %vm1693, %v1603, 0.0
        %v1732 = vsel %vm1693, %v1604, 0.0
        %v1733 = vsel %vm1694, %v1605, 0.0
        %v1734 = vsel %vm1694, %v1606, 0.0
        %v1735 = vsel %vm1695, %v1607, 0.0
        %v1736 = vsel %vm1695, %v1608, 0.0
        %v1737 = vsel %vm1696, %v1609, 0.0
        %v1738 = vsel %vm1696, %v1610, 0.0
        %v1739 = vsel %vm1697, %v1611, 0.0
        %v1740 = vsel %vm1697, %v1612, 0.0
        %v1741 = vsel %vm1698, %v1613, 0.0
        %v1742 = vsel %vm1698, %v1614, 0.0
        %v1743 = vsel %vm1699, %v1615, 0.0
        %v1744 = vsel %vm1699, %v1616, 0.0
        %v1745 = vsel %vm1700, %v1617, 0.0
        %v1746 = vsel %vm1700, %v1618, 0.0
        %v1747 = vsel %vm1701, %v1619, 0.0
        %v1748 = vsel %vm1701, %v1620, 0.0
        %v1749 = vsel %vm1702, %v1621, 0.0
        %v1750 = vsel %vm1702, %v1622, 0.0
        %v1751 = vsel %vm1703, %v1623, 0.0
        %v1752 = vsel %vm1703, %v1624, 0.0
        %v1753 = vsel %vm1704, %v1625, 0.0
        %v1754 = vsel %vm1704, %v1626, 0.0
        %v1755 = vsel %vm1705, %v1627, 0.0
        %v1756 = vsel %vm1705, %v1628, 0.0
        %v1757 = vsel %vm1706, %v1629, 0.0
        %v1758 = vsel %vm1706, %v1630, 0.0
        %v1759 = vsel %vm1707, %v1631, 0.0
        %v1760 = vsel %vm1707, %v1632, 0.0
        %v1761 = vsel %vm1708, %v1633, 0.0
        %v1762 = vsel %vm1708, %v1634, 0.0
        %v1763 = vsel %vm1709, %v1635, 0.0
        %v1764 = vsel %vm1709, %v1636, 0.0
        %v1765 = vsel %vm1710, %v1637, 0.0
        %v1766 = vsel %vm1710, %v1638, 0.0
        %v1767 = vsel %vm1711, %v1639, 0.0
        %v1768 = vsel %vm1711, %v1640, 0.0
        %v1769 = vsel %vm1712, %v1641, 0.0
        %v1770 = vsel %vm1712, %v1642, 0.0
        %v1771 = vsel %vm1713, %v1643, 0.0
        %v1772 = vsel %vm1713, %v1644, 0.0
        %v1773 = vsel %vm1714, %v1645, 0.0
        %v1774 = vsel %vm1714, %v1646, 0.0
        %v1775 = vsel %vm1715, %v1647, 0.0
        %v1776 = vsel %vm1715, %v1648, 0.0
        %v1777 = vsel %vm1716, %v1649, 0.0
        %v1778 = vsel %vm1716, %v1650, 0.0
        %v1779 = vsel %vm1717, %v1651, 0.0
        %v1780 = vsel %vm1717, %v1652, 0.0
        %v1781 = vsel %vm1718, %v1653, 0.0
        %v1782 = vsel %vm1718, %v1654, 0.0
        %v1783 = vpack.c.bf16 %v1721, %v1719
        %v1784 = vpack.c.bf16 %v1722, %v1720
        %v1785 = vpack.c.bf16 %v1725, %v1723
        %v1786 = vpack.c.bf16 %v1726, %v1724
        %v1787 = vpack.c.bf16 %v1729, %v1727
        %v1788 = vpack.c.bf16 %v1730, %v1728
        %v1789 = vpack.c.bf16 %v1733, %v1731
        %v1790 = vpack.c.bf16 %v1734, %v1732
        %v1791 = vpack.c.bf16 %v1737, %v1735
        %v1792 = vpack.c.bf16 %v1738, %v1736
        %v1793 = vpack.c.bf16 %v1741, %v1739
        %v1794 = vpack.c.bf16 %v1742, %v1740
        %v1795 = vpack.c.bf16 %v1745, %v1743
        %v1796 = vpack.c.bf16 %v1746, %v1744
        %v1797 = vpack.c.bf16 %v1749, %v1747
        %v1798 = vpack.c.bf16 %v1750, %v1748
        %v1799 = vpack.c.bf16 %v1753, %v1751
        %v1800 = vpack.c.bf16 %v1754, %v1752
        %v1801 = vpack.c.bf16 %v1757, %v1755
        %v1802 = vpack.c.bf16 %v1758, %v1756
        %v1803 = vpack.c.bf16 %v1761, %v1759
        %v1804 = vpack.c.bf16 %v1762, %v1760
        %v1805 = vpack.c.bf16 %v1765, %v1763
        %v1806 = vpack.c.bf16 %v1766, %v1764
        %v1807 = vpack.c.bf16 %v1769, %v1767
        %v1808 = vpack.c.bf16 %v1770, %v1768
        %v1809 = vpack.c.bf16 %v1773, %v1771
        %v1810 = vpack.c.bf16 %v1774, %v1772
        %v1811 = vpack.c.bf16 %v1777, %v1775
        %v1812 = vpack.c.bf16 %v1778, %v1776
        %v1813 = vpack.c.bf16 %v1781, %v1779
        %v1814 = vpack.c.bf16 %v1782, %v1780
        %v1815 = vld [vmem:[%s4] sm:$0xff]
        %v1816 = vld [vmem:[%s4 + $0x8] sm:$0xff]
        %v1817 = vld [vmem:[%s4 + $0x10] sm:$0xff]
        %v1818 = vld [vmem:[%s4 + $0x18] sm:$0xff]
        %v1819 = vld [vmem:[%s4 + $0x20] sm:$0xff]
        %v1820 = vld [vmem:[%s4 + $0x28] sm:$0xff]
        %v1821 = vld [vmem:[%s4 + $0x30] sm:$0xff]
        %v1822 = vld [vmem:[%s4 + $0x38] sm:$0xff]
        %v1823 = vld [vmem:[%s4 + $0x40] sm:$0xff]
        %v1824 = vld [vmem:[%s4 + $0x48] sm:$0xff]
        %v1825 = vld [vmem:[%s4 + $0x50] sm:$0xff]
        %v1826 = vld [vmem:[%s4 + $0x58] sm:$0xff]
        %v1827 = vld [vmem:[%s4 + $0x60] sm:$0xff]
        %v1828 = vld [vmem:[%s4 + $0x68] sm:$0xff]
        %v1829 = vld [vmem:[%s4 + $0x70] sm:$0xff]
        %v1830 = vld [vmem:[%s4 + $0x78] sm:$0xff]
        %v1831 = vld [vmem:[%s4 + $0x80] sm:$0xff]
        %v1832 = vld [vmem:[%s4 + $0x88] sm:$0xff]
        %v1833 = vld [vmem:[%s4 + $0x90] sm:$0xff]
        %v1834 = vld [vmem:[%s4 + $0x98] sm:$0xff]
        %v1835 = vld [vmem:[%s4 + $0xa0] sm:$0xff]
        %v1836 = vld [vmem:[%s4 + $0xa8] sm:$0xff]
        %v1837 = vld [vmem:[%s4 + $0xb0] sm:$0xff]
        %v1838 = vld [vmem:[%s4 + $0xb8] sm:$0xff]
        %v1839 = vld [vmem:[%s4 + $0xc0] sm:$0xff]
        %v1840 = vld [vmem:[%s4 + $0xc8] sm:$0xff]
        %v1841 = vld [vmem:[%s4 + $0xd0] sm:$0xff]
        %v1842 = vld [vmem:[%s4 + $0xd8] sm:$0xff]
        %v1843 = vld [vmem:[%s4 + $0xe0] sm:$0xff]
        %v1844 = vld [vmem:[%s4 + $0xe8] sm:$0xff]
        %v1845 = vld [vmem:[%s4 + $0xf0] sm:$0xff]
        %v1846 = vld [vmem:[%s4 + $0xf8] sm:$0xff]
        %v1847 = vld [vmem:[%s5] sm:$0x3]
        %v1849 = vlaneseq
        %v1850 = vshrl.u32 %v1849, 7
        %v1851 = vsub.s32 0, %v1850
        %v1852 = vrot.slane %v1847, %v1851
        %v1853 = vlaneseq
        %v1854 = vshrl.u32 %v1853, 7
        %v1855 = vsub.s32 1, %v1854
        %v1856 = vrot.slane %v1847, %v1855
        %v1891 = vunpack.c.l.b16 %v1815
        %v1892 = vunpack.c.h.b16 %v1815
        %v1893 = vunpack.c.l.b16 %v1816
        %v1894 = vunpack.c.h.b16 %v1816
        %v1895 = vunpack.c.l.b16 %v1817
        %v1896 = vunpack.c.h.b16 %v1817
        %v1897 = vunpack.c.l.b16 %v1818
        %v1898 = vunpack.c.h.b16 %v1818
        %v1899 = vunpack.c.l.b16 %v1819
        %v1900 = vunpack.c.h.b16 %v1819
        %v1901 = vunpack.c.l.b16 %v1820
        %v1902 = vunpack.c.h.b16 %v1820
        %v1903 = vunpack.c.l.b16 %v1821
        %v1904 = vunpack.c.h.b16 %v1821
        %v1905 = vunpack.c.l.b16 %v1822
        %v1906 = vunpack.c.h.b16 %v1822
        %v1907 = vunpack.c.l.b16 %v1823
        %v1908 = vunpack.c.h.b16 %v1823
        %v1909 = vunpack.c.l.b16 %v1824
        %v1910 = vunpack.c.h.b16 %v1824
        %v1911 = vunpack.c.l.b16 %v1825
        %v1912 = vunpack.c.h.b16 %v1825
        %v1913 = vunpack.c.l.b16 %v1826
        %v1914 = vunpack.c.h.b16 %v1826
        %v1915 = vunpack.c.l.b16 %v1827
        %v1916 = vunpack.c.h.b16 %v1827
        %v1917 = vunpack.c.l.b16 %v1828
        %v1918 = vunpack.c.h.b16 %v1828
        %v1919 = vunpack.c.l.b16 %v1829
        %v1920 = vunpack.c.h.b16 %v1829
        %v1921 = vunpack.c.l.b16 %v1830
        %v1922 = vunpack.c.h.b16 %v1830
        %v1923 = vunpack.c.l.b16 %v1831
        %v1924 = vunpack.c.h.b16 %v1831
        %v1925 = vunpack.c.l.b16 %v1832
        %v1926 = vunpack.c.h.b16 %v1832
        %v1927 = vunpack.c.l.b16 %v1833
        %v1928 = vunpack.c.h.b16 %v1833
        %v1929 = vunpack.c.l.b16 %v1834
        %v1930 = vunpack.c.h.b16 %v1834
        %v1931 = vunpack.c.l.b16 %v1835
        %v1932 = vunpack.c.h.b16 %v1835
        %v1933 = vunpack.c.l.b16 %v1836
        %v1934 = vunpack.c.h.b16 %v1836
        %v1935 = vunpack.c.l.b16 %v1837
        %v1936 = vunpack.c.h.b16 %v1837
        %v1937 = vunpack.c.l.b16 %v1838
        %v1938 = vunpack.c.h.b16 %v1838
        %v1939 = vunpack.c.l.b16 %v1839
        %v1940 = vunpack.c.h.b16 %v1839
        %v1941 = vunpack.c.l.b16 %v1840
        %v1942 = vunpack.c.h.b16 %v1840
        %v1943 = vunpack.c.l.b16 %v1841
        %v1944 = vunpack.c.h.b16 %v1841
        %v1945 = vunpack.c.l.b16 %v1842
        %v1946 = vunpack.c.h.b16 %v1842
        %v1947 = vunpack.c.l.b16 %v1843
        %v1948 = vunpack.c.h.b16 %v1843
        %v1949 = vunpack.c.l.b16 %v1844
        %v1950 = vunpack.c.h.b16 %v1844
        %v1951 = vunpack.c.l.b16 %v1845
        %v1952 = vunpack.c.h.b16 %v1845
        %v1953 = vunpack.c.l.b16 %v1846
        %v1954 = vunpack.c.h.b16 %v1846
        %v1955 = vpack.c.b16 %v1893, %v1891
        %v1956 = vpack.c.b16 %v1894, %v1892
        %v1957 = vpack.c.b16 %v1897, %v1895
        %v1958 = vpack.c.b16 %v1898, %v1896
        %v1959 = vpack.c.b16 %v1901, %v1899
        %v1960 = vpack.c.b16 %v1902, %v1900
        %v1961 = vpack.c.b16 %v1905, %v1903
        %v1962 = vpack.c.b16 %v1906, %v1904
        %v1963 = vpack.c.b16 %v1909, %v1907
        %v1964 = vpack.c.b16 %v1910, %v1908
        %v1965 = vpack.c.b16 %v1913, %v1911
        %v1966 = vpack.c.b16 %v1914, %v1912
        %v1967 = vpack.c.b16 %v1917, %v1915
        %v1968 = vpack.c.b16 %v1918, %v1916
        %v1969 = vpack.c.b16 %v1921, %v1919
        %v1970 = vpack.c.b16 %v1922, %v1920
        %v1971 = vpack.c.b16 %v1925, %v1923
        %v1972 = vpack.c.b16 %v1926, %v1924
        %v1973 = vpack.c.b16 %v1929, %v1927
        %v1974 = vpack.c.b16 %v1930, %v1928
        %v1975 = vpack.c.b16 %v1933, %v1931
        %v1976 = vpack.c.b16 %v1934, %v1932
        %v1977 = vpack.c.b16 %v1937, %v1935
        %v1978 = vpack.c.b16 %v1938, %v1936
        %v1979 = vpack.c.b16 %v1941, %v1939
        %v1980 = vpack.c.b16 %v1942, %v1940
        %v1981 = vpack.c.b16 %v1945, %v1943
        %v1982 = vpack.c.b16 %v1946, %v1944
        %v1983 = vpack.c.b16 %v1949, %v1947
        %v1984 = vpack.c.b16 %v1950, %v1948
        %v1985 = vpack.c.b16 %v1953, %v1951
        %v1986 = vpack.c.b16 %v1954, %v1952
        %2019 = vmatprep.subr.bf16.mxu0 %v1956
        %2020 = vmatpush1.bf16.msra.mxu0 %v1955
        %2021 = vmatprep.subr.bf16.mxu0 %v1958
        %2022 = vmatpush1.bf16.msra.mxu0 %v1957
        %2023 = vmatprep.subr.bf16.mxu0 %v1960
        %2024 = vmatpush1.bf16.msra.mxu0 %v1959
        %2025 = vmatprep.subr.bf16.mxu0 %v1962
        %2026 = vmatpush1.bf16.msra.mxu0 %v1961
        %2027 = vmatprep.subr.bf16.mxu0 %v1964
        %2028 = vmatpush1.bf16.msra.mxu0 %v1963
        %2029 = vmatprep.subr.bf16.mxu0 %v1966
        %2030 = vmatpush1.bf16.msra.mxu0 %v1965
        %2031 = vmatprep.subr.bf16.mxu0 %v1968
        %2032 = vmatpush1.bf16.msra.mxu0 %v1967
        %2033 = vmatprep.subr.bf16.mxu0 %v1970
        %2034 = vmatpush1.bf16.msra.mxu0 %v1969
        %2035 = vmatprep.subr.bf16.mxu0 %v1972
        %2036 = vmatpush1.bf16.msra.mxu0 %v1971
        %2037 = vmatprep.subr.bf16.mxu0 %v1974
        %2038 = vmatpush1.bf16.msra.mxu0 %v1973
        %2039 = vmatprep.subr.bf16.mxu0 %v1976
        %2040 = vmatpush1.bf16.msra.mxu0 %v1975
        %2041 = vmatprep.subr.bf16.mxu0 %v1978
        %2042 = vmatpush1.bf16.msra.mxu0 %v1977
        %2043 = vmatprep.subr.bf16.mxu0 %v1980
        %2044 = vmatpush1.bf16.msra.mxu0 %v1979
        %2045 = vmatprep.subr.bf16.mxu0 %v1982
        %2046 = vmatpush1.bf16.msra.mxu0 %v1981
        %2047 = vmatprep.subr.bf16.mxu0 %v1984
        %2048 = vmatpush1.bf16.msra.mxu0 %v1983
        %2049 = vmatprep.subr.bf16.mxu0 %v1986
        %2050 = vmatpush1.bf16.msra.mxu0 %v1985
        %2051 = vmatprep.mubr.bf16.mxu0 %v1784
        %2052 = vmatmul.mubr.bf16.gmra.mrb[0].mxu0 %v1783
        %v2053 = vpop.f32.mrb[0].mxu0
        %v2054 = vadd.f32 %v1852, %v2053
        %v2055 = vpop.f32.mrb[0].mxu0
        %v2056 = vadd.f32 %v1856, %v2055
        %v2057 = vpop.f32.mrb[0].mxu0
        %v2058 = vadd.f32 %v1852, %v2057
        %v2059 = vpop.f32.mrb[0].mxu0
        %v2060 = vadd.f32 %v1856, %v2059
        %2061 = vmatprep.mubr.bf16.mxu0 %v1786
        %2062 = vmatmul.mubr.bf16.gmra.mrb[0].mxu0 %v1785
        %v2063 = vpop.f32.mrb[0].mxu0
        %v2064 = vadd.f32 %v1852, %v2063
        %v2065 = vpop.f32.mrb[0].mxu0
        %v2066 = vadd.f32 %v1856, %v2065
        %v2067 = vpop.f32.mrb[0].mxu0
        %v2068 = vadd.f32 %v1852, %v2067
        %v2069 = vpop.f32.mrb[0].mxu0
        %v2070 = vadd.f32 %v1856, %v2069
        %2071 = vmatprep.mubr.bf16.mxu0 %v1788
        %2072 = vmatmul.mubr.bf16.gmra.mrb[0].mxu0 %v1787
        %v2073 = vpop.f32.mrb[0].mxu0
        %v2074 = vadd.f32 %v1852, %v2073
        %v2075 = vpop.f32.mrb[0].mxu0
        %v2076 = vadd.f32 %v1856, %v2075
        %v2077 = vpop.f32.mrb[0].mxu0
        %v2078 = vadd.f32 %v1852, %v2077
        %v2079 = vpop.f32.mrb[0].mxu0
        %v2080 = vadd.f32 %v1856, %v2079
        %2081 = vmatprep.mubr.bf16.mxu0 %v1790
        %2082 = vmatmul.mubr.bf16.gmra.mrb[0].mxu0 %v1789
        %v2083 = vpop.f32.mrb[0].mxu0
        %v2084 = vadd.f32 %v1852, %v2083
        %v2085 = vpop.f32.mrb[0].mxu0
        %v2086 = vadd.f32 %v1856, %v2085
        %v2087 = vpop.f32.mrb[0].mxu0
        %v2088 = vadd.f32 %v1852, %v2087
        %v2089 = vpop.f32.mrb[0].mxu0
        %v2090 = vadd.f32 %v1856, %v2089
        %2091 = vmatprep.mubr.bf16.mxu0 %v1792
        %2092 = vmatmul.mubr.bf16.gmra.mrb[0].mxu0 %v1791
        %v2093 = vpop.f32.mrb[0].mxu0
        %v2094 = vadd.f32 %v1852, %v2093
        %v2095 = vpop.f32.mrb[0].mxu0
        %v2096 = vadd.f32 %v1856, %v2095
        %v2097 = vpop.f32.mrb[0].mxu0
        %v2098 = vadd.f32 %v1852, %v2097
        %v2099 = vpop.f32.mrb[0].mxu0
        %v2100 = vadd.f32 %v1856, %v2099
        %2101 = vmatprep.mubr.bf16.mxu0 %v1794
        %2102 = vmatmul.mubr.bf16.gmra.mrb[0].mxu0 %v1793
        %v2103 = vpop.f32.mrb[0].mxu0
        %v2104 = vadd.f32 %v1852, %v2103
        %v2105 = vpop.f32.mrb[0].mxu0
        %v2106 = vadd.f32 %v1856, %v2105
        %v2107 = vpop.f32.mrb[0].mxu0
        %v2108 = vadd.f32 %v1852, %v2107
        %v2109 = vpop.f32.mrb[0].mxu0
        %v2110 = vadd.f32 %v1856, %v2109
        %2111 = vmatprep.mubr.bf16.mxu0 %v1796
        %2112 = vmatmul.mubr.bf16.gmra.mrb[0].mxu0 %v1795
        %v2113 = vpop.f32.mrb[0].mxu0
        %v2114 = vadd.f32 %v1852, %v2113
        %v2115 = vpop.f32.mrb[0].mxu0
        %v2116 = vadd.f32 %v1856, %v2115
        %v2117 = vpop.f32.mrb[0].mxu0
        %v2118 = vadd.f32 %v1852, %v2117
        %v2119 = vpop.f32.mrb[0].mxu0
        %v2120 = vadd.f32 %v1856, %v2119
        %2121 = vmatprep.mubr.bf16.mxu0 %v1798
        %2122 = vmatmul.mubr.bf16.gmra.mrb[0].mxu0 %v1797
        %v2123 = vpop.f32.mrb[0].mxu0
        %v2124 = vadd.f32 %v1852, %v2123
        %v2125 = vpop.f32.mrb[0].mxu0
        %v2126 = vadd.f32 %v1856, %v2125
        %v2127 = vpop.f32.mrb[0].mxu0
        %v2128 = vadd.f32 %v1852, %v2127
        %v2129 = vpop.f32.mrb[0].mxu0
        %v2130 = vadd.f32 %v1856, %v2129
        %2131 = vmatprep.mubr.bf16.mxu0 %v1800
        %2132 = vmatmul.mubr.bf16.gmra.mrb[0].mxu0 %v1799
        %v2133 = vpop.f32.mrb[0].mxu0
        %v2134 = vadd.f32 %v1852, %v2133
        %v2135 = vpop.f32.mrb[0].mxu0
        %v2136 = vadd.f32 %v1856, %v2135
        %v2137 = vpop.f32.mrb[0].mxu0
        %v2138 = vadd.f32 %v1852, %v2137
        %v2139 = vpop.f32.mrb[0].mxu0
        %v2140 = vadd.f32 %v1856, %v2139
        %2141 = vmatprep.mubr.bf16.mxu0 %v1802
        %2142 = vmatmul.mubr.bf16.gmra.mrb[0].mxu0 %v1801
        %v2143 = vpop.f32.mrb[0].mxu0
        %v2144 = vadd.f32 %v1852, %v2143
        %v2145 = vpop.f32.mrb[0].mxu0
        %v2146 = vadd.f32 %v1856, %v2145
        %v2147 = vpop.f32.mrb[0].mxu0
        %v2148 = vadd.f32 %v1852, %v2147
        %v2149 = vpop.f32.mrb[0].mxu0
        %v2150 = vadd.f32 %v1856, %v2149
        %2151 = vmatprep.mubr.bf16.mxu0 %v1804
        %2152 = vmatmul.mubr.bf16.gmra.mrb[0].mxu0 %v1803
        %v2153 = vpop.f32.mrb[0].mxu0
        %v2154 = vadd.f32 %v1852, %v2153
        %v2155 = vpop.f32.mrb[0].mxu0
        %v2156 = vadd.f32 %v1856, %v2155
        %v2157 = vpop.f32.mrb[0].mxu0
        %v2158 = vadd.f32 %v1852, %v2157
        %v2159 = vpop.f32.mrb[0].mxu0
        %v2160 = vadd.f32 %v1856, %v2159
        %2161 = vmatprep.mubr.bf16.mxu0 %v1806
        %2162 = vmatmul.mubr.bf16.gmra.mrb[0].mxu0 %v1805
        %v2163 = vpop.f32.mrb[0].mxu0
        %v2164 = vadd.f32 %v1852, %v2163
        %v2165 = vpop.f32.mrb[0].mxu0
        %v2166 = vadd.f32 %v1856, %v2165
        %v2167 = vpop.f32.mrb[0].mxu0
        %v2168 = vadd.f32 %v1852, %v2167
        %v2169 = vpop.f32.mrb[0].mxu0
        %v2170 = vadd.f32 %v1856, %v2169
        %2171 = vmatprep.mubr.bf16.mxu0 %v1808
        %2172 = vmatmul.mubr.bf16.gmra.mrb[0].mxu0 %v1807
        %v2173 = vpop.f32.mrb[0].mxu0
        %v2174 = vadd.f32 %v1852, %v2173
        %v2175 = vpop.f32.mrb[0].mxu0
        %v2176 = vadd.f32 %v1856, %v2175
        %v2177 = vpop.f32.mrb[0].mxu0
        %v2178 = vadd.f32 %v1852, %v2177
        %v2179 = vpop.f32.mrb[0].mxu0
        %v2180 = vadd.f32 %v1856, %v2179
        %2181 = vmatprep.mubr.bf16.mxu0 %v1810
        %2182 = vmatmul.mubr.bf16.gmra.mrb[0].mxu0 %v1809
        %v2183 = vpop.f32.mrb[0].mxu0
        %v2184 = vadd.f32 %v1852, %v2183
        %v2185 = vpop.f32.mrb[0].mxu0
        %v2186 = vadd.f32 %v1856, %v2185
        %v2187 = vpop.f32.mrb[0].mxu0
        %v2188 = vadd.f32 %v1852, %v2187
        %v2189 = vpop.f32.mrb[0].mxu0
        %v2190 = vadd.f32 %v1856, %v2189
        %2191 = vmatprep.mubr.bf16.mxu0 %v1812
        %2192 = vmatmul.mubr.bf16.gmra.mrb[0].mxu0 %v1811
        %v2193 = vpop.f32.mrb[0].mxu0
        %v2194 = vadd.f32 %v1852, %v2193
        %v2195 = vpop.f32.mrb[0].mxu0
        %v2196 = vadd.f32 %v1856, %v2195
        %v2197 = vpop.f32.mrb[0].mxu0
        %v2198 = vadd.f32 %v1852, %v2197
        %v2199 = vpop.f32.mrb[0].mxu0
        %v2200 = vadd.f32 %v1856, %v2199
        %2201 = vmatprep.mubr.bf16.mxu0 %v1814
        %2202 = vmatmul.mubr.bf16.gmra.mrb[0].mxu0 %v1813
        %v2203 = vpop.f32.mrb[0].mxu0
        %v2204 = vadd.f32 %v1852, %v2203
        %v2205 = vpop.f32.mrb[0].mxu0
        %v2206 = vadd.f32 %v1856, %v2205
        %v2207 = vpop.f32.mrb[0].mxu0
        %v2208 = vadd.f32 %v1852, %v2207
        %v2209 = vpop.f32.mrb[0].mxu0
        %v2210 = vadd.f32 %v1856, %v2209
        %2211 = vdwg.mxu0
        %v2212 = vtanh.pop %v2054
        %v2213 = vtanh.pop %v2058
        %v2214 = vtanh.pop %v2064
        %v2215 = vtanh.pop %v2068
        %v2216 = vtanh.pop %v2074
        %v2217 = vtanh.pop %v2078
        %v2218 = vtanh.pop %v2084
        %v2219 = vtanh.pop %v2088
        %v2220 = vtanh.pop %v2094
        %v2221 = vtanh.pop %v2098
        %v2222 = vtanh.pop %v2104
        %v2223 = vtanh.pop %v2108
        %v2224 = vtanh.pop %v2114
        %v2225 = vtanh.pop %v2118
        %v2226 = vtanh.pop %v2124
        %v2227 = vtanh.pop %v2128
        %v2228 = vtanh.pop %v2134
        %v2229 = vtanh.pop %v2138
        %v2230 = vtanh.pop %v2144
        %v2231 = vtanh.pop %v2148
        %v2232 = vtanh.pop %v2154
        %v2233 = vtanh.pop %v2158
        %v2234 = vtanh.pop %v2164
        %v2235 = vtanh.pop %v2168
        %v2236 = vtanh.pop %v2174
        %v2237 = vtanh.pop %v2178
        %v2238 = vtanh.pop %v2184
        %v2239 = vtanh.pop %v2188
        %v2240 = vtanh.pop %v2194
        %v2241 = vtanh.pop %v2198
        %v2242 = vtanh.pop %v2204
        %v2243 = vtanh.pop %v2208
        %v2244 = vxor.u32 %v2056, 2147483648
        %v2245 = vxor.u32 %v2060, 2147483648
        %v2246 = vxor.u32 %v2066, 2147483648
        %v2247 = vxor.u32 %v2070, 2147483648
        %v2248 = vxor.u32 %v2076, 2147483648
        %v2249 = vxor.u32 %v2080, 2147483648
        %v2250 = vxor.u32 %v2086, 2147483648
        %v2251 = vxor.u32 %v2090, 2147483648
        %v2252 = vxor.u32 %v2096, 2147483648
        %v2253 = vxor.u32 %v2100, 2147483648
        %v2254 = vxor.u32 %v2106, 2147483648
        %v2255 = vxor.u32 %v2110, 2147483648
        %v2256 = vxor.u32 %v2116, 2147483648
        %v2257 = vxor.u32 %v2120, 2147483648
        %v2258 = vxor.u32 %v2126, 2147483648
        %v2259 = vxor.u32 %v2130, 2147483648
        %v2260 = vxor.u32 %v2136, 2147483648
        %v2261 = vxor.u32 %v2140, 2147483648
        %v2262 = vxor.u32 %v2146, 2147483648
        %v2263 = vxor.u32 %v2150, 2147483648
        %v2264 = vxor.u32 %v2156, 2147483648
        %v2265 = vxor.u32 %v2160, 2147483648
        %v2266 = vxor.u32 %v2166, 2147483648
        %v2267 = vxor.u32 %v2170, 2147483648
        %v2268 = vxor.u32 %v2176, 2147483648
        %v2269 = vxor.u32 %v2180, 2147483648
        %v2270 = vxor.u32 %v2186, 2147483648
        %v2271 = vxor.u32 %v2190, 2147483648
        %v2272 = vxor.u32 %v2196, 2147483648
        %v2273 = vxor.u32 %v2200, 2147483648
        %v2274 = vxor.u32 %v2206, 2147483648
        %v2275 = vxor.u32 %v2210, 2147483648
        %v2276 = vmul.f32 %v2244, 1.442695
        %v2277 = vpow.pop %v2276
        %v2278 = vmul.f32 %v2245, 1.442695
        %v2279 = vpow.pop %v2278
        %v2280 = vmul.f32 %v2246, 1.442695
        %v2281 = vpow.pop %v2280
        %v2282 = vmul.f32 %v2247, 1.442695
        %v2283 = vpow.pop %v2282
        %v2284 = vmul.f32 %v2248, 1.442695
        %v2285 = vpow.pop %v2284
        %v2286 = vmul.f32 %v2249, 1.442695
        %v2287 = vpow.pop %v2286
        %v2288 = vmul.f32 %v2250, 1.442695
        %v2289 = vpow.pop %v2288
        %v2290 = vmul.f32 %v2251, 1.442695
        %v2291 = vpow.pop %v2290
        %v2292 = vmul.f32 %v2252, 1.442695
        %v2293 = vpow.pop %v2292
        %v2294 = vmul.f32 %v2253, 1.442695
        %v2295 = vpow.pop %v2294
        %v2296 = vmul.f32 %v2254, 1.442695
        %v2297 = vpow.pop %v2296
        %v2298 = vmul.f32 %v2255, 1.442695
        %v2299 = vpow.pop %v2298
        %v2300 = vmul.f32 %v2256, 1.442695
        %v2301 = vpow.pop %v2300
        %v2302 = vmul.f32 %v2257, 1.442695
        %v2303 = vpow.pop %v2302
        %v2304 = vmul.f32 %v2258, 1.442695
        %v2305 = vpow.pop %v2304
        %v2306 = vmul.f32 %v2259, 1.442695
        %v2307 = vpow.pop %v2306
        %v2308 = vmul.f32 %v2260, 1.442695
        %v2309 = vpow.pop %v2308
        %v2310 = vmul.f32 %v2261, 1.442695
        %v2311 = vpow.pop %v2310
        %v2312 = vmul.f32 %v2262, 1.442695
        %v2313 = vpow.pop %v2312
        %v2314 = vmul.f32 %v2263, 1.442695
        %v2315 = vpow.pop %v2314
        %v2316 = vmul.f32 %v2264, 1.442695
        %v2317 = vpow.pop %v2316
        %v2318 = vmul.f32 %v2265, 1.442695
        %v2319 = vpow.pop %v2318
        %v2320 = vmul.f32 %v2266, 1.442695
        %v2321 = vpow.pop %v2320
        %v2322 = vmul.f32 %v2267, 1.442695
        %v2323 = vpow.pop %v2322
        %v2324 = vmul.f32 %v2268, 1.442695
        %v2325 = vpow.pop %v2324
        %v2326 = vmul.f32 %v2269, 1.442695
        %v2327 = vpow.pop %v2326
        %v2328 = vmul.f32 %v2270, 1.442695
        %v2329 = vpow.pop %v2328
        %v2330 = vmul.f32 %v2271, 1.442695
        %v2331 = vpow.pop %v2330
        %v2332 = vmul.f32 %v2272, 1.442695
        %v2333 = vpow.pop %v2332
        %v2334 = vmul.f32 %v2273, 1.442695
        %v2335 = vpow.pop %v2334
        %v2336 = vmul.f32 %v2274, 1.442695
        %v2337 = vpow.pop %v2336
        %v2338 = vmul.f32 %v2275, 1.442695
        %v2339 = vpow.pop %v2338
        %v2340 = vadd.f32 %v2277, 1.0
        %v2341 = vadd.f32 %v2279, 1.0
        %v2342 = vadd.f32 %v2281, 1.0
        %v2343 = vadd.f32 %v2283, 1.0
        %v2344 = vadd.f32 %v2285, 1.0
        %v2345 = vadd.f32 %v2287, 1.0
        %v2346 = vadd.f32 %v2289, 1.0
        %v2347 = vadd.f32 %v2291, 1.0
        %v2348 = vadd.f32 %v2293, 1.0
        %v2349 = vadd.f32 %v2295, 1.0
        %v2350 = vadd.f32 %v2297, 1.0
        %v2351 = vadd.f32 %v2299, 1.0
        %v2352 = vadd.f32 %v2301, 1.0
        %v2353 = vadd.f32 %v2303, 1.0
        %v2354 = vadd.f32 %v2305, 1.0
        %v2355 = vadd.f32 %v2307, 1.0
        %v2356 = vadd.f32 %v2309, 1.0
        %v2357 = vadd.f32 %v2311, 1.0
        %v2358 = vadd.f32 %v2313, 1.0
        %v2359 = vadd.f32 %v2315, 1.0
        %v2360 = vadd.f32 %v2317, 1.0
        %v2361 = vadd.f32 %v2319, 1.0
        %v2362 = vadd.f32 %v2321, 1.0
        %v2363 = vadd.f32 %v2323, 1.0
        %v2364 = vadd.f32 %v2325, 1.0
        %v2365 = vadd.f32 %v2327, 1.0
        %v2366 = vadd.f32 %v2329, 1.0
        %v2367 = vadd.f32 %v2331, 1.0
        %v2368 = vadd.f32 %v2333, 1.0
        %v2369 = vadd.f32 %v2335, 1.0
        %v2370 = vadd.f32 %v2337, 1.0
        %v2371 = vadd.f32 %v2339, 1.0
        %v2372 = vrcp.pop %v2340
        %v2373 = vmul.f32 1.0, %v2372
        %v2374 = vrcp.pop %v2341
        %v2375 = vmul.f32 1.0, %v2374
        %v2376 = vrcp.pop %v2342
        %v2377 = vmul.f32 1.0, %v2376
        %v2378 = vrcp.pop %v2343
        %v2379 = vmul.f32 1.0, %v2378
        %v2380 = vrcp.pop %v2344
        %v2381 = vmul.f32 1.0, %v2380
        %v2382 = vrcp.pop %v2345
        %v2383 = vmul.f32 1.0, %v2382
        %v2384 = vrcp.pop %v2346
        %v2385 = vmul.f32 1.0, %v2384
        %v2386 = vrcp.pop %v2347
        %v2387 = vmul.f32 1.0, %v2386
        %v2388 = vrcp.pop %v2348
        %v2389 = vmul.f32 1.0, %v2388
        %v2390 = vrcp.pop %v2349
        %v2391 = vmul.f32 1.0, %v2390
        %v2392 = vrcp.pop %v2350
        %v2393 = vmul.f32 1.0, %v2392
        %v2394 = vrcp.pop %v2351
        %v2395 = vmul.f32 1.0, %v2394
        %v2396 = vrcp.pop %v2352
        %v2397 = vmul.f32 1.0, %v2396
        %v2398 = vrcp.pop %v2353
        %v2399 = vmul.f32 1.0, %v2398
        %v2400 = vrcp.pop %v2354
        %v2401 = vmul.f32 1.0, %v2400
        %v2402 = vrcp.pop %v2355
        %v2403 = vmul.f32 1.0, %v2402
        %v2404 = vrcp.pop %v2356
        %v2405 = vmul.f32 1.0, %v2404
        %v2406 = vrcp.pop %v2357
        %v2407 = vmul.f32 1.0, %v2406
        %v2408 = vrcp.pop %v2358
        %v2409 = vmul.f32 1.0, %v2408
        %v2410 = vrcp.pop %v2359
        %v2411 = vmul.f32 1.0, %v2410
        %v2412 = vrcp.pop %v2360
        %v2413 = vmul.f32 1.0, %v2412
        %v2414 = vrcp.pop %v2361
        %v2415 = vmul.f32 1.0, %v2414
        %v2416 = vrcp.pop %v2362
        %v2417 = vmul.f32 1.0, %v2416
        %v2418 = vrcp.pop %v2363
        %v2419 = vmul.f32 1.0, %v2418
        %v2420 = vrcp.pop %v2364
        %v2421 = vmul.f32 1.0, %v2420
        %v2422 = vrcp.pop %v2365
        %v2423 = vmul.f32 1.0, %v2422
        %v2424 = vrcp.pop %v2366
        %v2425 = vmul.f32 1.0, %v2424
        %v2426 = vrcp.pop %v2367
        %v2427 = vmul.f32 1.0, %v2426
        %v2428 = vrcp.pop %v2368
        %v2429 = vmul.f32 1.0, %v2428
        %v2430 = vrcp.pop %v2369
        %v2431 = vmul.f32 1.0, %v2430
        %v2432 = vrcp.pop %v2370
        %v2433 = vmul.f32 1.0, %v2432
        %v2434 = vrcp.pop %v2371
        %v2435 = vmul.f32 1.0, %v2434
        %v2436 = vmul.f32 %v2212, %v2373
        %v2437 = vmul.f32 %v2213, %v2375
        %v2438 = vmul.f32 %v2214, %v2377
        %v2439 = vmul.f32 %v2215, %v2379
        %v2440 = vmul.f32 %v2216, %v2381
        %v2441 = vmul.f32 %v2217, %v2383
        %v2442 = vmul.f32 %v2218, %v2385
        %v2443 = vmul.f32 %v2219, %v2387
        %v2444 = vmul.f32 %v2220, %v2389
        %v2445 = vmul.f32 %v2221, %v2391
        %v2446 = vmul.f32 %v2222, %v2393
        %v2447 = vmul.f32 %v2223, %v2395
        %v2448 = vmul.f32 %v2224, %v2397
        %v2449 = vmul.f32 %v2225, %v2399
        %v2450 = vmul.f32 %v2226, %v2401
        %v2451 = vmul.f32 %v2227, %v2403
        %v2452 = vmul.f32 %v2228, %v2405
        %v2453 = vmul.f32 %v2229, %v2407
        %v2454 = vmul.f32 %v2230, %v2409
        %v2455 = vmul.f32 %v2231, %v2411
        %v2456 = vmul.f32 %v2232, %v2413
        %v2457 = vmul.f32 %v2233, %v2415
        %v2458 = vmul.f32 %v2234, %v2417
        %v2459 = vmul.f32 %v2235, %v2419
        %v2460 = vmul.f32 %v2236, %v2421
        %v2461 = vmul.f32 %v2237, %v2423
        %v2462 = vmul.f32 %v2238, %v2425
        %v2463 = vmul.f32 %v2239, %v2427
        %v2464 = vmul.f32 %v2240, %v2429
        %v2465 = vmul.f32 %v2241, %v2431
        %v2466 = vmul.f32 %v2242, %v2433
        %v2467 = vmul.f32 %v2243, %v2435
        %v2468 = vld [vmem:[%s6] sm:$0x1]
        %v2469 = vld [vmem:[#allocation7] sm:$0x1]
        %2471 = vset.pattern.permute.xlu0 0
        %2472 = vperm.xlu0 %2471, %v2469
        %v2473 = vpop.permute.xlu0 %2472
        %v2475 = vlaneseq
        %v2476 = vshrl.u32 %v2475, 7
        %v2477 = vsub.s32 0, %v2476
        %v2478 = vrot.slane %v2473, %v2477
        %2479 = vmatprep.subr.mxu0 0.0
        %2480 = vmatpush1.xpose.msra.mxu0 %v2436
        %2481 = vmatprep.subr.mxu0 0.0
        %2482 = vmatpush1.xpose.msra.mxu0 %v2437
        %2483 = vmatprep.subr.mxu0 0.0
        %2484 = vmatpush1.xpose.msra.mxu0 %v2438
        %2485 = vmatprep.subr.mxu0 0.0
        %2486 = vmatpush1.xpose.msra.mxu0 %v2439
        %2487 = vmatprep.subr.mxu0 0.0
        %2488 = vmatpush1.xpose.msra.mxu0 %v2440
        %2489 = vmatprep.subr.mxu0 0.0
        %2490 = vmatpush1.xpose.msra.mxu0 %v2441
        %2491 = vmatprep.subr.mxu0 0.0
        %2492 = vmatpush1.xpose.msra.mxu0 %v2442
        %2493 = vmatprep.subr.mxu0 0.0
        %2494 = vmatpush1.xpose.msra.mxu0 %v2443
        %2495 = vmatprep.subr.mxu0 0.0
        %2496 = vmatpush1.xpose.msra.mxu0 %v2444
        %2497 = vmatprep.subr.mxu0 0.0
        %2498 = vmatpush1.xpose.msra.mxu0 %v2445
        %2499 = vmatprep.subr.mxu0 0.0
        %2500 = vmatpush1.xpose.msra.mxu0 %v2446
        %2501 = vmatprep.subr.mxu0 0.0
        %2502 = vmatpush1.xpose.msra.mxu0 %v2447
        %2503 = vmatprep.subr.mxu0 0.0
        %2504 = vmatpush1.xpose.msra.mxu0 %v2448
        %2505 = vmatprep.subr.mxu0 0.0
        %2506 = vmatpush1.xpose.msra.mxu0 %v2449
        %2507 = vmatprep.subr.mxu0 0.0
        %2508 = vmatpush1.xpose.msra.mxu0 %v2450
        %2509 = vmatprep.subr.mxu0 0.0
        %2510 = vmatpush1.xpose.msra.mxu0 %v2451
        %2511 = vmatprep.subr.mxu0 0.0
        %2512 = vmatpush1.xpose.msra.mxu0 %v2452
        %2513 = vmatprep.subr.mxu0 0.0
        %2514 = vmatpush1.xpose.msra.mxu0 %v2453
        %2515 = vmatprep.subr.mxu0 0.0
        %2516 = vmatpush1.xpose.msra.mxu0 %v2454
        %2517 = vmatprep.subr.mxu0 0.0
        %2518 = vmatpush1.xpose.msra.mxu0 %v2455
        %2519 = vmatprep.subr.mxu0 0.0
        %2520 = vmatpush1.xpose.msra.mxu0 %v2456
        %2521 = vmatprep.subr.mxu0 0.0
        %2522 = vmatpush1.xpose.msra.mxu0 %v2457
        %2523 = vmatprep.subr.mxu0 0.0
        %2524 = vmatpush1.xpose.msra.mxu0 %v2458
        %2525 = vmatprep.subr.mxu0 0.0
        %2526 = vmatpush1.xpose.msra.mxu0 %v2459
        %2527 = vmatprep.subr.mxu0 0.0
        %2528 = vmatpush1.xpose.msra.mxu0 %v2460
        %2529 = vmatprep.subr.mxu0 0.0
        %2530 = vmatpush1.xpose.msra.mxu0 %v2461
        %2531 = vmatprep.subr.mxu0 0.0
        %2532 = vmatpush1.xpose.msra.mxu0 %v2462
        %2533 = vmatprep.subr.mxu0 0.0
        %2534 = vmatpush1.xpose.msra.mxu0 %v2463
        %2535 = vmatprep.subr.mxu0 0.0
        %2536 = vmatpush1.xpose.msra.mxu0 %v2464
        %2537 = vmatprep.subr.mxu0 0.0
        %2538 = vmatpush1.xpose.msra.mxu0 %v2465
        %2539 = vmatprep.subr.mxu0 0.0
        %2540 = vmatpush1.xpose.msra.mxu0 %v2466
        %2541 = vmatprep.subr.mxu0 0.0
        %2542 = vmatpush1.xpose.msra.mxu0 %v2467
        %2543 = vmatprep.mubr.f32.mxu0 0.0
        %2544 = vmatmul.mubr.f32.gmra.mrb[0].mxu0 %v2468
        %v2545 = vpop.f32.mrb[0].mxu0
        %v2546 = vadd.f32 %v2478, %v2545
        %v2547 = vpop.f32.mrb[0].mxu0
        %v2548 = vadd.f32 %v2478, %v2547
        %2549 = vdwg.mxu0
        %v2552 = vcombine.low %v2546, %v2548
        %v2554 = vunpack.c.l.s4 1966171168
        %v2555 = vunpack.c.0.s8 %v2554
        %v2556 = vlaneseq
        %v2557 = vshrl.u32 %v2556, 7
        %v2558 = vsub.s32 %v2555, %v2557
        %v2559 = vrot.slane %v2552, %v2558
        %v2561 = vunpack.c.l.s4 1966171168
        %v2562 = vunpack.c.0.s8 %v2561
        %v2563 = vlaneseq
        %v2564 = vshrl.u32 %v2563, 7
        %v2565 = vsub.s32 %v2562, %v2564
        %v2566 = vrot.slane %v2559, %v2565
        %v2568 = vlaneseq
        %vm2569 = vcmp.ge.s32.totalorder %v2568, 0
        %vm2570 = vcmp.lt.s32.totalorder %v2568, 256
        %vm2571 = vmand %vm2569, %vm2570
        %2572 = vst.msk [vmem:[%s452] sm:$0x3] %vm2571, %v2566
        %v2573 = vsel %vm583, %v2546, -1e+30
        %v2574 = vsel %vm584, %v2548, -1e+30
        %v2575 = vld [vmem:[#allocation3] sm:$0x1]
        %vm2576 = vcmask 1040384
        %v2577 = vsel %vm2576, %v2573, -inf
        %v2578 = vsel %vm2576, %v2574, -inf
        %v2579 = vmax.f32 %v2577, %v2578
        %2580 = vmax.xlane.f32.xlu0 %v2579
        %v2581 = vpop.xlane.xlu0 %2580
        %v2582 = vmax.f32 %v2575, %v2581
        %v2583 = vsub.f32 %v2575, %v2582
        %v2584 = vmul.f32 %v2583, 1.442695
        %v2585 = vpow.pop %v2584
        %2587 = vset.pattern.permute.xlu0 0
        %2588 = vperm.xlu0 %2587, %v2582
        %v2589 = vpop.permute.xlu0 %2588
        %v2591 = vlaneseq
        %v2592 = vshrl.u32 %v2591, 7
        %v2593 = vsub.s32 0, %v2592
        %v2594 = vrot.slane %v2589, %v2593
        %v2595 = vsub.f32 %v2573, %v2594
        %v2596 = vsub.f32 %v2574, %v2594
        %v2597 = vmul.f32 %v2595, 1.442695
        %v2598 = vpow.pop %v2597
        %v2599 = vmul.f32 %v2596, 1.442695
        %v2600 = vpow.pop %v2599
        %v2601 = vld [vmem:[#allocation4] sm:$0x1]
        %v2602 = vmul.f32 %v2585, %v2601
        %v2603 = vsel %vm2576, %v2598, 0.0
        %v2604 = vsel %vm2576, %v2600, 0.0
        %v2605 = vadd.f32 %v2603, %v2604
        %2606 = vadd.xlane.f32.xlu0 %v2605
        %v2607 = vpop.xlane.xlu0 %2606
        %v2608 = vadd.f32 %v2602, %v2607
        %vm2609 = vcmask 0
        %2610 = vst.msk [vmem:[#allocation4] sm:$0x1] %vm2609, %v2608
        %v2611 = vld [vmem:[#allocation2] sm:$0x3]
        %2613 = vset.pattern.permute.xlu0 0
        %2614 = vperm.xlu0 %2613, %v2585
        %v2615 = vpop.permute.xlu0 %2614
        %v2617 = vlaneseq
        %v2618 = vshrl.u32 %v2617, 7
        %v2619 = vsub.s32 0, %v2618
        %v2620 = vrot.slane %v2615, %v2619
        %v2621 = vmul.f32 %v2620, %v2611
        %v2622 = vpack.c.bf16 %v2598, %v2598
        %v2623 = vpack.c.bf16 %v2600, %v2600
        %2624 = vmatprep.subr.bf16.mxu0 %v1784
        %2625 = vmatpush1.bf16.msra.mxu0 %v1783
        %2626 = vmatprep.subr.bf16.mxu0 %v1786
        %2627 = vmatpush1.bf16.msra.mxu0 %v1785
        %2628 = vmatprep.subr.bf16.mxu0 %v1788
        %2629 = vmatpush1.bf16.msra.mxu0 %v1787
        %2630 = vmatprep.subr.bf16.mxu0 %v1790
        %2631 = vmatpush1.bf16.msra.mxu0 %v1789
        %2632 = vmatprep.subr.bf16.mxu0 %v1792
        %2633 = vmatpush1.bf16.msra.mxu0 %v1791
        %2634 = vmatprep.subr.bf16.mxu0 %v1794
        %2635 = vmatpush1.bf16.msra.mxu0 %v1793
        %2636 = vmatprep.subr.bf16.mxu0 %v1796
        %2637 = vmatpush1.bf16.msra.mxu0 %v1795
        %2638 = vmatprep.subr.bf16.mxu0 %v1798
        %2639 = vmatpush1.bf16.msra.mxu0 %v1797
        %2640 = vmatprep.subr.bf16.mxu0 %v1800
        %2641 = vmatpush1.bf16.msra.mxu0 %v1799
        %2642 = vmatprep.subr.bf16.mxu0 %v1802
        %2643 = vmatpush1.bf16.msra.mxu0 %v1801
        %2644 = vmatprep.subr.bf16.mxu0 %v1804
        %2645 = vmatpush1.bf16.msra.mxu0 %v1803
        %2646 = vmatprep.subr.bf16.mxu0 %v1806
        %2647 = vmatpush1.bf16.msra.mxu0 %v1805
        %2648 = vmatprep.subr.bf16.mxu0 %v1808
        %2649 = vmatpush1.bf16.msra.mxu0 %v1807
        %2650 = vmatprep.subr.bf16.mxu0 %v1810
        %2651 = vmatpush1.bf16.msra.mxu0 %v1809
        %2652 = vmatprep.subr.bf16.mxu0 %v1812
        %2653 = vmatpush1.bf16.msra.mxu0 %v1811
        %2654 = vmatprep.subr.bf16.mxu0 %v1814
        %2655 = vmatpush1.bf16.msra.mxu0 %v1813
        %2656 = vmatprep.mubr.bf16.mxu0 %v2623
        %2657 = vmatmul.mubr.bf16.gmra.mrb[0].mxu0 %v2622
        %v2658 = vpop.f32.mrb[0].mxu0
        %v2659 = vadd.f32 0.0, %v2658
        %v2660 = vpop.f32.mrb[0].mxu0
        %v2661 = vadd.f32 0.0, %v2660
        %v2662 = vpop.f32.mrb[0].mxu0
        %v2663 = vpop.f32.mrb[0].mxu0
        %2664 = vdwg.mxu0
        %v2667 = vcombine.low %v2659, %v2661
        %v2669 = vunpack.c.l.s4 1966171168
        %v2670 = vunpack.c.0.s8 %v2669
        %v2671 = vlaneseq
        %v2672 = vshrl.u32 %v2671, 7
        %v2673 = vsub.s32 %v2670, %v2672
        %v2674 = vrot.slane %v2667, %v2673
        %v2676 = vunpack.c.l.s4 1966171168
        %v2677 = vunpack.c.0.s8 %v2676
        %v2678 = vlaneseq
        %v2679 = vshrl.u32 %v2678, 7
        %v2680 = vsub.s32 %v2677, %v2679
        %v2681 = vrot.slane %v2674, %v2680
        %v2683 = vadd.f32 %v2621, %v2681
        %2684 = vst.msk [vmem:[#allocation2] sm:$0x3] %vm2571, %v2683
        %2685 = vst.msk [vmem:[#allocation3] sm:$0x1] %vm2609, %v2582
        %p2686 = scmp.eq.s32.totalorder %s37, 2
        // Predicated region
        $region69: #{tpu_custom_call.1} parent=55 // pred_check
          %p2687 = pneg %p2686
        $region70: #{tpu_custom_call.1} parent=55 // pred_check_branch
          %2689 = sbr.rel (%p2687) target = $region72
        $region71: #{tpu_custom_call.1} parent=55 // pred_region
          %v2690 = vld [vmem:[#allocation2] sm:$0x3]
          %v2691 = vld [vmem:[#allocation4] sm:$0x1]
          %2693 = vset.pattern.permute.xlu0 0
          %2694 = vperm.xlu0 %2693, %v2691
          %v2695 = vpop.permute.xlu0 %2694
          %v2697 = vlaneseq
          %v2698 = vshrl.u32 %v2697, 7
          %v2699 = vsub.s32 0, %v2698
          %v2700 = vrot.slane %v2695, %v2699
          %v2701 = vrcp.pop %v2700
          %v2702 = vmul.f32 %v2690, %v2701
          %v2703 = vld [vmem:[%s8] sm:$0xff]
          %v2704 = vld [vmem:[%s8 + $0x8] sm:$0xff]
          %v2705 = vld [vmem:[%s8 + $0x10] sm:$0xff]
          %v2706 = vld [vmem:[%s8 + $0x18] sm:$0xff]
          %v2707 = vld [vmem:[%s8 + $0x20] sm:$0xff]
          %v2708 = vld [vmem:[%s8 + $0x28] sm:$0xff]
          %v2709 = vld [vmem:[%s8 + $0x30] sm:$0xff]
          %v2710 = vld [vmem:[%s8 + $0x38] sm:$0xff]
          %v2711 = vld [vmem:[%s8 + $0x40] sm:$0xff]
          %v2712 = vld [vmem:[%s8 + $0x48] sm:$0xff]
          %v2713 = vld [vmem:[%s8 + $0x50] sm:$0xff]
          %v2714 = vld [vmem:[%s8 + $0x58] sm:$0xff]
          %v2715 = vld [vmem:[%s8 + $0x60] sm:$0xff]
          %v2716 = vld [vmem:[%s8 + $0x68] sm:$0xff]
          %v2717 = vld [vmem:[%s8 + $0x70] sm:$0xff]
          %v2718 = vld [vmem:[%s8 + $0x78] sm:$0xff]
          %v2719 = vld [vmem:[%s8 + $0x80] sm:$0xff]
          %v2720 = vld [vmem:[%s8 + $0x88] sm:$0xff]
          %v2721 = vld [vmem:[%s8 + $0x90] sm:$0xff]
          %v2722 = vld [vmem:[%s8 + $0x98] sm:$0xff]
          %v2723 = vld [vmem:[%s8 + $0xa0] sm:$0xff]
          %v2724 = vld [vmem:[%s8 + $0xa8] sm:$0xff]
          %v2725 = vld [vmem:[%s8 + $0xb0] sm:$0xff]
          %v2726 = vld [vmem:[%s8 + $0xb8] sm:$0xff]
          %v2727 = vld [vmem:[%s8 + $0xc0] sm:$0xff]
          %v2728 = vld [vmem:[%s8 + $0xc8] sm:$0xff]
          %v2729 = vld [vmem:[%s8 + $0xd0] sm:$0xff]
          %v2730 = vld [vmem:[%s8 + $0xd8] sm:$0xff]
          %v2731 = vld [vmem:[%s8 + $0xe0] sm:$0xff]
          %v2732 = vld [vmem:[%s8 + $0xe8] sm:$0xff]
          %v2733 = vld [vmem:[%s8 + $0xf0] sm:$0xff]
          %v2734 = vld [vmem:[%s8 + $0xf8] sm:$0xff]
          %v2735 = vld [vmem:[%s9] sm:$0x1]
          %v2737 = vlaneseq
          %v2738 = vshrl.u32 %v2737, 7
          %v2739 = vsub.s32 0, %v2738
          %v2740 = vrot.slane %v2702, %v2739
          %v2741 = vlaneseq
          %v2742 = vshrl.u32 %v2741, 7
          %v2743 = vsub.s32 1, %v2742
          %v2744 = vrot.slane %v2702, %v2743
          %2747 = vmatprep.subr.mxu0 0.0
          %2748 = vmatpush1.msra.mxu0 %v2703
          %2749 = vmatprep.subr.mxu0 0.0
          %2750 = vmatpush1.msra.mxu0 %v2704
          %2751 = vmatprep.subr.mxu0 0.0
          %2752 = vmatpush1.msra.mxu0 %v2705
          %2753 = vmatprep.subr.mxu0 0.0
          %2754 = vmatpush1.msra.mxu0 %v2706
          %2755 = vmatprep.subr.mxu0 0.0
          %2756 = vmatpush1.msra.mxu0 %v2707
          %2757 = vmatprep.subr.mxu0 0.0
          %2758 = vmatpush1.msra.mxu0 %v2708
          %2759 = vmatprep.subr.mxu0 0.0
          %2760 = vmatpush1.msra.mxu0 %v2709
          %2761 = vmatprep.subr.mxu0 0.0
          %2762 = vmatpush1.msra.mxu0 %v2710
          %2763 = vmatprep.subr.mxu0 0.0
          %2764 = vmatpush1.msra.mxu0 %v2711
          %2765 = vmatprep.subr.mxu0 0.0
          %2766 = vmatpush1.msra.mxu0 %v2712
          %2767 = vmatprep.subr.mxu0 0.0
          %2768 = vmatpush1.msra.mxu0 %v2713
          %2769 = vmatprep.subr.mxu0 0.0
          %2770 = vmatpush1.msra.mxu0 %v2714
          %2771 = vmatprep.subr.mxu0 0.0
          %2772 = vmatpush1.msra.mxu0 %v2715
          %2773 = vmatprep.subr.mxu0 0.0
          %2774 = vmatpush1.msra.mxu0 %v2716
          %2775 = vmatprep.subr.mxu0 0.0
          %2776 = vmatpush1.msra.mxu0 %v2717
          %2777 = vmatprep.subr.mxu0 0.0
          %2778 = vmatpush1.msra.mxu0 %v2718
          %2779 = vmatprep.subr.mxu0 0.0
          %2780 = vmatpush1.msra.mxu0 %v2719
          %2781 = vmatprep.subr.mxu0 0.0
          %2782 = vmatpush1.msra.mxu0 %v2720
          %2783 = vmatprep.subr.mxu0 0.0
          %2784 = vmatpush1.msra.mxu0 %v2721
          %2785 = vmatprep.subr.mxu0 0.0
          %2786 = vmatpush1.msra.mxu0 %v2722
          %2787 = vmatprep.subr.mxu0 0.0
          %2788 = vmatpush1.msra.mxu0 %v2723
          %2789 = vmatprep.subr.mxu0 0.0
          %2790 = vmatpush1.msra.mxu0 %v2724
          %2791 = vmatprep.subr.mxu0 0.0
          %2792 = vmatpush1.msra.mxu0 %v2725
          %2793 = vmatprep.subr.mxu0 0.0
          %2794 = vmatpush1.msra.mxu0 %v2726
          %2795 = vmatprep.subr.mxu0 0.0
          %2796 = vmatpush1.msra.mxu0 %v2727
          %2797 = vmatprep.subr.mxu0 0.0
          %2798 = vmatpush1.msra.mxu0 %v2728
          %2799 = vmatprep.subr.mxu0 0.0
          %2800 = vmatpush1.msra.mxu0 %v2729
          %2801 = vmatprep.subr.mxu0 0.0
          %2802 = vmatpush1.msra.mxu0 %v2730
          %2803 = vmatprep.subr.mxu0 0.0
          %2804 = vmatpush1.msra.mxu0 %v2731
          %2805 = vmatprep.subr.mxu0 0.0
          %2806 = vmatpush1.msra.mxu0 %v2732
          %2807 = vmatprep.subr.mxu0 0.0
          %2808 = vmatpush1.msra.mxu0 %v2733
          %2809 = vmatprep.subr.mxu0 0.0
          %2810 = vmatpush1.msra.mxu0 %v2734
          %2811 = vmatprep.mubr.f32.mxu0 %v2744
          %2812 = vmatmul.mubr.f32.gmra.mrb[0].mxu0 %v2740
          %v2813 = vpop.f32.mrb[0].mxu0
          %v2814 = vadd.f32 %v2735, %v2813
          %v2815 = vpop.f32.mrb[0].mxu0
          %2816 = vdwg.mxu0
          %vm2817 = vcmask 24576
          %2818 = vst.msk [vmem:[#allocation13] sm:$0x1] %vm2817, %v2814
          %v2819 = vsel %vm2817, %v2814, -inf
          %2820 = vmax.xlane.f32.xlu0 %v2819
          %v2821 = vpop.xlane.xlu0 %2820
          %v2822 = vsub.f32 %v2814, %v2821
          %v2823 = vmul.f32 %v2822, 1.442695
          %v2824 = vpow.pop %v2823
          %v2825 = vsel %vm2817, %v2824, 0.0
          %2826 = vadd.xlane.f32.xlu0 %v2825
          %v2827 = vpop.xlane.xlu0 %2826
          %v2828 = vrcp.pop %v2827
          %v2829 = vmul.f32 %v2824, %v2828
          %2830 = vst.msk [vmem:[#allocation14] sm:$0x1] %vm2817, %v2829
          %vm2831 = vcmp.eq.f32.partialorder %v2814, %v2821
          %v2832 = vsel %vm2831, %v579, 1073741824
          %v2833 = vsel %vm2817, %v2832, 2147483647
          %v2834 = vand.u32 %v2833, 65535
          %v2835 = vshra.s32 %v2833, 16
          %v2836 = vcvt.s32.f32 %v2834
          %v2837 = vcvt.s32.f32 %v2835
          %2838 = vmin.xlane.f32.xlu0 %v2837
          %v2839 = vpop.xlane.xlu0 %2838
          %vm2840 = vcmp.eq.f32.partialorder %v2837, %v2839
          %v2841 = vsel %vm2840, %v2836, inf
          %2842 = vmin.xlane.f32.xlu0 %v2841
          %v2843 = vpop.xlane.xlu0 %2842
          %v2844 = vcvt.f32.s32 %v2843
          %v2845 = vcvt.f32.s32 %v2839
          %v2846 = vshll.u32 %v2845, 16
          %v2847 = vadd.s32 %v2846, %v2844
          %2848 = vst.msk [vmem:[#allocation16] sm:$0x1] %vm2609, %v2847
        $region72: #{tpu_custom_call.1} parent=55 // pred_fallthru
          _
        %s2849 = sand.u32 %s302, 1
        %s2850 = scalar_lea.sflag [#allocation18], %s2849
        %s2851 = sand.u32 %s302, 1
        %s2852 = smul.addr %s2851, 2
        %s2853 = scalar_lea.vmem [#allocation17], %s2852
        // Predicated region
        $region73: #{tpu_custom_call.1} parent=55 // pred_check
          %p2854 = pneg %p244
        $region74: #{tpu_custom_call.1} parent=55 // pred_check_branch
          %2856 = sbr.rel (%p2854) target = $region76
        $region75: #{tpu_custom_call.1} parent=55 // pred_region
          %s2858 = ssub.s32 16, 16
          %2859 = vsyncadd [#allocation10], %s2858
          %s2861 = sshll.u32 [#allocation13], 4
          %s2862 = int_to_ptr.vmem [resolvable:$true] %s2861
          %2864 = dma.vmem_to_hbm [thread:$0]  %s2862, 16, %s10, [#allocation10]
        $region76: #{tpu_custom_call.1} parent=55 // pred_fallthru
          _
        // Predicated region
        $region77: #{tpu_custom_call.1} parent=55 // pred_check
          %p2865 = pneg %p265
        $region78: #{tpu_custom_call.1} parent=55 // pred_check_branch
          %2867 = sbr.rel (%p2865) target = $region80
        $region79: #{tpu_custom_call.1} parent=55 // pred_region
          %s2869 = ssub.s32 16, 16
          %2870 = vsyncadd [#allocation15], %s2869
          %s2872 = sshll.u32 [#allocation14], 4
          %s2873 = int_to_ptr.vmem [resolvable:$true] %s2872
          %2875 = dma.vmem_to_hbm [thread:$0]  %s2873, 16, %s11, [#allocation15]
        $region80: #{tpu_custom_call.1} parent=55 // pred_fallthru
          _
        // Predicated region
        $region81: #{tpu_custom_call.1} parent=55 // pred_check
          %p2876 = pneg %p286
        $region82: #{tpu_custom_call.1} parent=55 // pred_check_branch
          %2878 = sbr.rel (%p2876) target = $region84
        $region83: #{tpu_custom_call.1} parent=55 // pred_region
          %s2880 = ssub.s32 16, 16
          %2881 = vsyncadd [#allocation15], %s2880
          %s2883 = sshll.u32 [#allocation16], 4
          %s2884 = int_to_ptr.vmem [resolvable:$true] %s2883
          %2886 = dma.vmem_to_hbm [thread:$0]  %s2884, 16, %s12, [#allocation15]
        $region84: #{tpu_custom_call.1} parent=55 // pred_fallthru
          _
        // Predicated region
        $region85: #{tpu_custom_call.1} parent=55 // pred_check
          %p2887 = pneg %p312
        $region86: #{tpu_custom_call.1} parent=55 // pred_check_branch
          %2889 = sbr.rel (%p2887) target = $region88
        $region87: #{tpu_custom_call.1} parent=55 // pred_region
          %s2890 = smul.u32 2, %s37
          %s2891 = ssub.s32 5, %s2890
          %p2892 = scmp.lt.s32.totalorder %s2891, 2
          %s2893 = scalar_select %p2892, %s2891, 2
          %s2894 = smul.u32 16, %s2893
          %s2896 = ssub.s32 32, %s2894
          %2897 = vsyncadd %s2850, %s2896
          %p2898 = scmp.ne.s32.totalorder 0, %s2894
          %s2899 = smul.addr %s2890, 16
          %s2900 = scalar_lea.hbm %s13, %s2899
          %s2901 = sshll.u32 %s2893, 4
          %s2902 = sshll.u32 %s2853, 4
          %s2903 = int_to_ptr.vmem [resolvable:$true] %s2902
          %2905 = dma.vmem_to_hbm [thread:$0]  (%p2898), %s2903, %s2901, %s2900, %s2850
        $region88: #{tpu_custom_call.1} parent=55 // pred_fallthru
          _
        // Predicated region
        $region89: #{tpu_custom_call.1} parent=55 // pred_check
          %p2906 = pneg %p244
        $region90: #{tpu_custom_call.1} parent=55 // pred_check_branch
          %2908 = sbr.rel (%p2906) target = $region92
        $region91: #{tpu_custom_call.1} parent=55 // pred_region
          %2909 = dma.done [#allocation10], 16
        $region92: #{tpu_custom_call.1} parent=55 // pred_fallthru
          _
        // Predicated region
        $region93: #{tpu_custom_call.1} parent=55 // pred_check
          %p2910 = pneg %p265
        $region94: #{tpu_custom_call.1} parent=55 // pred_check_branch
          %2912 = sbr.rel (%p2910) target = $region96
        $region95: #{tpu_custom_call.1} parent=55 // pred_region
          %2913 = dma.done [#allocation15], 16
        $region96: #{tpu_custom_call.1} parent=55 // pred_fallthru
          _
        // Predicated region
        $region97: #{tpu_custom_call.1} parent=55 // pred_check
          %p2914 = pneg %p286
        $region98: #{tpu_custom_call.1} parent=55 // pred_check_branch
          %2916 = sbr.rel (%p2914) target = $region100
        $region99: #{tpu_custom_call.1} parent=55 // pred_region
          %2917 = dma.done [#allocation15], 16
        $region100: #{tpu_custom_call.1} parent=55 // pred_fallthru
          _
      $region56: #{tpu_custom_call.1} parent=5 // pred_fallthru
        _
      %p2918 = scmp.le.s32.totalorder 2, %s32
      // Predicated region
      $region101: #{tpu_custom_call.1} parent=5 // pred_check
        %p2919 = pneg %p2918
      $region102: #{tpu_custom_call.1} parent=5 // pred_check_branch
        %2921 = sbr.rel (%p2919) target = $region104
      $region103: #{tpu_custom_call.1} parent=5 // pred_region
        %s2922 = ssub.s32 %s32, 2
        // Predicated region
        $region105: #{tpu_custom_call.1} parent=103 // pred_check
          %p2923 = pneg %p318
        $region106: #{tpu_custom_call.1} parent=103 // pred_check_branch
          %2925 = sbr.rel (%p2923) target = $region108
        $region107: #{tpu_custom_call.1} parent=103 // pred_region
          %s2926 = sand.u32 %s303, 1
          %s2927 = scalar_lea.sflag [#allocation18], %s2926
          %s2928 = sand.u32 %s303, 1
          %s2929 = smul.addr %s2928, 2
          %s2930 = scalar_lea.vmem [#allocation17], %s2929
          %2931 = dma.done %s2927, 32
        $region108: #{tpu_custom_call.1} parent=103 // pred_fallthru
          _
      $region104: #{tpu_custom_call.1} parent=5 // pred_fallthru
        _
    $region6: #{tpu_custom_call.1} parent=1 // loop_footer
      %s36 = sadd.s32 1, %s32
    $region7: #{tpu_custom_call.1} parent=1 // loop_footer_branch
      %31 = sbr.rel target = $region3
    $region8: #{tpu_custom_call.1} parent=1 // loop_exit
      _
    %2932 = vsyncpa [#allocation9], 1
    %s2933 = scalar_lea.sflag [#allocation9], 1
    %2934 = vsyncpa %s2933, 1
    %2935 = vsyncpa [#allocation12], 1
    %2936 = vsyncpa [#allocation10], 1
    %s2937 = scalar_lea.sflag [#allocation10], 1
    %2938 = vsyncpa %s2937, 1
    %2939 = vsyncpa [#allocation15], 1
    %2940 = vsyncpa [#allocation18], 1
    %s2941 = scalar_lea.sflag [#allocation18], 1
    %2942 = vsyncpa %s2941, 1

</llo_original>
